<compile_context>
chip_gen: v7x
topology: tpu7x:2x2x1
jax: 0.10.0
libtpu: 0.0.40
codegen_flags: <defaults>
</compile_context>

<pallas_src>
import jax
import jax.numpy as jnp
from jax.experimental import pallas as pl
from jax.experimental.pallas import tpu as pltpu

EPS = 1e-5


def add_conv1x1_bn_kernel(a_ref, b_ref, w_ref, gamma_ref, beta_ref, o_ref):
    # a_ref, b_ref : [Cin,  P]
    # w_ref        : [Cout, Cin]
    # gamma/beta   : [Cout, 1]
    # o_ref        : [Cout, P]
    p = a_ref.shape[-1]

    x = a_ref[...] + b_ref[...]                       # fused residual add (f32)
    xb = x.astype(jnp.bfloat16)                       # bf16 MXU operands,
    wb = w_ref[...].astype(jnp.bfloat16)              # f32 accumulation

    # 1x1 conv == channel matmul on the MXU: y[Cout, P]
    y = jnp.dot(wb, xb, preferred_element_type=jnp.float32)

    # BN channel mean, computed algebraically (no extra pass over y):
    #   mean_P(y) = W @ mean_P(x)
    # Use the bf16-rounded operands so mu matches the actual mean of y.
    mean_x = jnp.mean(xb.astype(jnp.float32), axis=-1, keepdims=True)      # [Cin, 1]
    mu = jnp.dot(wb.astype(jnp.float32), mean_x,
                 preferred_element_type=jnp.float32)                       # [Cout, 1]

    # Single-pass (biased) variance: var = E[y^2] - mu^2  (one traversal of y).
    ey2 = jnp.sum(y * y, axis=-1, keepdims=True) * (1.0 / p)               # [Cout, 1]
    var = ey2 - mu * mu

    # Fold gamma into the scale so the per-element epilogue is one mul + one add.
    inv = jax.lax.rsqrt(var + EPS)                                         # [Cout, 1]
    scale = gamma_ref[...] * inv                                           # [Cout, 1]
    shift = beta_ref[...] - mu * scale                                     # [Cout, 1]

    o_ref[...] = (y * scale + shift).astype(o_ref.dtype)

    # TODO(synk): PyTorch BatchNorm2d in training mode also updates
    # running_mean / running_var (with unbiased variance); those side-effect
    # buffers are intentionally not produced here.


def add_conv_bn(x164, x149, weight, gamma, beta):
    """x164, x149: NCHW [1, Cin, H, W]; weight: [Cout, Cin, 1, 1]; gamma/beta: [Cout]."""
    N, Cin, H, W = x164.shape
    assert N == 1, "channel-major fast path assumes N == 1 (as in the module spec)"
    Cout = weight.shape[0]
    P = H * W

    # All of these are free views (no transpose, no copy):
    a = x164.reshape(Cin, P)
    b = x149.reshape(Cin, P)
    w = weight.reshape(Cout, Cin)
    g = gamma.reshape(Cout, 1)
    bt = beta.reshape(Cout, 1)

    vmem = pl.BlockSpec(memory_space=pltpu.MemorySpace.VMEM)
    out = pl.pallas_call(
        add_conv1x1_bn_kernel,
        out_shape=jax.ShapeDtypeStruct((Cout, P), jnp.float32),
        in_specs=[vmem, vmem, vmem, vmem, vmem],
        out_specs=vmem,
    )(a, b, w, g, bt)

    # [Cout, P] -> NCHW [1, Cout, H, W]   (free reshape)
    return out.reshape(1, Cout, H, W)


def reference(x164, x149, weight, gamma, beta):
    # Full-precision (f32) reference matching the PyTorch module's forward pass.
    x = x164 + x149
    N, Cin, H, W = x.shape
    Cout = weight.shape[0]
    xm = jnp.transpose(x, (0, 2, 3, 1)).reshape(-1, Cin)
    y = xm @ weight.reshape(Cout, Cin).T
    mean = jnp.mean(y, axis=0)
    var = jnp.mean((y - mean) ** 2, axis=0)
    y = (y - mean) / jnp.sqrt(var + EPS) * gamma + beta
    return jnp.transpose(y.reshape(N, H, W, Cout), (0, 3, 1, 2))


if __name__ == "__main__":
    key = jax.random.PRNGKey(0)
    k1, k2, k3, k4, k5 = jax.random.split(key, 5)

    N, Cin, H, W, Cout = 1, 96, 14, 14, 576
    x164 = jax.random.normal(k1, (N, Cin, H, W), dtype=jnp.float32)
    x149 = jax.random.normal(k2, (N, Cin, H, W), dtype=jnp.float32)
    weight = jax.random.normal(k3, (Cout, Cin, 1, 1), dtype=jnp.float32) * 0.1
    gamma = jax.random.normal(k4, (Cout,), dtype=jnp.float32) * 0.1 + 1.0
    beta = jax.random.normal(k5, (Cout,), dtype=jnp.float32) * 0.1

    out = add_conv_bn(x164, x149, weight, gamma, beta)
    jax.block_until_ready(out)

    ref = reference(x164, x149, weight, gamma, beta)
    assert out.shape == (N, Cout, H, W), out.shape
    # Tolerance reflects bf16 MXU operands (f32 accumulation) vs the f32
    # reference; observed max abs error is ~1e-2 at these magnitudes.
    assert jnp.allclose(out, ref, atol=3e-2, rtol=3e-2), float(
        jnp.max(jnp.abs(out - ref))
    )

    print("KERNEL_OK")
</pallas_src>

<mosaic_0001>
module attributes {stable_mosaic.version = 11 : i64} {
  func.func @add_conv1x1_bn_kernel(%arg0: memref<96x196xf32, #tpu.memory_space<vmem>>, %arg1: memref<96x196xf32, #tpu.memory_space<vmem>>, %arg2: memref<576x96xf32, #tpu.memory_space<vmem>>, %arg3: memref<576x1xf32, #tpu.memory_space<vmem>>, %arg4: memref<576x1xf32, #tpu.memory_space<vmem>>, %arg5: memref<576x196xf32, #tpu.memory_space<vmem>>) attributes {dimension_semantics = [], scalar_prefetch = 0 : i64, scratch_operands = 0 : i64, tpu.core_type = #tpu.core_type<tc>} {
    %c0 = arith.constant 0 : index
    %c0_0 = arith.constant 0 : index
    %0 = vector.load %arg0[%c0, %c0_0] : memref<96x196xf32, #tpu.memory_space<vmem>>, vector<96x196xf32>
    %c0_1 = arith.constant 0 : index
    %c0_2 = arith.constant 0 : index
    %1 = vector.load %arg1[%c0_1, %c0_2] : memref<96x196xf32, #tpu.memory_space<vmem>>, vector<96x196xf32>
    %2 = arith.addf %0, %1 : vector<96x196xf32>
    %3 = arith.truncf %2 : vector<96x196xf32> to vector<96x196xbf16>
    %c0_3 = arith.constant 0 : index
    %c0_4 = arith.constant 0 : index
    %4 = vector.load %arg2[%c0_3, %c0_4] : memref<576x96xf32, #tpu.memory_space<vmem>>, vector<576x96xf32>
    %5 = arith.truncf %4 : vector<576x96xf32> to vector<576x96xbf16>
    %cst = arith.constant dense<0.000000e+00> : vector<576x196xf32>
    %6 = tpu.matmul %5, %3, %cst {dimension_numbers = #tpu.dot_dimension_numbers<[1], [0], [0], [1], [0, 0, 1, 1], [], []>} : vector<576x96xbf16>, vector<96x196xbf16>, vector<576x196xf32> -> vector<576x196xf32>
    %7 = arith.extf %3 : vector<96x196xbf16> to vector<96x196xf32>
    %cst_5 = arith.constant dense<0.000000e+00> : vector<96xf32>
    %8 = vector.multi_reduction <add>, %7, %cst_5 [1] : vector<96x196xf32> to vector<96xf32>
    %9 = vector.shape_cast %8 : vector<96xf32> to vector<96x1xf32>
    %cst_6 = arith.constant 1.960000e+02 : f32
    %10 = vector.broadcast %cst_6 : f32 to vector<96x1xf32>
    %11 = arith.divf %9, %10 : vector<96x1xf32>
    %12 = arith.extf %5 : vector<576x96xbf16> to vector<576x96xf32>
    %cst_7 = arith.constant dense<0.000000e+00> : vector<576x1xf32>
    %13 = tpu.matmul %12, %11, %cst_7 {dimension_numbers = #tpu.dot_dimension_numbers<[1], [0], [0], [1], [0, 0, 1, 1], [], []>} : vector<576x96xf32>, vector<96x1xf32>, vector<576x1xf32> -> vector<576x1xf32>
    %14 = arith.mulf %6, %6 : vector<576x196xf32>
    %cst_8 = arith.constant dense<0.000000e+00> : vector<576xf32>
    %15 = vector.multi_reduction <add>, %14, %cst_8 [1] : vector<576x196xf32> to vector<576xf32>
    %16 = vector.shape_cast %15 : vector<576xf32> to vector<576x1xf32>
    %cst_9 = arith.constant 0.00510204071 : f32
    %17 = vector.broadcast %cst_9 : f32 to vector<576x1xf32>
    %18 = arith.mulf %16, %17 : vector<576x1xf32>
    %19 = arith.mulf %13, %13 : vector<576x1xf32>
    %20 = arith.subf %18, %19 : vector<576x1xf32>
    %cst_10 = arith.constant 9.99999974E-6 : f32
    %21 = vector.broadcast %cst_10 : f32 to vector<576x1xf32>
    %22 = arith.addf %20, %21 : vector<576x1xf32>
    %23 = math.rsqrt %22 : vector<576x1xf32>
    %c0_11 = arith.constant 0 : index
    %c0_12 = arith.constant 0 : index
    %24 = vector.load %arg3[%c0_11, %c0_12] : memref<576x1xf32, #tpu.memory_space<vmem>>, vector<576x1xf32>
    %25 = arith.mulf %24, %23 : vector<576x1xf32>
    %c0_13 = arith.constant 0 : index
    %c0_14 = arith.constant 0 : index
    %26 = vector.load %arg4[%c0_13, %c0_14] : memref<576x1xf32, #tpu.memory_space<vmem>>, vector<576x1xf32>
    %27 = arith.mulf %13, %25 : vector<576x1xf32>
    %28 = arith.subf %26, %27 : vector<576x1xf32>
    %29 = vector.broadcast %25 : vector<576x1xf32> to vector<576x196xf32>
    %30 = arith.mulf %6, %29 : vector<576x196xf32>
    %31 = vector.broadcast %28 : vector<576x1xf32> to vector<576x196xf32>
    %32 = arith.addf %30, %31 : vector<576x196xf32>
    %c0_15 = arith.constant 0 : index
    %c0_16 = arith.constant 0 : index
    %33 = vector.load %arg5[%c0_15, %c0_16] : memref<576x196xf32, #tpu.memory_space<vmem>>, vector<576x196xf32>
    tpu.vector_store %arg5[%c0_15, %c0_16], %32 {strides = array<i32>} : memref<576x196xf32, #tpu.memory_space<vmem>>, vector<576x196xf32>,
    return
  }
}

</mosaic_0001>

<llo_original>
// kernel: tpu_custom_call.1
$region0: #{tpu_custom_call.1}
  #allocation0 [shape = 'u32[]', space=smem, size = 0x4, offset = 0x4, fixed_abs, tag = 'smem constant byte address 0x4 - core index']
  #allocation1 [shape = 'u32[144,128]{1,0:T(1,128)}', space=vmem, size = 0x12000, scoped, tag = 'internal scratch']
  %s0 = inlined_call_operand.vmem [shape: f32[96,196], index: 0, kind: input, shape index: {}]
  %s1 = inlined_call_operand.vmem [shape: f32[96,196], index: 1, kind: input, shape index: {}]
  %s2 = inlined_call_operand.vmem [shape: f32[576,96], index: 2, kind: input, shape index: {}]
  %s3 = inlined_call_operand.vmem [shape: f32[576,1], index: 3, kind: input, shape index: {}]
  %s4 = inlined_call_operand.vmem [shape: f32[576,1], index: 4, kind: input, shape index: {}]
  %s5 = inlined_call_operand.vmem [shape: f32[576,196], index: 5, kind: output, shape index: {}]
  %s6 = sld [smem:[#allocation0]]
  $region30: #{tpu_custom_call.1} parent=0
    _
  %s8 = ssub.s32 1, %s6
  %s9 = scalar_select 0, %s8, %s6
  // Predicated region
  $region2: #{tpu_custom_call.1} parent=0 // pred_check
    _
  $region3: #{tpu_custom_call.1} parent=0 // pred_check_branch
    %11 = sbr.rel (0) target = $region5
  $region4: #{tpu_custom_call.1} parent=0 // pred_region
    _
  $region5: #{tpu_custom_call.1} parent=0 // pred_fallthru
    _
  // Predicated region
  $region6: #{tpu_custom_call.1} parent=0 // pred_check
    _
  $region7: #{tpu_custom_call.1} parent=0 // pred_check_branch
    %13 = sbr.rel (0) target = $region9
  $region8: #{tpu_custom_call.1} parent=0 // pred_region
    _
  $region9: #{tpu_custom_call.1} parent=0 // pred_fallthru
    _
  // Predicated region
  $region10: #{tpu_custom_call.1} parent=0 // pred_check
    _
  $region11: #{tpu_custom_call.1} parent=0 // pred_check_branch
    %15 = sbr.rel (0) target = $region13
  $region12: #{tpu_custom_call.1} parent=0 // pred_region
    _
  $region13: #{tpu_custom_call.1} parent=0 // pred_fallthru
    _
  // Predicated region
  $region14: #{tpu_custom_call.1} parent=0 // pred_check
    _
  $region15: #{tpu_custom_call.1} parent=0 // pred_check_branch
    %17 = sbr.rel (0) target = $region17
  $region16: #{tpu_custom_call.1} parent=0 // pred_region
    _
  $region17: #{tpu_custom_call.1} parent=0 // pred_fallthru
    _
  // Predicated region
  $region18: #{tpu_custom_call.1} parent=0 // pred_check
    _
  $region19: #{tpu_custom_call.1} parent=0 // pred_check_branch
    %19 = sbr.rel (0) target = $region21
  $region20: #{tpu_custom_call.1} parent=0 // pred_region
    _
  $region21: #{tpu_custom_call.1} parent=0 // pred_fallthru
    _
  %v21 = vld [vmem:[%s0] sm:$0xff]
  %v22 = vld [vmem:[%s0 + $0x8] sm:$0xff]
  %v23 = vld [vmem:[%s0 + $0x10] sm:$0xff]
  %v24 = vld [vmem:[%s0 + $0x18] sm:$0xff]
  %v25 = vld [vmem:[%s0 + $0x20] sm:$0xff]
  %v26 = vld [vmem:[%s0 + $0x28] sm:$0xff]
  %v27 = vld [vmem:[%s0 + $0x30] sm:$0xff]
  %v28 = vld [vmem:[%s0 + $0x38] sm:$0xff]
  %v29 = vld [vmem:[%s0 + $0x40] sm:$0xff]
  %v30 = vld [vmem:[%s0 + $0x48] sm:$0xff]
  %v31 = vld [vmem:[%s0 + $0x50] sm:$0xff]
  %v32 = vld [vmem:[%s0 + $0x58] sm:$0xff]
  %v33 = vld [vmem:[%s0 + $0x60] sm:$0xff]
  %v34 = vld [vmem:[%s0 + $0x68] sm:$0xff]
  %v35 = vld [vmem:[%s0 + $0x70] sm:$0xff]
  %v36 = vld [vmem:[%s0 + $0x78] sm:$0xff]
  %v37 = vld [vmem:[%s0 + $0x80] sm:$0xff]
  %v38 = vld [vmem:[%s0 + $0x88] sm:$0xff]
  %v39 = vld [vmem:[%s0 + $0x90] sm:$0xff]
  %v40 = vld [vmem:[%s0 + $0x98] sm:$0xff]
  %v41 = vld [vmem:[%s0 + $0xa0] sm:$0xff]
  %v42 = vld [vmem:[%s0 + $0xa8] sm:$0xff]
  %v43 = vld [vmem:[%s0 + $0xb0] sm:$0xff]
  %v44 = vld [vmem:[%s0 + $0xb8] sm:$0xff]
  %v45 = vld [vmem:[%s1] sm:$0xff]
  %v46 = vld [vmem:[%s1 + $0x8] sm:$0xff]
  %v47 = vld [vmem:[%s1 + $0x10] sm:$0xff]
  %v48 = vld [vmem:[%s1 + $0x18] sm:$0xff]
  %v49 = vld [vmem:[%s1 + $0x20] sm:$0xff]
  %v50 = vld [vmem:[%s1 + $0x28] sm:$0xff]
  %v51 = vld [vmem:[%s1 + $0x30] sm:$0xff]
  %v52 = vld [vmem:[%s1 + $0x38] sm:$0xff]
  %v53 = vld [vmem:[%s1 + $0x40] sm:$0xff]
  %v54 = vld [vmem:[%s1 + $0x48] sm:$0xff]
  %v55 = vld [vmem:[%s1 + $0x50] sm:$0xff]
  %v56 = vld [vmem:[%s1 + $0x58] sm:$0xff]
  %v57 = vld [vmem:[%s1 + $0x60] sm:$0xff]
  %v58 = vld [vmem:[%s1 + $0x68] sm:$0xff]
  %v59 = vld [vmem:[%s1 + $0x70] sm:$0xff]
  %v60 = vld [vmem:[%s1 + $0x78] sm:$0xff]
  %v61 = vld [vmem:[%s1 + $0x80] sm:$0xff]
  %v62 = vld [vmem:[%s1 + $0x88] sm:$0xff]
  %v63 = vld [vmem:[%s1 + $0x90] sm:$0xff]
  %v64 = vld [vmem:[%s1 + $0x98] sm:$0xff]
  %v65 = vld [vmem:[%s1 + $0xa0] sm:$0xff]
  %v66 = vld [vmem:[%s1 + $0xa8] sm:$0xff]
  %v67 = vld [vmem:[%s1 + $0xb0] sm:$0xff]
  %v68 = vld [vmem:[%s1 + $0xb8] sm:$0xff]
  %v69 = vadd.f32 %v21, %v45
  %v70 = vadd.f32 %v22, %v46
  %v71 = vadd.f32 %v23, %v47
  %v72 = vadd.f32 %v24, %v48
  %v73 = vadd.f32 %v25, %v49
  %v74 = vadd.f32 %v26, %v50
  %v75 = vadd.f32 %v27, %v51
  %v76 = vadd.f32 %v28, %v52
  %v77 = vadd.f32 %v29, %v53
  %v78 = vadd.f32 %v30, %v54
  %v79 = vadd.f32 %v31, %v55
  %v80 = vadd.f32 %v32, %v56
  %v81 = vadd.f32 %v33, %v57
  %v82 = vadd.f32 %v34, %v58
  %v83 = vadd.f32 %v35, %v59
  %v84 = vadd.f32 %v36, %v60
  %v85 = vadd.f32 %v37, %v61
  %v86 = vadd.f32 %v38, %v62
  %v87 = vadd.f32 %v39, %v63
  %v88 = vadd.f32 %v40, %v64
  %v89 = vadd.f32 %v41, %v65
  %v90 = vadd.f32 %v42, %v66
  %v91 = vadd.f32 %v43, %v67
  %v92 = vadd.f32 %v44, %v68
  %v93 = vpack.c.bf16 %v71, %v69
  %v94 = vpack.c.bf16 %v72, %v70
  %v95 = vpack.c.bf16 %v75, %v73
  %v96 = vpack.c.bf16 %v76, %v74
  %v97 = vpack.c.bf16 %v79, %v77
  %v98 = vpack.c.bf16 %v80, %v78
  %v99 = vpack.c.bf16 %v83, %v81
  %v100 = vpack.c.bf16 %v84, %v82
  %v101 = vpack.c.bf16 %v87, %v85
  %v102 = vpack.c.bf16 %v88, %v86
  %v103 = vpack.c.bf16 %v91, %v89
  %v104 = vpack.c.bf16 %v92, %v90
  %v105 = vld [vmem:[%s2] sm:$0xff]
  %v106 = vld [vmem:[%s2 + $0x8] sm:$0xff]
  %v107 = vld [vmem:[%s2 + $0x10] sm:$0xff]
  %v108 = vld [vmem:[%s2 + $0x18] sm:$0xff]
  %v109 = vld [vmem:[%s2 + $0x20] sm:$0xff]
  %v110 = vld [vmem:[%s2 + $0x28] sm:$0xff]
  %v111 = vld [vmem:[%s2 + $0x30] sm:$0xff]
  %v112 = vld [vmem:[%s2 + $0x38] sm:$0xff]
  %v113 = vld [vmem:[%s2 + $0x40] sm:$0xff]
  %v114 = vld [vmem:[%s2 + $0x48] sm:$0xff]
  %v115 = vld [vmem:[%s2 + $0x50] sm:$0xff]
  %v116 = vld [vmem:[%s2 + $0x58] sm:$0xff]
  %v117 = vld [vmem:[%s2 + $0x60] sm:$0xff]
  %v118 = vld [vmem:[%s2 + $0x68] sm:$0xff]
  %v119 = vld [vmem:[%s2 + $0x70] sm:$0xff]
  %v120 = vld [vmem:[%s2 + $0x78] sm:$0xff]
  %v121 = vld [vmem:[%s2 + $0x80] sm:$0xff]
  %v122 = vld [vmem:[%s2 + $0x88] sm:$0xff]
  %v123 = vld [vmem:[%s2 + $0x90] sm:$0xff]
  %v124 = vld [vmem:[%s2 + $0x98] sm:$0xff]
  %v125 = vld [vmem:[%s2 + $0xa0] sm:$0xff]
  %v126 = vld [vmem:[%s2 + $0xa8] sm:$0xff]
  %v127 = vld [vmem:[%s2 + $0xb0] sm:$0xff]
  %v128 = vld [vmem:[%s2 + $0xb8] sm:$0xff]
  %v129 = vld [vmem:[%s2 + $0xc0] sm:$0xff]
  %v130 = vld [vmem:[%s2 + $0xc8] sm:$0xff]
  %v131 = vld [vmem:[%s2 + $0xd0] sm:$0xff]
  %v132 = vld [vmem:[%s2 + $0xd8] sm:$0xff]
  %v133 = vld [vmem:[%s2 + $0xe0] sm:$0xff]
  %v134 = vld [vmem:[%s2 + $0xe8] sm:$0xff]
  %v135 = vld [vmem:[%s2 + $0xf0] sm:$0xff]
  %v136 = vld [vmem:[%s2 + $0xf8] sm:$0xff]
  %v137 = vld [vmem:[%s2 + $0x100] sm:$0xff]
  %v138 = vld [vmem:[%s2 + $0x108] sm:$0xff]
  %v139 = vld [vmem:[%s2 + $0x110] sm:$0xff]
  %v140 = vld [vmem:[%s2 + $0x118] sm:$0xff]
  %v141 = vld [vmem:[%s2 + $0x120] sm:$0xff]
  %v142 = vld [vmem:[%s2 + $0x128] sm:$0xff]
  %v143 = vld [vmem:[%s2 + $0x130] sm:$0xff]
  %v144 = vld [vmem:[%s2 + $0x138] sm:$0xff]
  %v145 = vld [vmem:[%s2 + $0x140] sm:$0xff]
  %v146 = vld [vmem:[%s2 + $0x148] sm:$0xff]
  %v147 = vld [vmem:[%s2 + $0x150] sm:$0xff]
  %v148 = vld [vmem:[%s2 + $0x158] sm:$0xff]
  %v149 = vld [vmem:[%s2 + $0x160] sm:$0xff]
  %v150 = vld [vmem:[%s2 + $0x168] sm:$0xff]
  %v151 = vld [vmem:[%s2 + $0x170] sm:$0xff]
  %v152 = vld [vmem:[%s2 + $0x178] sm:$0xff]
  %v153 = vld [vmem:[%s2 + $0x180] sm:$0xff]
  %v154 = vld [vmem:[%s2 + $0x188] sm:$0xff]
  %v155 = vld [vmem:[%s2 + $0x190] sm:$0xff]
  %v156 = vld [vmem:[%s2 + $0x198] sm:$0xff]
  %v157 = vld [vmem:[%s2 + $0x1a0] sm:$0xff]
  %v158 = vld [vmem:[%s2 + $0x1a8] sm:$0xff]
  %v159 = vld [vmem:[%s2 + $0x1b0] sm:$0xff]
  %v160 = vld [vmem:[%s2 + $0x1b8] sm:$0xff]
  %v161 = vld [vmem:[%s2 + $0x1c0] sm:$0xff]
  %v162 = vld [vmem:[%s2 + $0x1c8] sm:$0xff]
  %v163 = vld [vmem:[%s2 + $0x1d0] sm:$0xff]
  %v164 = vld [vmem:[%s2 + $0x1d8] sm:$0xff]
  %v165 = vld [vmem:[%s2 + $0x1e0] sm:$0xff]
  %v166 = vld [vmem:[%s2 + $0x1e8] sm:$0xff]
  %v167 = vld [vmem:[%s2 + $0x1f0] sm:$0xff]
  %v168 = vld [vmem:[%s2 + $0x1f8] sm:$0xff]
  %v169 = vld [vmem:[%s2 + $0x200] sm:$0xff]
  %v170 = vld [vmem:[%s2 + $0x208] sm:$0xff]
  %v171 = vld [vmem:[%s2 + $0x210] sm:$0xff]
  %v172 = vld [vmem:[%s2 + $0x218] sm:$0xff]
  %v173 = vld [vmem:[%s2 + $0x220] sm:$0xff]
  %v174 = vld [vmem:[%s2 + $0x228] sm:$0xff]
  %v175 = vld [vmem:[%s2 + $0x230] sm:$0xff]
  %v176 = vld [vmem:[%s2 + $0x238] sm:$0xff]
  %v177 = vpack.c.bf16 %v106, %v105
  %v178 = vpack.c.bf16 %v108, %v107
  %v179 = vpack.c.bf16 %v110, %v109
  %v180 = vpack.c.bf16 %v112, %v111
  %v181 = vpack.c.bf16 %v114, %v113
  %v182 = vpack.c.bf16 %v116, %v115
  %v183 = vpack.c.bf16 %v118, %v117
  %v184 = vpack.c.bf16 %v120, %v119
  %v185 = vpack.c.bf16 %v122, %v121
  %v186 = vpack.c.bf16 %v124, %v123
  %v187 = vpack.c.bf16 %v126, %v125
  %v188 = vpack.c.bf16 %v128, %v127
  %v189 = vpack.c.bf16 %v130, %v129
  %v190 = vpack.c.bf16 %v132, %v131
  %v191 = vpack.c.bf16 %v134, %v133
  %v192 = vpack.c.bf16 %v136, %v135
  %v193 = vpack.c.bf16 %v138, %v137
  %v194 = vpack.c.bf16 %v140, %v139
  %v195 = vpack.c.bf16 %v142, %v141
  %v196 = vpack.c.bf16 %v144, %v143
  %v197 = vpack.c.bf16 %v146, %v145
  %v198 = vpack.c.bf16 %v148, %v147
  %v199 = vpack.c.bf16 %v150, %v149
  %v200 = vpack.c.bf16 %v152, %v151
  %v201 = vpack.c.bf16 %v154, %v153
  %v202 = vpack.c.bf16 %v156, %v155
  %v203 = vpack.c.bf16 %v158, %v157
  %v204 = vpack.c.bf16 %v160, %v159
  %v205 = vpack.c.bf16 %v162, %v161
  %v206 = vpack.c.bf16 %v164, %v163
  %v207 = vpack.c.bf16 %v166, %v165
  %v208 = vpack.c.bf16 %v168, %v167
  %v209 = vpack.c.bf16 %v170, %v169
  %v210 = vpack.c.bf16 %v172, %v171
  %v211 = vpack.c.bf16 %v174, %v173
  %v212 = vpack.c.bf16 %v176, %v175
  %vm213 = vcmask 785408
  %v215 = vsel %vm213, %v177, 0
  %v218 = vsel %vm213, %v178, 0
  %v221 = vsel %vm213, %v179, 0
  %v224 = vsel %vm213, %v180, 0
  %v227 = vsel %vm213, %v181, 0
  %v230 = vsel %vm213, %v182, 0
  %v233 = vsel %vm213, %v183, 0
  %v236 = vsel %vm213, %v184, 0
  %v239 = vsel %vm213, %v185, 0
  %v242 = vsel %vm213, %v186, 0
  %v245 = vsel %vm213, %v187, 0
  %v248 = vsel %vm213, %v188, 0
  %v251 = vsel %vm213, %v189, 0
  %v254 = vsel %vm213, %v190, 0
  %v257 = vsel %vm213, %v191, 0
  %v260 = vsel %vm213, %v192, 0
  %v263 = vsel %vm213, %v193, 0
  %v266 = vsel %vm213, %v194, 0
  %v269 = vsel %vm213, %v195, 0
  %v272 = vsel %vm213, %v196, 0
  %v275 = vsel %vm213, %v197, 0
  %v278 = vsel %vm213, %v198, 0
  %v281 = vsel %vm213, %v199, 0
  %v284 = vsel %vm213, %v200, 0
  %v287 = vsel %vm213, %v201, 0
  %v290 = vsel %vm213, %v202, 0
  %v293 = vsel %vm213, %v203, 0
  %v296 = vsel %vm213, %v204, 0
  %v299 = vsel %vm213, %v205, 0
  %v302 = vsel %vm213, %v206, 0
  %v305 = vsel %vm213, %v207, 0
  %v308 = vsel %vm213, %v208, 0
  %v311 = vsel %vm213, %v209, 0
  %v314 = vsel %vm213, %v210, 0
  %v317 = vsel %vm213, %v211, 0
  %v320 = vsel %vm213, %v212, 0
  %322 = vmatprep.subr.bf16.mxu0 %v94
  %323 = vmatpush1.bf16.msra.mxu0 %v93
  %324 = vmatprep.subr.bf16.mxu0 %v96
  %325 = vmatpush1.bf16.msra.mxu0 %v95
  %326 = vmatprep.subr.bf16.mxu0 %v98
  %327 = vmatpush1.bf16.msra.mxu0 %v97
  %328 = vmatprep.subr.bf16.mxu0 %v100
  %329 = vmatpush1.bf16.msra.mxu0 %v99
  %330 = vmatprep.subr.bf16.mxu0 %v102
  %331 = vmatpush1.bf16.msra.mxu0 %v101
  %332 = vmatprep.subr.bf16.mxu0 %v104
  %333 = vmatpush1.bf16.msra.mxu0 %v103
  %334 = vmatprep.subr.bf16.mxu0 0
  %335 = vmatpush1.bf16.msra.mxu0 0
  %336 = vmatprep.subr.bf16.mxu0 0
  %337 = vmatpush1.bf16.msra.mxu0 0
  %338 = vmatprep.subr.bf16.mxu0 0
  %339 = vmatpush1.bf16.msra.mxu0 0
  %340 = vmatprep.subr.bf16.mxu0 0
  %341 = vmatpush1.bf16.msra.mxu0 0
  %342 = vmatprep.subr.bf16.mxu0 0
  %343 = vmatpush1.bf16.msra.mxu0 0
  %344 = vmatprep.subr.bf16.mxu0 0
  %345 = vmatpush1.bf16.msra.mxu0 0
  %346 = vmatprep.subr.bf16.mxu0 0
  %347 = vmatpush1.bf16.msra.mxu0 0
  %348 = vmatprep.subr.bf16.mxu0 0
  %349 = vmatpush1.bf16.msra.mxu0 0
  %350 = vmatprep.subr.bf16.mxu0 0
  %351 = vmatpush1.bf16.msra.mxu0 0
  %352 = vmatprep.subr.bf16.mxu0 0
  %353 = vmatpush1.bf16.msra.mxu0 0
  %354 = vmatprep.mubr.bf16.mxu0 0
  %355 = vmatmul.mubr.bf16.gmra.mrb[0].mxu0 %v215
  %v356 = vpop.f32.mrb[0].mxu0
  %v357 = vadd.f32 0.0, %v356
  %v358 = vpop.f32.mrb[0].mxu0
  %v359 = vadd.f32 0.0, %v358
  %v360 = vpop.f32.mrb[0].mxu0
  %v361 = vadd.f32 0.0, %v360
  %v362 = vpop.f32.mrb[0].mxu0
  %v363 = vadd.f32 0.0, %v362
  %364 = vmatprep.mubr.bf16.mxu0 0
  %365 = vmatmul.mubr.bf16.gmra.mrb[0].mxu0 %v218
  %v366 = vpop.f32.mrb[0].mxu0
  %v367 = vadd.f32 0.0, %v366
  %v368 = vpop.f32.mrb[0].mxu0
  %v369 = vadd.f32 0.0, %v368
  %v370 = vpop.f32.mrb[0].mxu0
  %v371 = vadd.f32 0.0, %v370
  %v372 = vpop.f32.mrb[0].mxu0
  %v373 = vadd.f32 0.0, %v372
  %374 = vmatprep.mubr.bf16.mxu0 0
  %375 = vmatmul.mubr.bf16.gmra.mrb[0].mxu0 %v221
  %v376 = vpop.f32.mrb[0].mxu0
  %v377 = vadd.f32 0.0, %v376
  %v378 = vpop.f32.mrb[0].mxu0
  %v379 = vadd.f32 0.0, %v378
  %v380 = vpop.f32.mrb[0].mxu0
  %v381 = vadd.f32 0.0, %v380
  %v382 = vpop.f32.mrb[0].mxu0
  %v383 = vadd.f32 0.0, %v382
  %384 = vmatprep.mubr.bf16.mxu0 0
  %385 = vmatmul.mubr.bf16.gmra.mrb[0].mxu0 %v224
  %v386 = vpop.f32.mrb[0].mxu0
  %v387 = vadd.f32 0.0, %v386
  %v388 = vpop.f32.mrb[0].mxu0
  %v389 = vadd.f32 0.0, %v388
  %v390 = vpop.f32.mrb[0].mxu0
  %v391 = vadd.f32 0.0, %v390
  %v392 = vpop.f32.mrb[0].mxu0
  %v393 = vadd.f32 0.0, %v392
  %394 = vmatprep.mubr.bf16.mxu0 0
  %395 = vmatmul.mubr.bf16.gmra.mrb[0].mxu0 %v227
  %v396 = vpop.f32.mrb[0].mxu0
  %v397 = vadd.f32 0.0, %v396
  %v398 = vpop.f32.mrb[0].mxu0
  %v399 = vadd.f32 0.0, %v398
  %v400 = vpop.f32.mrb[0].mxu0
  %v401 = vadd.f32 0.0, %v400
  %v402 = vpop.f32.mrb[0].mxu0
  %v403 = vadd.f32 0.0, %v402
  %404 = vmatprep.mubr.bf16.mxu0 0
  %405 = vmatmul.mubr.bf16.gmra.mrb[0].mxu0 %v230
  %v406 = vpop.f32.mrb[0].mxu0
  %v407 = vadd.f32 0.0, %v406
  %v408 = vpop.f32.mrb[0].mxu0
  %v409 = vadd.f32 0.0, %v408
  %v410 = vpop.f32.mrb[0].mxu0
  %v411 = vadd.f32 0.0, %v410
  %v412 = vpop.f32.mrb[0].mxu0
  %v413 = vadd.f32 0.0, %v412
  %414 = vmatprep.mubr.bf16.mxu0 0
  %415 = vmatmul.mubr.bf16.gmra.mrb[0].mxu0 %v233
  %v416 = vpop.f32.mrb[0].mxu0
  %v417 = vadd.f32 0.0, %v416
  %v418 = vpop.f32.mrb[0].mxu0
  %v419 = vadd.f32 0.0, %v418
  %v420 = vpop.f32.mrb[0].mxu0
  %v421 = vadd.f32 0.0, %v420
  %v422 = vpop.f32.mrb[0].mxu0
  %v423 = vadd.f32 0.0, %v422
  %424 = vmatprep.mubr.bf16.mxu0 0
  %425 = vmatmul.mubr.bf16.gmra.mrb[0].mxu0 %v236
  %v426 = vpop.f32.mrb[0].mxu0
  %v427 = vadd.f32 0.0, %v426
  %v428 = vpop.f32.mrb[0].mxu0
  %v429 = vadd.f32 0.0, %v428
  %v430 = vpop.f32.mrb[0].mxu0
  %v431 = vadd.f32 0.0, %v430
  %v432 = vpop.f32.mrb[0].mxu0
  %v433 = vadd.f32 0.0, %v432
  %434 = vmatprep.mubr.bf16.mxu0 0
  %435 = vmatmul.mubr.bf16.gmra.mrb[0].mxu0 %v239
  %v436 = vpop.f32.mrb[0].mxu0
  %v437 = vadd.f32 0.0, %v436
  %v438 = vpop.f32.mrb[0].mxu0
  %v439 = vadd.f32 0.0, %v438
  %v440 = vpop.f32.mrb[0].mxu0
  %v441 = vadd.f32 0.0, %v440
  %v442 = vpop.f32.mrb[0].mxu0
  %v443 = vadd.f32 0.0, %v442
  %444 = vmatprep.mubr.bf16.mxu0 0
  %445 = vmatmul.mubr.bf16.gmra.mrb[0].mxu0 %v242
  %v446 = vpop.f32.mrb[0].mxu0
  %v447 = vadd.f32 0.0, %v446
  %v448 = vpop.f32.mrb[0].mxu0
  %v449 = vadd.f32 0.0, %v448
  %v450 = vpop.f32.mrb[0].mxu0
  %v451 = vadd.f32 0.0, %v450
  %v452 = vpop.f32.mrb[0].mxu0
  %v453 = vadd.f32 0.0, %v452
  %454 = vmatprep.mubr.bf16.mxu0 0
  %455 = vmatmul.mubr.bf16.gmra.mrb[0].mxu0 %v245
  %v456 = vpop.f32.mrb[0].mxu0
  %v457 = vadd.f32 0.0, %v456
  %v458 = vpop.f32.mrb[0].mxu0
  %v459 = vadd.f32 0.0, %v458
  %v460 = vpop.f32.mrb[0].mxu0
  %v461 = vadd.f32 0.0, %v460
  %v462 = vpop.f32.mrb[0].mxu0
  %v463 = vadd.f32 0.0, %v462
  %464 = vmatprep.mubr.bf16.mxu0 0
  %465 = vmatmul.mubr.bf16.gmra.mrb[0].mxu0 %v248
  %v466 = vpop.f32.mrb[0].mxu0
  %v467 = vadd.f32 0.0, %v466
  %v468 = vpop.f32.mrb[0].mxu0
  %v469 = vadd.f32 0.0, %v468
  %v470 = vpop.f32.mrb[0].mxu0
  %v471 = vadd.f32 0.0, %v470
  %v472 = vpop.f32.mrb[0].mxu0
  %v473 = vadd.f32 0.0, %v472
  %474 = vmatprep.mubr.bf16.mxu0 0
  %475 = vmatmul.mubr.bf16.gmra.mrb[0].mxu0 %v251
  %v476 = vpop.f32.mrb[0].mxu0
  %v477 = vadd.f32 0.0, %v476
  %v478 = vpop.f32.mrb[0].mxu0
  %v479 = vadd.f32 0.0, %v478
  %v480 = vpop.f32.mrb[0].mxu0
  %v481 = vadd.f32 0.0, %v480
  %v482 = vpop.f32.mrb[0].mxu0
  %v483 = vadd.f32 0.0, %v482
  %484 = vmatprep.mubr.bf16.mxu0 0
  %485 = vmatmul.mubr.bf16.gmra.mrb[0].mxu0 %v254
  %v486 = vpop.f32.mrb[0].mxu0
  %v487 = vadd.f32 0.0, %v486
  %v488 = vpop.f32.mrb[0].mxu0
  %v489 = vadd.f32 0.0, %v488
  %v490 = vpop.f32.mrb[0].mxu0
  %v491 = vadd.f32 0.0, %v490
  %v492 = vpop.f32.mrb[0].mxu0
  %v493 = vadd.f32 0.0, %v492
  %494 = vmatprep.mubr.bf16.mxu0 0
  %495 = vmatmul.mubr.bf16.gmra.mrb[0].mxu0 %v257
  %v496 = vpop.f32.mrb[0].mxu0
  %v497 = vadd.f32 0.0, %v496
  %v498 = vpop.f32.mrb[0].mxu0
  %v499 = vadd.f32 0.0, %v498
  %v500 = vpop.f32.mrb[0].mxu0
  %v501 = vadd.f32 0.0, %v500
  %v502 = vpop.f32.mrb[0].mxu0
  %v503 = vadd.f32 0.0, %v502
  %504 = vmatprep.mubr.bf16.mxu0 0
  %505 = vmatmul.mubr.bf16.gmra.mrb[0].mxu0 %v260
  %v506 = vpop.f32.mrb[0].mxu0
  %v507 = vadd.f32 0.0, %v506
  %v508 = vpop.f32.mrb[0].mxu0
  %v509 = vadd.f32 0.0, %v508
  %v510 = vpop.f32.mrb[0].mxu0
  %v511 = vadd.f32 0.0, %v510
  %v512 = vpop.f32.mrb[0].mxu0
  %v513 = vadd.f32 0.0, %v512
  %514 = vmatprep.mubr.bf16.mxu0 0
  %515 = vmatmul.mubr.bf16.gmra.mrb[0].mxu0 %v263
  %v516 = vpop.f32.mrb[0].mxu0
  %v517 = vadd.f32 0.0, %v516
  %v518 = vpop.f32.mrb[0].mxu0
  %v519 = vadd.f32 0.0, %v518
  %v520 = vpop.f32.mrb[0].mxu0
  %v521 = vadd.f32 0.0, %v520
  %v522 = vpop.f32.mrb[0].mxu0
  %v523 = vadd.f32 0.0, %v522
  %524 = vmatprep.mubr.bf16.mxu0 0
  %525 = vmatmul.mubr.bf16.gmra.mrb[0].mxu0 %v266
  %v526 = vpop.f32.mrb[0].mxu0
  %v527 = vadd.f32 0.0, %v526
  %v528 = vpop.f32.mrb[0].mxu0
  %v529 = vadd.f32 0.0, %v528
  %v530 = vpop.f32.mrb[0].mxu0
  %v531 = vadd.f32 0.0, %v530
  %v532 = vpop.f32.mrb[0].mxu0
  %v533 = vadd.f32 0.0, %v532
  %534 = vmatprep.mubr.bf16.mxu0 0
  %535 = vmatmul.mubr.bf16.gmra.mrb[0].mxu0 %v269
  %v536 = vpop.f32.mrb[0].mxu0
  %v537 = vadd.f32 0.0, %v536
  %v538 = vpop.f32.mrb[0].mxu0
  %v539 = vadd.f32 0.0, %v538
  %v540 = vpop.f32.mrb[0].mxu0
  %v541 = vadd.f32 0.0, %v540
  %v542 = vpop.f32.mrb[0].mxu0
  %v543 = vadd.f32 0.0, %v542
  %544 = vmatprep.mubr.bf16.mxu0 0
  %545 = vmatmul.mubr.bf16.gmra.mrb[0].mxu0 %v272
  %v546 = vpop.f32.mrb[0].mxu0
  %v547 = vadd.f32 0.0, %v546
  %v548 = vpop.f32.mrb[0].mxu0
  %v549 = vadd.f32 0.0, %v548
  %v550 = vpop.f32.mrb[0].mxu0
  %v551 = vadd.f32 0.0, %v550
  %v552 = vpop.f32.mrb[0].mxu0
  %v553 = vadd.f32 0.0, %v552
  %554 = vmatprep.mubr.bf16.mxu0 0
  %555 = vmatmul.mubr.bf16.gmra.mrb[0].mxu0 %v275
  %v556 = vpop.f32.mrb[0].mxu0
  %v557 = vadd.f32 0.0, %v556
  %v558 = vpop.f32.mrb[0].mxu0
  %v559 = vadd.f32 0.0, %v558
  %v560 = vpop.f32.mrb[0].mxu0
  %v561 = vadd.f32 0.0, %v560
  %v562 = vpop.f32.mrb[0].mxu0
  %v563 = vadd.f32 0.0, %v562
  %564 = vmatprep.mubr.bf16.mxu0 0
  %565 = vmatmul.mubr.bf16.gmra.mrb[0].mxu0 %v278
  %v566 = vpop.f32.mrb[0].mxu0
  %v567 = vadd.f32 0.0, %v566
  %v568 = vpop.f32.mrb[0].mxu0
  %v569 = vadd.f32 0.0, %v568
  %v570 = vpop.f32.mrb[0].mxu0
  %v571 = vadd.f32 0.0, %v570
  %v572 = vpop.f32.mrb[0].mxu0
  %v573 = vadd.f32 0.0, %v572
  %574 = vmatprep.mubr.bf16.mxu0 0
  %575 = vmatmul.mubr.bf16.gmra.mrb[0].mxu0 %v281
  %v576 = vpop.f32.mrb[0].mxu0
  %v577 = vadd.f32 0.0, %v576
  %v578 = vpop.f32.mrb[0].mxu0
  %v579 = vadd.f32 0.0, %v578
  %v580 = vpop.f32.mrb[0].mxu0
  %v581 = vadd.f32 0.0, %v580
  %v582 = vpop.f32.mrb[0].mxu0
  %v583 = vadd.f32 0.0, %v582
  %584 = vmatprep.mubr.bf16.mxu0 0
  %585 = vmatmul.mubr.bf16.gmra.mrb[0].mxu0 %v284
  %v586 = vpop.f32.mrb[0].mxu0
  %v587 = vadd.f32 0.0, %v586
  %v588 = vpop.f32.mrb[0].mxu0
  %v589 = vadd.f32 0.0, %v588
  %v590 = vpop.f32.mrb[0].mxu0
  %v591 = vadd.f32 0.0, %v590
  %v592 = vpop.f32.mrb[0].mxu0
  %v593 = vadd.f32 0.0, %v592
  %594 = vmatprep.mubr.bf16.mxu0 0
  %595 = vmatmul.mubr.bf16.gmra.mrb[0].mxu0 %v287
  %v596 = vpop.f32.mrb[0].mxu0
  %v597 = vadd.f32 0.0, %v596
  %v598 = vpop.f32.mrb[0].mxu0
  %v599 = vadd.f32 0.0, %v598
  %v600 = vpop.f32.mrb[0].mxu0
  %v601 = vadd.f32 0.0, %v600
  %v602 = vpop.f32.mrb[0].mxu0
  %v603 = vadd.f32 0.0, %v602
  %604 = vmatprep.mubr.bf16.mxu0 0
  %605 = vmatmul.mubr.bf16.gmra.mrb[0].mxu0 %v290
  %v606 = vpop.f32.mrb[0].mxu0
  %v607 = vadd.f32 0.0, %v606
  %v608 = vpop.f32.mrb[0].mxu0
  %v609 = vadd.f32 0.0, %v608
  %v610 = vpop.f32.mrb[0].mxu0
  %v611 = vadd.f32 0.0, %v610
  %v612 = vpop.f32.mrb[0].mxu0
  %v613 = vadd.f32 0.0, %v612
  %614 = vmatprep.mubr.bf16.mxu0 0
  %615 = vmatmul.mubr.bf16.gmra.mrb[0].mxu0 %v293
  %v616 = vpop.f32.mrb[0].mxu0
  %v617 = vadd.f32 0.0, %v616
  %v618 = vpop.f32.mrb[0].mxu0
  %v619 = vadd.f32 0.0, %v618
  %v620 = vpop.f32.mrb[0].mxu0
  %v621 = vadd.f32 0.0, %v620
  %v622 = vpop.f32.mrb[0].mxu0
  %v623 = vadd.f32 0.0, %v622
  %624 = vmatprep.mubr.bf16.mxu0 0
  %625 = vmatmul.mubr.bf16.gmra.mrb[0].mxu0 %v296
  %v626 = vpop.f32.mrb[0].mxu0
  %v627 = vadd.f32 0.0, %v626
  %v628 = vpop.f32.mrb[0].mxu0
  %v629 = vadd.f32 0.0, %v628
  %v630 = vpop.f32.mrb[0].mxu0
  %v631 = vadd.f32 0.0, %v630
  %v632 = vpop.f32.mrb[0].mxu0
  %v633 = vadd.f32 0.0, %v632
  %634 = vmatprep.mubr.bf16.mxu0 0
  %635 = vmatmul.mubr.bf16.gmra.mrb[0].mxu0 %v299
  %v636 = vpop.f32.mrb[0].mxu0
  %v637 = vadd.f32 0.0, %v636
  %v638 = vpop.f32.mrb[0].mxu0
  %v639 = vadd.f32 0.0, %v638
  %v640 = vpop.f32.mrb[0].mxu0
  %v641 = vadd.f32 0.0, %v640
  %v642 = vpop.f32.mrb[0].mxu0
  %v643 = vadd.f32 0.0, %v642
  %644 = vmatprep.mubr.bf16.mxu0 0
  %645 = vmatmul.mubr.bf16.gmra.mrb[0].mxu0 %v302
  %v646 = vpop.f32.mrb[0].mxu0
  %v647 = vadd.f32 0.0, %v646
  %v648 = vpop.f32.mrb[0].mxu0
  %v649 = vadd.f32 0.0, %v648
  %v650 = vpop.f32.mrb[0].mxu0
  %v651 = vadd.f32 0.0, %v650
  %v652 = vpop.f32.mrb[0].mxu0
  %v653 = vadd.f32 0.0, %v652
  %654 = vmatprep.mubr.bf16.mxu0 0
  %655 = vmatmul.mubr.bf16.gmra.mrb[0].mxu0 %v305
  %v656 = vpop.f32.mrb[0].mxu0
  %v657 = vadd.f32 0.0, %v656
  %v658 = vpop.f32.mrb[0].mxu0
  %v659 = vadd.f32 0.0, %v658
  %v660 = vpop.f32.mrb[0].mxu0
  %v661 = vadd.f32 0.0, %v660
  %v662 = vpop.f32.mrb[0].mxu0
  %v663 = vadd.f32 0.0, %v662
  %664 = vmatprep.mubr.bf16.mxu0 0
  %665 = vmatmul.mubr.bf16.gmra.mrb[0].mxu0 %v308
  %v666 = vpop.f32.mrb[0].mxu0
  %v667 = vadd.f32 0.0, %v666
  %v668 = vpop.f32.mrb[0].mxu0
  %v669 = vadd.f32 0.0, %v668
  %v670 = vpop.f32.mrb[0].mxu0
  %v671 = vadd.f32 0.0, %v670
  %v672 = vpop.f32.mrb[0].mxu0
  %v673 = vadd.f32 0.0, %v672
  %674 = vmatprep.mubr.bf16.mxu0 0
  %675 = vmatmul.mubr.bf16.gmra.mrb[0].mxu0 %v311
  %v676 = vpop.f32.mrb[0].mxu0
  %v677 = vadd.f32 0.0, %v676
  %v678 = vpop.f32.mrb[0].mxu0
  %v679 = vadd.f32 0.0, %v678
  %v680 = vpop.f32.mrb[0].mxu0
  %v681 = vadd.f32 0.0, %v680
  %v682 = vpop.f32.mrb[0].mxu0
  %v683 = vadd.f32 0.0, %v682
  %684 = vmatprep.mubr.bf16.mxu0 0
  %685 = vmatmul.mubr.bf16.gmra.mrb[0].mxu0 %v314
  %v686 = vpop.f32.mrb[0].mxu0
  %v687 = vadd.f32 0.0, %v686
  %v688 = vpop.f32.mrb[0].mxu0
  %v689 = vadd.f32 0.0, %v688
  %v690 = vpop.f32.mrb[0].mxu0
  %v691 = vadd.f32 0.0, %v690
  %v692 = vpop.f32.mrb[0].mxu0
  %v693 = vadd.f32 0.0, %v692
  %694 = vmatprep.mubr.bf16.mxu0 0
  %695 = vmatmul.mubr.bf16.gmra.mrb[0].mxu0 %v317
  %v696 = vpop.f32.mrb[0].mxu0
  %v697 = vadd.f32 0.0, %v696
  %v698 = vpop.f32.mrb[0].mxu0
  %v699 = vadd.f32 0.0, %v698
  %v700 = vpop.f32.mrb[0].mxu0
  %v701 = vadd.f32 0.0, %v700
  %v702 = vpop.f32.mrb[0].mxu0
  %v703 = vadd.f32 0.0, %v702
  %704 = vmatprep.mubr.bf16.mxu0 0
  %705 = vmatmul.mubr.bf16.gmra.mrb[0].mxu0 %v320
  %v706 = vpop.f32.mrb[0].mxu0
  %v707 = vadd.f32 0.0, %v706
  %v708 = vpop.f32.mrb[0].mxu0
  %v709 = vadd.f32 0.0, %v708
  %v710 = vpop.f32.mrb[0].mxu0
  %v711 = vadd.f32 0.0, %v710
  %v712 = vpop.f32.mrb[0].mxu0
  %v713 = vadd.f32 0.0, %v712
  %714 = vdwg.mxu0
  %v715 = vunpack.c.l.bf16 %v93
  %v716 = vunpack.c.l.bf16 %v94
  %v717 = vunpack.c.h.bf16 %v93
  %v718 = vunpack.c.h.bf16 %v94
  %v719 = vunpack.c.l.bf16 %v95
  %v720 = vunpack.c.l.bf16 %v96
  %v721 = vunpack.c.h.bf16 %v95
  %v722 = vunpack.c.h.bf16 %v96
  %v723 = vunpack.c.l.bf16 %v97
  %v724 = vunpack.c.l.bf16 %v98
  %v725 = vunpack.c.h.bf16 %v97
  %v726 = vunpack.c.h.bf16 %v98
  %v727 = vunpack.c.l.bf16 %v99
  %v728 = vunpack.c.l.bf16 %v100
  %v729 = vunpack.c.h.bf16 %v99
  %v730 = vunpack.c.h.bf16 %v100
  %v731 = vunpack.c.l.bf16 %v101
  %v732 = vunpack.c.l.bf16 %v102
  %v733 = vunpack.c.h.bf16 %v101
  %v734 = vunpack.c.h.bf16 %v102
  %v735 = vunpack.c.l.bf16 %v103
  %v736 = vunpack.c.l.bf16 %v104
  %v737 = vunpack.c.h.bf16 %v103
  %v738 = vunpack.c.h.bf16 %v104
  %vm739 = vcmask 556032
  %v740 = vsel %vm739, %v716, 0.0
  %v741 = vadd.f32 %v715, %v740
  %742 = vadd.xlane.f32.xlu0 %v741
  %v743 = vpop.xlane.xlu0 %742
  %v744 = vsel %vm739, %v718, 0.0
  %v745 = vadd.f32 %v717, %v744
  %746 = vadd.xlane.f32.xlu0 %v745
  %v747 = vpop.xlane.xlu0 %746
  %v748 = vsel %vm739, %v720, 0.0
  %v749 = vadd.f32 %v719, %v748
  %750 = vadd.xlane.f32.xlu0 %v749
  %v751 = vpop.xlane.xlu0 %750
  %v752 = vsel %vm739, %v722, 0.0
  %v753 = vadd.f32 %v721, %v752
  %754 = vadd.xlane.f32.xlu0 %v753
  %v755 = vpop.xlane.xlu0 %754
  %v756 = vsel %vm739, %v724, 0.0
  %v757 = vadd.f32 %v723, %v756
  %758 = vadd.xlane.f32.xlu0 %v757
  %v759 = vpop.xlane.xlu0 %758
  %v760 = vsel %vm739, %v726, 0.0
  %v761 = vadd.f32 %v725, %v760
  %762 = vadd.xlane.f32.xlu0 %v761
  %v763 = vpop.xlane.xlu0 %762
  %v764 = vsel %vm739, %v728, 0.0
  %v765 = vadd.f32 %v727, %v764
  %766 = vadd.xlane.f32.xlu0 %v765
  %v767 = vpop.xlane.xlu0 %766
  %v768 = vsel %vm739, %v730, 0.0
  %v769 = vadd.f32 %v729, %v768
  %770 = vadd.xlane.f32.xlu0 %v769
  %v771 = vpop.xlane.xlu0 %770
  %v772 = vsel %vm739, %v732, 0.0
  %v773 = vadd.f32 %v731, %v772
  %774 = vadd.xlane.f32.xlu0 %v773
  %v775 = vpop.xlane.xlu0 %774
  %v776 = vsel %vm739, %v734, 0.0
  %v777 = vadd.f32 %v733, %v776
  %778 = vadd.xlane.f32.xlu0 %v777
  %v779 = vpop.xlane.xlu0 %778
  %v780 = vsel %vm739, %v736, 0.0
  %v781 = vadd.f32 %v735, %v780
  %782 = vadd.xlane.f32.xlu0 %v781
  %v783 = vpop.xlane.xlu0 %782
  %v784 = vsel %vm739, %v738, 0.0
  %v785 = vadd.f32 %v737, %v784
  %786 = vadd.xlane.f32.xlu0 %v785
  %v787 = vpop.xlane.xlu0 %786
  %v788 = vrcp.pop 196.0
  %v789 = vmul.f32 %v743, %v788
  %v790 = vmul.f32 %v747, %v788
  %v791 = vmul.f32 %v751, %v788
  %v792 = vmul.f32 %v755, %v788
  %v793 = vmul.f32 %v759, %v788
  %v794 = vmul.f32 %v763, %v788
  %v795 = vmul.f32 %v767, %v788
  %v796 = vmul.f32 %v771, %v788
  %v797 = vmul.f32 %v775, %v788
  %v798 = vmul.f32 %v779, %v788
  %v799 = vmul.f32 %v783, %v788
  %v800 = vmul.f32 %v787, %v788
  %v801 = vunpack.c.l.bf16 %v177
  %v802 = vunpack.c.h.bf16 %v177
  %v803 = vunpack.c.l.bf16 %v178
  %v804 = vunpack.c.h.bf16 %v178
  %v805 = vunpack.c.l.bf16 %v179
  %v806 = vunpack.c.h.bf16 %v179
  %v807 = vunpack.c.l.bf16 %v180
  %v808 = vunpack.c.h.bf16 %v180
  %v809 = vunpack.c.l.bf16 %v181
  %v810 = vunpack.c.h.bf16 %v181
  %v811 = vunpack.c.l.bf16 %v182
  %v812 = vunpack.c.h.bf16 %v182
  %v813 = vunpack.c.l.bf16 %v183
  %v814 = vunpack.c.h.bf16 %v183
  %v815 = vunpack.c.l.bf16 %v184
  %v816 = vunpack.c.h.bf16 %v184
  %v817 = vunpack.c.l.bf16 %v185
  %v818 = vunpack.c.h.bf16 %v185
  %v819 = vunpack.c.l.bf16 %v186
  %v820 = vunpack.c.h.bf16 %v186
  %v821 = vunpack.c.l.bf16 %v187
  %v822 = vunpack.c.h.bf16 %v187
  %v823 = vunpack.c.l.bf16 %v188
  %v824 = vunpack.c.h.bf16 %v188
  %v825 = vunpack.c.l.bf16 %v189
  %v826 = vunpack.c.h.bf16 %v189
  %v827 = vunpack.c.l.bf16 %v190
  %v828 = vunpack.c.h.bf16 %v190
  %v829 = vunpack.c.l.bf16 %v191
  %v830 = vunpack.c.h.bf16 %v191
  %v831 = vunpack.c.l.bf16 %v192
  %v832 = vunpack.c.h.bf16 %v192
  %v833 = vunpack.c.l.bf16 %v193
  %v834 = vunpack.c.h.bf16 %v193
  %v835 = vunpack.c.l.bf16 %v194
  %v836 = vunpack.c.h.bf16 %v194
  %v837 = vunpack.c.l.bf16 %v195
  %v838 = vunpack.c.h.bf16 %v195
  %v839 = vunpack.c.l.bf16 %v196
  %v840 = vunpack.c.h.bf16 %v196
  %v841 = vunpack.c.l.bf16 %v197
  %v842 = vunpack.c.h.bf16 %v197
  %v843 = vunpack.c.l.bf16 %v198
  %v844 = vunpack.c.h.bf16 %v198
  %v845 = vunpack.c.l.bf16 %v199
  %v846 = vunpack.c.h.bf16 %v199
  %v847 = vunpack.c.l.bf16 %v200
  %v848 = vunpack.c.h.bf16 %v200
  %v849 = vunpack.c.l.bf16 %v201
  %v850 = vunpack.c.h.bf16 %v201
  %v851 = vunpack.c.l.bf16 %v202
  %v852 = vunpack.c.h.bf16 %v202
  %v853 = vunpack.c.l.bf16 %v203
  %v854 = vunpack.c.h.bf16 %v203
  %v855 = vunpack.c.l.bf16 %v204
  %v856 = vunpack.c.h.bf16 %v204
  %v857 = vunpack.c.l.bf16 %v205
  %v858 = vunpack.c.h.bf16 %v205
  %v859 = vunpack.c.l.bf16 %v206
  %v860 = vunpack.c.h.bf16 %v206
  %v861 = vunpack.c.l.bf16 %v207
  %v862 = vunpack.c.h.bf16 %v207
  %v863 = vunpack.c.l.bf16 %v208
  %v864 = vunpack.c.h.bf16 %v208
  %v865 = vunpack.c.l.bf16 %v209
  %v866 = vunpack.c.h.bf16 %v209
  %v867 = vunpack.c.l.bf16 %v210
  %v868 = vunpack.c.h.bf16 %v210
  %v869 = vunpack.c.l.bf16 %v211
  %v870 = vunpack.c.h.bf16 %v211
  %v871 = vunpack.c.l.bf16 %v212
  %v872 = vunpack.c.h.bf16 %v212
  %v874 = vsel %vm213, %v801, 0
  %v877 = vsel %vm213, %v802, 0
  %v880 = vsel %vm213, %v803, 0
  %v883 = vsel %vm213, %v804, 0
  %v886 = vsel %vm213, %v805, 0
  %v889 = vsel %vm213, %v806, 0
  %v892 = vsel %vm213, %v807, 0
  %v895 = vsel %vm213, %v808, 0
  %v898 = vsel %vm213, %v809, 0
  %v901 = vsel %vm213, %v810, 0
  %v904 = vsel %vm213, %v811, 0
  %v907 = vsel %vm213, %v812, 0
  %v910 = vsel %vm213, %v813, 0
  %v913 = vsel %vm213, %v814, 0
  %v916 = vsel %vm213, %v815, 0
  %v919 = vsel %vm213, %v816, 0
  %v922 = vsel %vm213, %v817, 0
  %v925 = vsel %vm213, %v818, 0
  %v928 = vsel %vm213, %v819, 0
  %v931 = vsel %vm213, %v820, 0
  %v934 = vsel %vm213, %v821, 0
  %v937 = vsel %vm213, %v822, 0
  %v940 = vsel %vm213, %v823, 0
  %v943 = vsel %vm213, %v824, 0
  %v946 = vsel %vm213, %v825, 0
  %v949 = vsel %vm213, %v826, 0
  %v952 = vsel %vm213, %v827, 0
  %v955 = vsel %vm213, %v828, 0
  %v958 = vsel %vm213, %v829, 0
  %v961 = vsel %vm213, %v830, 0
  %v964 = vsel %vm213, %v831, 0
  %v967 = vsel %vm213, %v832, 0
  %v970 = vsel %vm213, %v833, 0
  %v973 = vsel %vm213, %v834, 0
  %v976 = vsel %vm213, %v835, 0
  %v979 = vsel %vm213, %v836, 0
  %v982 = vsel %vm213, %v837, 0
  %v985 = vsel %vm213, %v838, 0
  %v988 = vsel %vm213, %v839, 0
  %v991 = vsel %vm213, %v840, 0
  %v994 = vsel %vm213, %v841, 0
  %v997 = vsel %vm213, %v842, 0
  %v1000 = vsel %vm213, %v843, 0
  %v1003 = vsel %vm213, %v844, 0
  %v1006 = vsel %vm213, %v845, 0
  %v1009 = vsel %vm213, %v846, 0
  %v1012 = vsel %vm213, %v847, 0
  %v1015 = vsel %vm213, %v848, 0
  %v1018 = vsel %vm213, %v849, 0
  %v1021 = vsel %vm213, %v850, 0
  %v1024 = vsel %vm213, %v851, 0
  %v1027 = vsel %vm213, %v852, 0
  %v1030 = vsel %vm213, %v853, 0
  %v1033 = vsel %vm213, %v854, 0
  %v1036 = vsel %vm213, %v855, 0
  %v1039 = vsel %vm213, %v856, 0
  %v1042 = vsel %vm213, %v857, 0
  %v1045 = vsel %vm213, %v858, 0
  %v1048 = vsel %vm213, %v859, 0
  %v1051 = vsel %vm213, %v860, 0
  %v1054 = vsel %vm213, %v861, 0
  %v1057 = vsel %vm213, %v862, 0
  %v1060 = vsel %vm213, %v863, 0
  %v1063 = vsel %vm213, %v864, 0
  %v1066 = vsel %vm213, %v865, 0
  %v1069 = vsel %vm213, %v866, 0
  %v1072 = vsel %vm213, %v867, 0
  %v1075 = vsel %vm213, %v868, 0
  %v1078 = vsel %vm213, %v869, 0
  %v1081 = vsel %vm213, %v870, 0
  %v1084 = vsel %vm213, %v871, 0
  %v1087 = vsel %vm213, %v872, 0
  %1089 = vmatprep.subr.mxu0 0.0
  %1090 = vmatpush1.msra.mxu0 %v789
  %1091 = vmatprep.subr.mxu0 0.0
  %1092 = vmatpush1.msra.mxu0 %v790
  %1093 = vmatprep.subr.mxu0 0.0
  %1094 = vmatpush1.msra.mxu0 %v791
  %1095 = vmatprep.subr.mxu0 0.0
  %1096 = vmatpush1.msra.mxu0 %v792
  %1097 = vmatprep.subr.mxu0 0.0
  %1098 = vmatpush1.msra.mxu0 %v793
  %1099 = vmatprep.subr.mxu0 0.0
  %1100 = vmatpush1.msra.mxu0 %v794
  %1101 = vmatprep.subr.mxu0 0.0
  %1102 = vmatpush1.msra.mxu0 %v795
  %1103 = vmatprep.subr.mxu0 0.0
  %1104 = vmatpush1.msra.mxu0 %v796
  %1105 = vmatprep.subr.mxu0 0.0
  %1106 = vmatpush1.msra.mxu0 %v797
  %1107 = vmatprep.subr.mxu0 0.0
  %1108 = vmatpush1.msra.mxu0 %v798
  %1109 = vmatprep.subr.mxu0 0.0
  %1110 = vmatpush1.msra.mxu0 %v799
  %1111 = vmatprep.subr.mxu0 0.0
  %1112 = vmatpush1.msra.mxu0 %v800
  %1113 = vmatprep.subr.mxu0 0.0
  %1114 = vmatpush1.msra.mxu0 0.0
  %1115 = vmatprep.subr.mxu0 0.0
  %1116 = vmatpush1.msra.mxu0 0.0
  %1117 = vmatprep.subr.mxu0 0.0
  %1118 = vmatpush1.msra.mxu0 0.0
  %1119 = vmatprep.subr.mxu0 0.0
  %1120 = vmatpush1.msra.mxu0 0.0
  %1121 = vmatprep.subr.mxu0 0.0
  %1122 = vmatpush1.msra.mxu0 0.0
  %1123 = vmatprep.subr.mxu0 0.0
  %1124 = vmatpush1.msra.mxu0 0.0
  %1125 = vmatprep.subr.mxu0 0.0
  %1126 = vmatpush1.msra.mxu0 0.0
  %1127 = vmatprep.subr.mxu0 0.0
  %1128 = vmatpush1.msra.mxu0 0.0
  %1129 = vmatprep.subr.mxu0 0.0
  %1130 = vmatpush1.msra.mxu0 0.0
  %1131 = vmatprep.subr.mxu0 0.0
  %1132 = vmatpush1.msra.mxu0 0.0
  %1133 = vmatprep.subr.mxu0 0.0
  %1134 = vmatpush1.msra.mxu0 0.0
  %1135 = vmatprep.subr.mxu0 0.0
  %1136 = vmatpush1.msra.mxu0 0.0
  %1137 = vmatprep.subr.mxu0 0.0
  %1138 = vmatpush1.msra.mxu0 0.0
  %1139 = vmatprep.subr.mxu0 0.0
  %1140 = vmatpush1.msra.mxu0 0.0
  %1141 = vmatprep.subr.mxu0 0.0
  %1142 = vmatpush1.msra.mxu0 0.0
  %1143 = vmatprep.subr.mxu0 0.0
  %1144 = vmatpush1.msra.mxu0 0.0
  %1145 = vmatprep.subr.mxu0 0.0
  %1146 = vmatpush1.msra.mxu0 0.0
  %1147 = vmatprep.subr.mxu0 0.0
  %1148 = vmatpush1.msra.mxu0 0.0
  %1149 = vmatprep.subr.mxu0 0.0
  %1150 = vmatpush1.msra.mxu0 0.0
  %1151 = vmatprep.subr.mxu0 0.0
  %1152 = vmatpush1.msra.mxu0 0.0
  %1153 = vmatprep.mubr.f32.mxu0 0.0
  %1154 = vmatmul.mubr.f32.gmra.mrb[0].mxu0 %v874
  %v1155 = vpop.f32.mrb[0].mxu0
  %v1156 = vadd.f32 0.0, %v1155
  %v1157 = vpop.f32.mrb[0].mxu0
  %1158 = vmatprep.mubr.f32.mxu0 0.0
  %1159 = vmatmul.mubr.f32.gmra.mrb[0].mxu0 %v877
  %v1160 = vpop.f32.mrb[0].mxu0
  %v1161 = vadd.f32 0.0, %v1160
  %v1162 = vpop.f32.mrb[0].mxu0
  %1163 = vmatprep.mubr.f32.mxu0 0.0
  %1164 = vmatmul.mubr.f32.gmra.mrb[0].mxu0 %v880
  %v1165 = vpop.f32.mrb[0].mxu0
  %v1166 = vadd.f32 0.0, %v1165
  %v1167 = vpop.f32.mrb[0].mxu0
  %1168 = vmatprep.mubr.f32.mxu0 0.0
  %1169 = vmatmul.mubr.f32.gmra.mrb[0].mxu0 %v883
  %v1170 = vpop.f32.mrb[0].mxu0
  %v1171 = vadd.f32 0.0, %v1170
  %v1172 = vpop.f32.mrb[0].mxu0
  %1173 = vmatprep.mubr.f32.mxu0 0.0
  %1174 = vmatmul.mubr.f32.gmra.mrb[0].mxu0 %v886
  %v1175 = vpop.f32.mrb[0].mxu0
  %v1176 = vadd.f32 0.0, %v1175
  %v1177 = vpop.f32.mrb[0].mxu0
  %1178 = vmatprep.mubr.f32.mxu0 0.0
  %1179 = vmatmul.mubr.f32.gmra.mrb[0].mxu0 %v889
  %v1180 = vpop.f32.mrb[0].mxu0
  %v1181 = vadd.f32 0.0, %v1180
  %v1182 = vpop.f32.mrb[0].mxu0
  %1183 = vmatprep.mubr.f32.mxu0 0.0
  %1184 = vmatmul.mubr.f32.gmra.mrb[0].mxu0 %v892
  %v1185 = vpop.f32.mrb[0].mxu0
  %v1186 = vadd.f32 0.0, %v1185
  %v1187 = vpop.f32.mrb[0].mxu0
  %1188 = vmatprep.mubr.f32.mxu0 0.0
  %1189 = vmatmul.mubr.f32.gmra.mrb[0].mxu0 %v895
  %v1190 = vpop.f32.mrb[0].mxu0
  %v1191 = vadd.f32 0.0, %v1190
  %v1192 = vpop.f32.mrb[0].mxu0
  %1193 = vmatprep.mubr.f32.mxu0 0.0
  %1194 = vmatmul.mubr.f32.gmra.mrb[0].mxu0 %v898
  %v1195 = vpop.f32.mrb[0].mxu0
  %v1196 = vadd.f32 0.0, %v1195
  %v1197 = vpop.f32.mrb[0].mxu0
  %1198 = vmatprep.mubr.f32.mxu0 0.0
  %1199 = vmatmul.mubr.f32.gmra.mrb[0].mxu0 %v901
  %v1200 = vpop.f32.mrb[0].mxu0
  %v1201 = vadd.f32 0.0, %v1200
  %v1202 = vpop.f32.mrb[0].mxu0
  %1203 = vmatprep.mubr.f32.mxu0 0.0
  %1204 = vmatmul.mubr.f32.gmra.mrb[0].mxu0 %v904
  %v1205 = vpop.f32.mrb[0].mxu0
  %v1206 = vadd.f32 0.0, %v1205
  %v1207 = vpop.f32.mrb[0].mxu0
  %1208 = vmatprep.mubr.f32.mxu0 0.0
  %1209 = vmatmul.mubr.f32.gmra.mrb[0].mxu0 %v907
  %v1210 = vpop.f32.mrb[0].mxu0
  %v1211 = vadd.f32 0.0, %v1210
  %v1212 = vpop.f32.mrb[0].mxu0
  %1213 = vmatprep.mubr.f32.mxu0 0.0
  %1214 = vmatmul.mubr.f32.gmra.mrb[0].mxu0 %v910
  %v1215 = vpop.f32.mrb[0].mxu0
  %v1216 = vadd.f32 0.0, %v1215
  %v1217 = vpop.f32.mrb[0].mxu0
  %1218 = vmatprep.mubr.f32.mxu0 0.0
  %1219 = vmatmul.mubr.f32.gmra.mrb[0].mxu0 %v913
  %v1220 = vpop.f32.mrb[0].mxu0
  %v1221 = vadd.f32 0.0, %v1220
  %v1222 = vpop.f32.mrb[0].mxu0
  %1223 = vmatprep.mubr.f32.mxu0 0.0
  %1224 = vmatmul.mubr.f32.gmra.mrb[0].mxu0 %v916
  %v1225 = vpop.f32.mrb[0].mxu0
  %v1226 = vadd.f32 0.0, %v1225
  %v1227 = vpop.f32.mrb[0].mxu0
  %1228 = vmatprep.mubr.f32.mxu0 0.0
  %1229 = vmatmul.mubr.f32.gmra.mrb[0].mxu0 %v919
  %v1230 = vpop.f32.mrb[0].mxu0
  %v1231 = vadd.f32 0.0, %v1230
  %v1232 = vpop.f32.mrb[0].mxu0
  %1233 = vmatprep.mubr.f32.mxu0 0.0
  %1234 = vmatmul.mubr.f32.gmra.mrb[0].mxu0 %v922
  %v1235 = vpop.f32.mrb[0].mxu0
  %v1236 = vadd.f32 0.0, %v1235
  %v1237 = vpop.f32.mrb[0].mxu0
  %1238 = vmatprep.mubr.f32.mxu0 0.0
  %1239 = vmatmul.mubr.f32.gmra.mrb[0].mxu0 %v925
  %v1240 = vpop.f32.mrb[0].mxu0
  %v1241 = vadd.f32 0.0, %v1240
  %v1242 = vpop.f32.mrb[0].mxu0
  %1243 = vmatprep.mubr.f32.mxu0 0.0
  %1244 = vmatmul.mubr.f32.gmra.mrb[0].mxu0 %v928
  %v1245 = vpop.f32.mrb[0].mxu0
  %v1246 = vadd.f32 0.0, %v1245
  %v1247 = vpop.f32.mrb[0].mxu0
  %1248 = vmatprep.mubr.f32.mxu0 0.0
  %1249 = vmatmul.mubr.f32.gmra.mrb[0].mxu0 %v931
  %v1250 = vpop.f32.mrb[0].mxu0
  %v1251 = vadd.f32 0.0, %v1250
  %v1252 = vpop.f32.mrb[0].mxu0
  %1253 = vmatprep.mubr.f32.mxu0 0.0
  %1254 = vmatmul.mubr.f32.gmra.mrb[0].mxu0 %v934
  %v1255 = vpop.f32.mrb[0].mxu0
  %v1256 = vadd.f32 0.0, %v1255
  %v1257 = vpop.f32.mrb[0].mxu0
  %1258 = vmatprep.mubr.f32.mxu0 0.0
  %1259 = vmatmul.mubr.f32.gmra.mrb[0].mxu0 %v937
  %v1260 = vpop.f32.mrb[0].mxu0
  %v1261 = vadd.f32 0.0, %v1260
  %v1262 = vpop.f32.mrb[0].mxu0
  %1263 = vmatprep.mubr.f32.mxu0 0.0
  %1264 = vmatmul.mubr.f32.gmra.mrb[0].mxu0 %v940
  %v1265 = vpop.f32.mrb[0].mxu0
  %v1266 = vadd.f32 0.0, %v1265
  %v1267 = vpop.f32.mrb[0].mxu0
  %1268 = vmatprep.mubr.f32.mxu0 0.0
  %1269 = vmatmul.mubr.f32.gmra.mrb[0].mxu0 %v943
  %v1270 = vpop.f32.mrb[0].mxu0
  %v1271 = vadd.f32 0.0, %v1270
  %v1272 = vpop.f32.mrb[0].mxu0
  %1273 = vmatprep.mubr.f32.mxu0 0.0
  %1274 = vmatmul.mubr.f32.gmra.mrb[0].mxu0 %v946
  %v1275 = vpop.f32.mrb[0].mxu0
  %v1276 = vadd.f32 0.0, %v1275
  %v1277 = vpop.f32.mrb[0].mxu0
  %1278 = vmatprep.mubr.f32.mxu0 0.0
  %1279 = vmatmul.mubr.f32.gmra.mrb[0].mxu0 %v949
  %v1280 = vpop.f32.mrb[0].mxu0
  %v1281 = vadd.f32 0.0, %v1280
  %v1282 = vpop.f32.mrb[0].mxu0
  %1283 = vmatprep.mubr.f32.mxu0 0.0
  %1284 = vmatmul.mubr.f32.gmra.mrb[0].mxu0 %v952
  %v1285 = vpop.f32.mrb[0].mxu0
  %v1286 = vadd.f32 0.0, %v1285
  %v1287 = vpop.f32.mrb[0].mxu0
  %1288 = vmatprep.mubr.f32.mxu0 0.0
  %1289 = vmatmul.mubr.f32.gmra.mrb[0].mxu0 %v955
  %v1290 = vpop.f32.mrb[0].mxu0
  %v1291 = vadd.f32 0.0, %v1290
  %v1292 = vpop.f32.mrb[0].mxu0
  %1293 = vmatprep.mubr.f32.mxu0 0.0
  %1294 = vmatmul.mubr.f32.gmra.mrb[0].mxu0 %v958
  %v1295 = vpop.f32.mrb[0].mxu0
  %v1296 = vadd.f32 0.0, %v1295
  %v1297 = vpop.f32.mrb[0].mxu0
  %1298 = vmatprep.mubr.f32.mxu0 0.0
  %1299 = vmatmul.mubr.f32.gmra.mrb[0].mxu0 %v961
  %v1300 = vpop.f32.mrb[0].mxu0
  %v1301 = vadd.f32 0.0, %v1300
  %v1302 = vpop.f32.mrb[0].mxu0
  %1303 = vmatprep.mubr.f32.mxu0 0.0
  %1304 = vmatmul.mubr.f32.gmra.mrb[0].mxu0 %v964
  %v1305 = vpop.f32.mrb[0].mxu0
  %v1306 = vadd.f32 0.0, %v1305
  %v1307 = vpop.f32.mrb[0].mxu0
  %1308 = vmatprep.mubr.f32.mxu0 0.0
  %1309 = vmatmul.mubr.f32.gmra.mrb[0].mxu0 %v967
  %v1310 = vpop.f32.mrb[0].mxu0
  %v1311 = vadd.f32 0.0, %v1310
  %v1312 = vpop.f32.mrb[0].mxu0
  %1313 = vmatprep.mubr.f32.mxu0 0.0
  %1314 = vmatmul.mubr.f32.gmra.mrb[0].mxu0 %v970
  %v1315 = vpop.f32.mrb[0].mxu0
  %v1316 = vadd.f32 0.0, %v1315
  %v1317 = vpop.f32.mrb[0].mxu0
  %1318 = vmatprep.mubr.f32.mxu0 0.0
  %1319 = vmatmul.mubr.f32.gmra.mrb[0].mxu0 %v973
  %v1320 = vpop.f32.mrb[0].mxu0
  %v1321 = vadd.f32 0.0, %v1320
  %v1322 = vpop.f32.mrb[0].mxu0
  %1323 = vmatprep.mubr.f32.mxu0 0.0
  %1324 = vmatmul.mubr.f32.gmra.mrb[0].mxu0 %v976
  %v1325 = vpop.f32.mrb[0].mxu0
  %v1326 = vadd.f32 0.0, %v1325
  %v1327 = vpop.f32.mrb[0].mxu0
  %1328 = vmatprep.mubr.f32.mxu0 0.0
  %1329 = vmatmul.mubr.f32.gmra.mrb[0].mxu0 %v979
  %v1330 = vpop.f32.mrb[0].mxu0
  %v1331 = vadd.f32 0.0, %v1330
  %v1332 = vpop.f32.mrb[0].mxu0
  %1333 = vmatprep.mubr.f32.mxu0 0.0
  %1334 = vmatmul.mubr.f32.gmra.mrb[0].mxu0 %v982
  %v1335 = vpop.f32.mrb[0].mxu0
  %v1336 = vadd.f32 0.0, %v1335
  %v1337 = vpop.f32.mrb[0].mxu0
  %1338 = vmatprep.mubr.f32.mxu0 0.0
  %1339 = vmatmul.mubr.f32.gmra.mrb[0].mxu0 %v985
  %v1340 = vpop.f32.mrb[0].mxu0
  %v1341 = vadd.f32 0.0, %v1340
  %v1342 = vpop.f32.mrb[0].mxu0
  %1343 = vmatprep.mubr.f32.mxu0 0.0
  %1344 = vmatmul.mubr.f32.gmra.mrb[0].mxu0 %v988
  %v1345 = vpop.f32.mrb[0].mxu0
  %v1346 = vadd.f32 0.0, %v1345
  %v1347 = vpop.f32.mrb[0].mxu0
  %1348 = vmatprep.mubr.f32.mxu0 0.0
  %1349 = vmatmul.mubr.f32.gmra.mrb[0].mxu0 %v991
  %v1350 = vpop.f32.mrb[0].mxu0
  %v1351 = vadd.f32 0.0, %v1350
  %v1352 = vpop.f32.mrb[0].mxu0
  %1353 = vmatprep.mubr.f32.mxu0 0.0
  %1354 = vmatmul.mubr.f32.gmra.mrb[0].mxu0 %v994
  %v1355 = vpop.f32.mrb[0].mxu0
  %v1356 = vadd.f32 0.0, %v1355
  %v1357 = vpop.f32.mrb[0].mxu0
  %1358 = vmatprep.mubr.f32.mxu0 0.0
  %1359 = vmatmul.mubr.f32.gmra.mrb[0].mxu0 %v997
  %v1360 = vpop.f32.mrb[0].mxu0
  %v1361 = vadd.f32 0.0, %v1360
  %v1362 = vpop.f32.mrb[0].mxu0
  %1363 = vmatprep.mubr.f32.mxu0 0.0
  %1364 = vmatmul.mubr.f32.gmra.mrb[0].mxu0 %v1000
  %v1365 = vpop.f32.mrb[0].mxu0
  %v1366 = vadd.f32 0.0, %v1365
  %v1367 = vpop.f32.mrb[0].mxu0
  %1368 = vmatprep.mubr.f32.mxu0 0.0
  %1369 = vmatmul.mubr.f32.gmra.mrb[0].mxu0 %v1003
  %v1370 = vpop.f32.mrb[0].mxu0
  %v1371 = vadd.f32 0.0, %v1370
  %v1372 = vpop.f32.mrb[0].mxu0
  %1373 = vmatprep.mubr.f32.mxu0 0.0
  %1374 = vmatmul.mubr.f32.gmra.mrb[0].mxu0 %v1006
  %v1375 = vpop.f32.mrb[0].mxu0
  %v1376 = vadd.f32 0.0, %v1375
  %v1377 = vpop.f32.mrb[0].mxu0
  %1378 = vmatprep.mubr.f32.mxu0 0.0
  %1379 = vmatmul.mubr.f32.gmra.mrb[0].mxu0 %v1009
  %v1380 = vpop.f32.mrb[0].mxu0
  %v1381 = vadd.f32 0.0, %v1380
  %v1382 = vpop.f32.mrb[0].mxu0
  %1383 = vmatprep.mubr.f32.mxu0 0.0
  %1384 = vmatmul.mubr.f32.gmra.mrb[0].mxu0 %v1012
  %v1385 = vpop.f32.mrb[0].mxu0
  %v1386 = vadd.f32 0.0, %v1385
  %v1387 = vpop.f32.mrb[0].mxu0
  %1388 = vmatprep.mubr.f32.mxu0 0.0
  %1389 = vmatmul.mubr.f32.gmra.mrb[0].mxu0 %v1015
  %v1390 = vpop.f32.mrb[0].mxu0
  %v1391 = vadd.f32 0.0, %v1390
  %v1392 = vpop.f32.mrb[0].mxu0
  %1393 = vmatprep.mubr.f32.mxu0 0.0
  %1394 = vmatmul.mubr.f32.gmra.mrb[0].mxu0 %v1018
  %v1395 = vpop.f32.mrb[0].mxu0
  %v1396 = vadd.f32 0.0, %v1395
  %v1397 = vpop.f32.mrb[0].mxu0
  %1398 = vmatprep.mubr.f32.mxu0 0.0
  %1399 = vmatmul.mubr.f32.gmra.mrb[0].mxu0 %v1021
  %v1400 = vpop.f32.mrb[0].mxu0
  %v1401 = vadd.f32 0.0, %v1400
  %v1402 = vpop.f32.mrb[0].mxu0
  %1403 = vmatprep.mubr.f32.mxu0 0.0
  %1404 = vmatmul.mubr.f32.gmra.mrb[0].mxu0 %v1024
  %v1405 = vpop.f32.mrb[0].mxu0
  %v1406 = vadd.f32 0.0, %v1405
  %v1407 = vpop.f32.mrb[0].mxu0
  %1408 = vmatprep.mubr.f32.mxu0 0.0
  %1409 = vmatmul.mubr.f32.gmra.mrb[0].mxu0 %v1027
  %v1410 = vpop.f32.mrb[0].mxu0
  %v1411 = vadd.f32 0.0, %v1410
  %v1412 = vpop.f32.mrb[0].mxu0
  %1413 = vmatprep.mubr.f32.mxu0 0.0
  %1414 = vmatmul.mubr.f32.gmra.mrb[0].mxu0 %v1030
  %v1415 = vpop.f32.mrb[0].mxu0
  %v1416 = vadd.f32 0.0, %v1415
  %v1417 = vpop.f32.mrb[0].mxu0
  %1418 = vmatprep.mubr.f32.mxu0 0.0
  %1419 = vmatmul.mubr.f32.gmra.mrb[0].mxu0 %v1033
  %v1420 = vpop.f32.mrb[0].mxu0
  %v1421 = vadd.f32 0.0, %v1420
  %v1422 = vpop.f32.mrb[0].mxu0
  %1423 = vmatprep.mubr.f32.mxu0 0.0
  %1424 = vmatmul.mubr.f32.gmra.mrb[0].mxu0 %v1036
  %v1425 = vpop.f32.mrb[0].mxu0
  %v1426 = vadd.f32 0.0, %v1425
  %v1427 = vpop.f32.mrb[0].mxu0
  %1428 = vmatprep.mubr.f32.mxu0 0.0
  %1429 = vmatmul.mubr.f32.gmra.mrb[0].mxu0 %v1039
  %v1430 = vpop.f32.mrb[0].mxu0
  %v1431 = vadd.f32 0.0, %v1430
  %v1432 = vpop.f32.mrb[0].mxu0
  %1433 = vmatprep.mubr.f32.mxu0 0.0
  %1434 = vmatmul.mubr.f32.gmra.mrb[0].mxu0 %v1042
  %v1435 = vpop.f32.mrb[0].mxu0
  %v1436 = vadd.f32 0.0, %v1435
  %v1437 = vpop.f32.mrb[0].mxu0
  %1438 = vmatprep.mubr.f32.mxu0 0.0
  %1439 = vmatmul.mubr.f32.gmra.mrb[0].mxu0 %v1045
  %v1440 = vpop.f32.mrb[0].mxu0
  %v1441 = vadd.f32 0.0, %v1440
  %v1442 = vpop.f32.mrb[0].mxu0
  %1443 = vmatprep.mubr.f32.mxu0 0.0
  %1444 = vmatmul.mubr.f32.gmra.mrb[0].mxu0 %v1048
  %v1445 = vpop.f32.mrb[0].mxu0
  %v1446 = vadd.f32 0.0, %v1445
  %v1447 = vpop.f32.mrb[0].mxu0
  %1448 = vmatprep.mubr.f32.mxu0 0.0
  %1449 = vmatmul.mubr.f32.gmra.mrb[0].mxu0 %v1051
  %v1450 = vpop.f32.mrb[0].mxu0
  %v1451 = vadd.f32 0.0, %v1450
  %v1452 = vpop.f32.mrb[0].mxu0
  %1453 = vmatprep.mubr.f32.mxu0 0.0
  %1454 = vmatmul.mubr.f32.gmra.mrb[0].mxu0 %v1054
  %v1455 = vpop.f32.mrb[0].mxu0
  %v1456 = vadd.f32 0.0, %v1455
  %v1457 = vpop.f32.mrb[0].mxu0
  %1458 = vmatprep.mubr.f32.mxu0 0.0
  %1459 = vmatmul.mubr.f32.gmra.mrb[0].mxu0 %v1057
  %v1460 = vpop.f32.mrb[0].mxu0
  %v1461 = vadd.f32 0.0, %v1460
  %v1462 = vpop.f32.mrb[0].mxu0
  %1463 = vmatprep.mubr.f32.mxu0 0.0
  %1464 = vmatmul.mubr.f32.gmra.mrb[0].mxu0 %v1060
  %v1465 = vpop.f32.mrb[0].mxu0
  %v1466 = vadd.f32 0.0, %v1465
  %v1467 = vpop.f32.mrb[0].mxu0
  %1468 = vmatprep.mubr.f32.mxu0 0.0
  %1469 = vmatmul.mubr.f32.gmra.mrb[0].mxu0 %v1063
  %v1470 = vpop.f32.mrb[0].mxu0
  %v1471 = vadd.f32 0.0, %v1470
  %v1472 = vpop.f32.mrb[0].mxu0
  %1473 = vmatprep.mubr.f32.mxu0 0.0
  %1474 = vmatmul.mubr.f32.gmra.mrb[0].mxu0 %v1066
  %v1475 = vpop.f32.mrb[0].mxu0
  %v1476 = vadd.f32 0.0, %v1475
  %v1477 = vpop.f32.mrb[0].mxu0
  %1478 = vmatprep.mubr.f32.mxu0 0.0
  %1479 = vmatmul.mubr.f32.gmra.mrb[0].mxu0 %v1069
  %v1480 = vpop.f32.mrb[0].mxu0
  %v1481 = vadd.f32 0.0, %v1480
  %v1482 = vpop.f32.mrb[0].mxu0
  %1483 = vmatprep.mubr.f32.mxu0 0.0
  %1484 = vmatmul.mubr.f32.gmra.mrb[0].mxu0 %v1072
  %v1485 = vpop.f32.mrb[0].mxu0
  %v1486 = vadd.f32 0.0, %v1485
  %v1487 = vpop.f32.mrb[0].mxu0
  %1488 = vmatprep.mubr.f32.mxu0 0.0
  %1489 = vmatmul.mubr.f32.gmra.mrb[0].mxu0 %v1075
  %v1490 = vpop.f32.mrb[0].mxu0
  %v1491 = vadd.f32 0.0, %v1490
  %v1492 = vpop.f32.mrb[0].mxu0
  %1493 = vmatprep.mubr.f32.mxu0 0.0
  %1494 = vmatmul.mubr.f32.gmra.mrb[0].mxu0 %v1078
  %v1495 = vpop.f32.mrb[0].mxu0
  %v1496 = vadd.f32 0.0, %v1495
  %v1497 = vpop.f32.mrb[0].mxu0
  %1498 = vmatprep.mubr.f32.mxu0 0.0
  %1499 = vmatmul.mubr.f32.gmra.mrb[0].mxu0 %v1081
  %v1500 = vpop.f32.mrb[0].mxu0
  %v1501 = vadd.f32 0.0, %v1500
  %v1502 = vpop.f32.mrb[0].mxu0
  %1503 = vmatprep.mubr.f32.mxu0 0.0
  %1504 = vmatmul.mubr.f32.gmra.mrb[0].mxu0 %v1084
  %v1505 = vpop.f32.mrb[0].mxu0
  %v1506 = vadd.f32 0.0, %v1505
  %v1507 = vpop.f32.mrb[0].mxu0
  %1508 = vmatprep.mubr.f32.mxu0 0.0
  %1509 = vmatmul.mubr.f32.gmra.mrb[0].mxu0 %v1087
  %v1510 = vpop.f32.mrb[0].mxu0
  %v1511 = vadd.f32 0.0, %v1510
  %v1512 = vpop.f32.mrb[0].mxu0
  %1513 = vdwg.mxu0
  %v1514 = vmul.f32 %v357, %v357
  %v1515 = vmul.f32 %v359, %v359
  %v1516 = vmul.f32 %v361, %v361
  %v1517 = vmul.f32 %v363, %v363
  %v1518 = vmul.f32 %v367, %v367
  %v1519 = vmul.f32 %v369, %v369
  %v1520 = vmul.f32 %v371, %v371
  %v1521 = vmul.f32 %v373, %v373
  %v1522 = vmul.f32 %v377, %v377
  %v1523 = vmul.f32 %v379, %v379
  %v1524 = vmul.f32 %v381, %v381
  %v1525 = vmul.f32 %v383, %v383
  %v1526 = vmul.f32 %v387, %v387
  %v1527 = vmul.f32 %v389, %v389
  %v1528 = vmul.f32 %v391, %v391
  %v1529 = vmul.f32 %v393, %v393
  %v1530 = vmul.f32 %v397, %v397
  %v1531 = vmul.f32 %v399, %v399
  %v1532 = vmul.f32 %v401, %v401
  %v1533 = vmul.f32 %v403, %v403
  %v1534 = vmul.f32 %v407, %v407
  %v1535 = vmul.f32 %v409, %v409
  %v1536 = vmul.f32 %v411, %v411
  %v1537 = vmul.f32 %v413, %v413
  %v1538 = vmul.f32 %v417, %v417
  %v1539 = vmul.f32 %v419, %v419
  %v1540 = vmul.f32 %v421, %v421
  %v1541 = vmul.f32 %v423, %v423
  %v1542 = vmul.f32 %v427, %v427
  %v1543 = vmul.f32 %v429, %v429
  %v1544 = vmul.f32 %v431, %v431
  %v1545 = vmul.f32 %v433, %v433
  %v1546 = vmul.f32 %v437, %v437
  %v1547 = vmul.f32 %v439, %v439
  %v1548 = vmul.f32 %v441, %v441
  %v1549 = vmul.f32 %v443, %v443
  %v1550 = vmul.f32 %v447, %v447
  %v1551 = vmul.f32 %v449, %v449
  %v1552 = vmul.f32 %v451, %v451
  %v1553 = vmul.f32 %v453, %v453
  %v1554 = vmul.f32 %v457, %v457
  %v1555 = vmul.f32 %v459, %v459
  %v1556 = vmul.f32 %v461, %v461
  %v1557 = vmul.f32 %v463, %v463
  %v1558 = vmul.f32 %v467, %v467
  %v1559 = vmul.f32 %v469, %v469
  %v1560 = vmul.f32 %v471, %v471
  %v1561 = vmul.f32 %v473, %v473
  %v1562 = vmul.f32 %v477, %v477
  %v1563 = vmul.f32 %v479, %v479
  %v1564 = vmul.f32 %v481, %v481
  %v1565 = vmul.f32 %v483, %v483
  %v1566 = vmul.f32 %v487, %v487
  %v1567 = vmul.f32 %v489, %v489
  %v1568 = vmul.f32 %v491, %v491
  %v1569 = vmul.f32 %v493, %v493
  %v1570 = vmul.f32 %v497, %v497
  %v1571 = vmul.f32 %v499, %v499
  %v1572 = vmul.f32 %v501, %v501
  %v1573 = vmul.f32 %v503, %v503
  %v1574 = vmul.f32 %v507, %v507
  %v1575 = vmul.f32 %v509, %v509
  %v1576 = vmul.f32 %v511, %v511
  %v1577 = vmul.f32 %v513, %v513
  %v1578 = vmul.f32 %v517, %v517
  %v1579 = vmul.f32 %v519, %v519
  %v1580 = vmul.f32 %v521, %v521
  %v1581 = vmul.f32 %v523, %v523
  %v1582 = vmul.f32 %v527, %v527
  %v1583 = vmul.f32 %v529, %v529
  %v1584 = vmul.f32 %v531, %v531
  %v1585 = vmul.f32 %v533, %v533
  %v1586 = vmul.f32 %v537, %v537
  %v1587 = vmul.f32 %v539, %v539
  %v1588 = vmul.f32 %v541, %v541
  %v1589 = vmul.f32 %v543, %v543
  %v1590 = vmul.f32 %v547, %v547
  %v1591 = vmul.f32 %v549, %v549
  %v1592 = vmul.f32 %v551, %v551
  %v1593 = vmul.f32 %v553, %v553
  %v1594 = vmul.f32 %v557, %v557
  %v1595 = vmul.f32 %v559, %v559
  %v1596 = vmul.f32 %v561, %v561
  %v1597 = vmul.f32 %v563, %v563
  %v1598 = vmul.f32 %v567, %v567
  %v1599 = vmul.f32 %v569, %v569
  %v1600 = vmul.f32 %v571, %v571
  %v1601 = vmul.f32 %v573, %v573
  %v1602 = vmul.f32 %v577, %v577
  %v1603 = vmul.f32 %v579, %v579
  %v1604 = vmul.f32 %v581, %v581
  %v1605 = vmul.f32 %v583, %v583
  %v1606 = vmul.f32 %v587, %v587
  %v1607 = vmul.f32 %v589, %v589
  %v1608 = vmul.f32 %v591, %v591
  %v1609 = vmul.f32 %v593, %v593
  %v1610 = vmul.f32 %v597, %v597
  %v1611 = vmul.f32 %v599, %v599
  %v1612 = vmul.f32 %v601, %v601
  %v1613 = vmul.f32 %v603, %v603
  %v1614 = vmul.f32 %v607, %v607
  %v1615 = vmul.f32 %v609, %v609
  %v1616 = vmul.f32 %v611, %v611
  %v1617 = vmul.f32 %v613, %v613
  %v1618 = vmul.f32 %v617, %v617
  %v1619 = vmul.f32 %v619, %v619
  %v1620 = vmul.f32 %v621, %v621
  %v1621 = vmul.f32 %v623, %v623
  %v1622 = vmul.f32 %v627, %v627
  %v1623 = vmul.f32 %v629, %v629
  %v1624 = vmul.f32 %v631, %v631
  %v1625 = vmul.f32 %v633, %v633
  %v1626 = vmul.f32 %v637, %v637
  %v1627 = vmul.f32 %v639, %v639
  %v1628 = vmul.f32 %v641, %v641
  %v1629 = vmul.f32 %v643, %v643
  %v1630 = vmul.f32 %v647, %v647
  %v1631 = vmul.f32 %v649, %v649
  %v1632 = vmul.f32 %v651, %v651
  %v1633 = vmul.f32 %v653, %v653
  %v1634 = vmul.f32 %v657, %v657
  %v1635 = vmul.f32 %v659, %v659
  %v1636 = vmul.f32 %v661, %v661
  %v1637 = vmul.f32 %v663, %v663
  %v1638 = vmul.f32 %v667, %v667
  %v1639 = vmul.f32 %v669, %v669
  %v1640 = vmul.f32 %v671, %v671
  %v1641 = vmul.f32 %v673, %v673
  %v1642 = vmul.f32 %v677, %v677
  %v1643 = vmul.f32 %v679, %v679
  %v1644 = vmul.f32 %v681, %v681
  %v1645 = vmul.f32 %v683, %v683
  %v1646 = vmul.f32 %v687, %v687
  %v1647 = vmul.f32 %v689, %v689
  %v1648 = vmul.f32 %v691, %v691
  %v1649 = vmul.f32 %v693, %v693
  %v1650 = vmul.f32 %v697, %v697
  %v1651 = vmul.f32 %v699, %v699
  %v1652 = vmul.f32 %v701, %v701
  %v1653 = vmul.f32 %v703, %v703
  %v1654 = vmul.f32 %v707, %v707
  %v1655 = vmul.f32 %v709, %v709
  %v1656 = vmul.f32 %v711, %v711
  %v1657 = vmul.f32 %v713, %v713
  %v1658 = vsel %vm739, %v1515, 0.0
  %v1659 = vadd.f32 %v1514, %v1658
  %1660 = vadd.xlane.f32.xlu0 %v1659
  %v1661 = vpop.xlane.xlu0 %1660
  %v1662 = vsel %vm739, %v1517, 0.0
  %v1663 = vadd.f32 %v1516, %v1662
  %1664 = vadd.xlane.f32.xlu0 %v1663
  %v1665 = vpop.xlane.xlu0 %1664
  %v1666 = vsel %vm739, %v1519, 0.0
  %v1667 = vadd.f32 %v1518, %v1666
  %1668 = vadd.xlane.f32.xlu0 %v1667
  %v1669 = vpop.xlane.xlu0 %1668
  %v1670 = vsel %vm739, %v1521, 0.0
  %v1671 = vadd.f32 %v1520, %v1670
  %1672 = vadd.xlane.f32.xlu0 %v1671
  %v1673 = vpop.xlane.xlu0 %1672
  %v1674 = vsel %vm739, %v1523, 0.0
  %v1675 = vadd.f32 %v1522, %v1674
  %1676 = vadd.xlane.f32.xlu0 %v1675
  %v1677 = vpop.xlane.xlu0 %1676
  %v1678 = vsel %vm739, %v1525, 0.0
  %v1679 = vadd.f32 %v1524, %v1678
  %1680 = vadd.xlane.f32.xlu0 %v1679
  %v1681 = vpop.xlane.xlu0 %1680
  %v1682 = vsel %vm739, %v1527, 0.0
  %v1683 = vadd.f32 %v1526, %v1682
  %1684 = vadd.xlane.f32.xlu0 %v1683
  %v1685 = vpop.xlane.xlu0 %1684
  %v1686 = vsel %vm739, %v1529, 0.0
  %v1687 = vadd.f32 %v1528, %v1686
  %1688 = vadd.xlane.f32.xlu0 %v1687
  %v1689 = vpop.xlane.xlu0 %1688
  %v1690 = vsel %vm739, %v1531, 0.0
  %v1691 = vadd.f32 %v1530, %v1690
  %1692 = vadd.xlane.f32.xlu0 %v1691
  %v1693 = vpop.xlane.xlu0 %1692
  %v1694 = vsel %vm739, %v1533, 0.0
  %v1695 = vadd.f32 %v1532, %v1694
  %1696 = vadd.xlane.f32.xlu0 %v1695
  %v1697 = vpop.xlane.xlu0 %1696
  %v1698 = vsel %vm739, %v1535, 0.0
  %v1699 = vadd.f32 %v1534, %v1698
  %1700 = vadd.xlane.f32.xlu0 %v1699
  %v1701 = vpop.xlane.xlu0 %1700
  %v1702 = vsel %vm739, %v1537, 0.0
  %v1703 = vadd.f32 %v1536, %v1702
  %1704 = vadd.xlane.f32.xlu0 %v1703
  %v1705 = vpop.xlane.xlu0 %1704
  %v1706 = vsel %vm739, %v1539, 0.0
  %v1707 = vadd.f32 %v1538, %v1706
  %1708 = vadd.xlane.f32.xlu0 %v1707
  %v1709 = vpop.xlane.xlu0 %1708
  %v1710 = vsel %vm739, %v1541, 0.0
  %v1711 = vadd.f32 %v1540, %v1710
  %1712 = vadd.xlane.f32.xlu0 %v1711
  %v1713 = vpop.xlane.xlu0 %1712
  %v1714 = vsel %vm739, %v1543, 0.0
  %v1715 = vadd.f32 %v1542, %v1714
  %1716 = vadd.xlane.f32.xlu0 %v1715
  %v1717 = vpop.xlane.xlu0 %1716
  %v1718 = vsel %vm739, %v1545, 0.0
  %v1719 = vadd.f32 %v1544, %v1718
  %1720 = vadd.xlane.f32.xlu0 %v1719
  %v1721 = vpop.xlane.xlu0 %1720
  %v1722 = vsel %vm739, %v1547, 0.0
  %v1723 = vadd.f32 %v1546, %v1722
  %1724 = vadd.xlane.f32.xlu0 %v1723
  %v1725 = vpop.xlane.xlu0 %1724
  %v1726 = vsel %vm739, %v1549, 0.0
  %v1727 = vadd.f32 %v1548, %v1726
  %1728 = vadd.xlane.f32.xlu0 %v1727
  %v1729 = vpop.xlane.xlu0 %1728
  %v1730 = vsel %vm739, %v1551, 0.0
  %v1731 = vadd.f32 %v1550, %v1730
  %1732 = vadd.xlane.f32.xlu0 %v1731
  %v1733 = vpop.xlane.xlu0 %1732
  %v1734 = vsel %vm739, %v1553, 0.0
  %v1735 = vadd.f32 %v1552, %v1734
  %1736 = vadd.xlane.f32.xlu0 %v1735
  %v1737 = vpop.xlane.xlu0 %1736
  %v1738 = vsel %vm739, %v1555, 0.0
  %v1739 = vadd.f32 %v1554, %v1738
  %1740 = vadd.xlane.f32.xlu0 %v1739
  %v1741 = vpop.xlane.xlu0 %1740
  %v1742 = vsel %vm739, %v1557, 0.0
  %v1743 = vadd.f32 %v1556, %v1742
  %1744 = vadd.xlane.f32.xlu0 %v1743
  %v1745 = vpop.xlane.xlu0 %1744
  %v1746 = vsel %vm739, %v1559, 0.0
  %v1747 = vadd.f32 %v1558, %v1746
  %1748 = vadd.xlane.f32.xlu0 %v1747
  %v1749 = vpop.xlane.xlu0 %1748
  %v1750 = vsel %vm739, %v1561, 0.0
  %v1751 = vadd.f32 %v1560, %v1750
  %1752 = vadd.xlane.f32.xlu0 %v1751
  %v1753 = vpop.xlane.xlu0 %1752
  %v1754 = vsel %vm739, %v1563, 0.0
  %v1755 = vadd.f32 %v1562, %v1754
  %1756 = vadd.xlane.f32.xlu0 %v1755
  %v1757 = vpop.xlane.xlu0 %1756
  %v1758 = vsel %vm739, %v1565, 0.0
  %v1759 = vadd.f32 %v1564, %v1758
  %1760 = vadd.xlane.f32.xlu0 %v1759
  %v1761 = vpop.xlane.xlu0 %1760
  %v1762 = vsel %vm739, %v1567, 0.0
  %v1763 = vadd.f32 %v1566, %v1762
  %1764 = vadd.xlane.f32.xlu0 %v1763
  %v1765 = vpop.xlane.xlu0 %1764
  %v1766 = vsel %vm739, %v1569, 0.0
  %v1767 = vadd.f32 %v1568, %v1766
  %1768 = vadd.xlane.f32.xlu0 %v1767
  %v1769 = vpop.xlane.xlu0 %1768
  %v1770 = vsel %vm739, %v1571, 0.0
  %v1771 = vadd.f32 %v1570, %v1770
  %1772 = vadd.xlane.f32.xlu0 %v1771
  %v1773 = vpop.xlane.xlu0 %1772
  %v1774 = vsel %vm739, %v1573, 0.0
  %v1775 = vadd.f32 %v1572, %v1774
  %1776 = vadd.xlane.f32.xlu0 %v1775
  %v1777 = vpop.xlane.xlu0 %1776
  %v1778 = vsel %vm739, %v1575, 0.0
  %v1779 = vadd.f32 %v1574, %v1778
  %1780 = vadd.xlane.f32.xlu0 %v1779
  %v1781 = vpop.xlane.xlu0 %1780
  %v1782 = vsel %vm739, %v1577, 0.0
  %v1783 = vadd.f32 %v1576, %v1782
  %1784 = vadd.xlane.f32.xlu0 %v1783
  %v1785 = vpop.xlane.xlu0 %1784
  %v1786 = vsel %vm739, %v1579, 0.0
  %v1787 = vadd.f32 %v1578, %v1786
  %1788 = vadd.xlane.f32.xlu0 %v1787
  %v1789 = vpop.xlane.xlu0 %1788
  %v1790 = vsel %vm739, %v1581, 0.0
  %v1791 = vadd.f32 %v1580, %v1790
  %1792 = vadd.xlane.f32.xlu0 %v1791
  %v1793 = vpop.xlane.xlu0 %1792
  %v1794 = vsel %vm739, %v1583, 0.0
  %v1795 = vadd.f32 %v1582, %v1794
  %1796 = vadd.xlane.f32.xlu0 %v1795
  %v1797 = vpop.xlane.xlu0 %1796
  %v1798 = vsel %vm739, %v1585, 0.0
  %v1799 = vadd.f32 %v1584, %v1798
  %1800 = vadd.xlane.f32.xlu0 %v1799
  %v1801 = vpop.xlane.xlu0 %1800
  %v1802 = vsel %vm739, %v1587, 0.0
  %v1803 = vadd.f32 %v1586, %v1802
  %1804 = vadd.xlane.f32.xlu0 %v1803
  %v1805 = vpop.xlane.xlu0 %1804
  %v1806 = vsel %vm739, %v1589, 0.0
  %v1807 = vadd.f32 %v1588, %v1806
  %1808 = vadd.xlane.f32.xlu0 %v1807
  %v1809 = vpop.xlane.xlu0 %1808
  %v1810 = vsel %vm739, %v1591, 0.0
  %v1811 = vadd.f32 %v1590, %v1810
  %1812 = vadd.xlane.f32.xlu0 %v1811
  %v1813 = vpop.xlane.xlu0 %1812
  %v1814 = vsel %vm739, %v1593, 0.0
  %v1815 = vadd.f32 %v1592, %v1814
  %1816 = vadd.xlane.f32.xlu0 %v1815
  %v1817 = vpop.xlane.xlu0 %1816
  %v1818 = vsel %vm739, %v1595, 0.0
  %v1819 = vadd.f32 %v1594, %v1818
  %1820 = vadd.xlane.f32.xlu0 %v1819
  %v1821 = vpop.xlane.xlu0 %1820
  %v1822 = vsel %vm739, %v1597, 0.0
  %v1823 = vadd.f32 %v1596, %v1822
  %1824 = vadd.xlane.f32.xlu0 %v1823
  %v1825 = vpop.xlane.xlu0 %1824
  %v1826 = vsel %vm739, %v1599, 0.0
  %v1827 = vadd.f32 %v1598, %v1826
  %1828 = vadd.xlane.f32.xlu0 %v1827
  %v1829 = vpop.xlane.xlu0 %1828
  %v1830 = vsel %vm739, %v1601, 0.0
  %v1831 = vadd.f32 %v1600, %v1830
  %1832 = vadd.xlane.f32.xlu0 %v1831
  %v1833 = vpop.xlane.xlu0 %1832
  %v1834 = vsel %vm739, %v1603, 0.0
  %v1835 = vadd.f32 %v1602, %v1834
  %1836 = vadd.xlane.f32.xlu0 %v1835
  %v1837 = vpop.xlane.xlu0 %1836
  %v1838 = vsel %vm739, %v1605, 0.0
  %v1839 = vadd.f32 %v1604, %v1838
  %1840 = vadd.xlane.f32.xlu0 %v1839
  %v1841 = vpop.xlane.xlu0 %1840
  %v1842 = vsel %vm739, %v1607, 0.0
  %v1843 = vadd.f32 %v1606, %v1842
  %1844 = vadd.xlane.f32.xlu0 %v1843
  %v1845 = vpop.xlane.xlu0 %1844
  %v1846 = vsel %vm739, %v1609, 0.0
  %v1847 = vadd.f32 %v1608, %v1846
  %1848 = vadd.xlane.f32.xlu0 %v1847
  %v1849 = vpop.xlane.xlu0 %1848
  %v1850 = vsel %vm739, %v1611, 0.0
  %v1851 = vadd.f32 %v1610, %v1850
  %1852 = vadd.xlane.f32.xlu0 %v1851
  %v1853 = vpop.xlane.xlu0 %1852
  %v1854 = vsel %vm739, %v1613, 0.0
  %v1855 = vadd.f32 %v1612, %v1854
  %1856 = vadd.xlane.f32.xlu0 %v1855
  %v1857 = vpop.xlane.xlu0 %1856
  %v1858 = vsel %vm739, %v1615, 0.0
  %v1859 = vadd.f32 %v1614, %v1858
  %1860 = vadd.xlane.f32.xlu0 %v1859
  %v1861 = vpop.xlane.xlu0 %1860
  %v1862 = vsel %vm739, %v1617, 0.0
  %v1863 = vadd.f32 %v1616, %v1862
  %1864 = vadd.xlane.f32.xlu0 %v1863
  %v1865 = vpop.xlane.xlu0 %1864
  %v1866 = vsel %vm739, %v1619, 0.0
  %v1867 = vadd.f32 %v1618, %v1866
  %1868 = vadd.xlane.f32.xlu0 %v1867
  %v1869 = vpop.xlane.xlu0 %1868
  %v1870 = vsel %vm739, %v1621, 0.0
  %v1871 = vadd.f32 %v1620, %v1870
  %1872 = vadd.xlane.f32.xlu0 %v1871
  %v1873 = vpop.xlane.xlu0 %1872
  %v1874 = vsel %vm739, %v1623, 0.0
  %v1875 = vadd.f32 %v1622, %v1874
  %1876 = vadd.xlane.f32.xlu0 %v1875
  %v1877 = vpop.xlane.xlu0 %1876
  %v1878 = vsel %vm739, %v1625, 0.0
  %v1879 = vadd.f32 %v1624, %v1878
  %1880 = vadd.xlane.f32.xlu0 %v1879
  %v1881 = vpop.xlane.xlu0 %1880
  %v1882 = vsel %vm739, %v1627, 0.0
  %v1883 = vadd.f32 %v1626, %v1882
  %1884 = vadd.xlane.f32.xlu0 %v1883
  %v1885 = vpop.xlane.xlu0 %1884
  %v1886 = vsel %vm739, %v1629, 0.0
  %v1887 = vadd.f32 %v1628, %v1886
  %1888 = vadd.xlane.f32.xlu0 %v1887
  %v1889 = vpop.xlane.xlu0 %1888
  %v1890 = vsel %vm739, %v1631, 0.0
  %v1891 = vadd.f32 %v1630, %v1890
  %1892 = vadd.xlane.f32.xlu0 %v1891
  %v1893 = vpop.xlane.xlu0 %1892
  %v1894 = vsel %vm739, %v1633, 0.0
  %v1895 = vadd.f32 %v1632, %v1894
  %1896 = vadd.xlane.f32.xlu0 %v1895
  %v1897 = vpop.xlane.xlu0 %1896
  %v1898 = vsel %vm739, %v1635, 0.0
  %v1899 = vadd.f32 %v1634, %v1898
  %1900 = vadd.xlane.f32.xlu0 %v1899
  %v1901 = vpop.xlane.xlu0 %1900
  %v1902 = vsel %vm739, %v1637, 0.0
  %v1903 = vadd.f32 %v1636, %v1902
  %1904 = vadd.xlane.f32.xlu0 %v1903
  %v1905 = vpop.xlane.xlu0 %1904
  %v1906 = vsel %vm739, %v1639, 0.0
  %v1907 = vadd.f32 %v1638, %v1906
  %1908 = vadd.xlane.f32.xlu0 %v1907
  %v1909 = vpop.xlane.xlu0 %1908
  %v1910 = vsel %vm739, %v1641, 0.0
  %v1911 = vadd.f32 %v1640, %v1910
  %1912 = vadd.xlane.f32.xlu0 %v1911
  %v1913 = vpop.xlane.xlu0 %1912
  %v1914 = vsel %vm739, %v1643, 0.0
  %v1915 = vadd.f32 %v1642, %v1914
  %1916 = vadd.xlane.f32.xlu0 %v1915
  %v1917 = vpop.xlane.xlu0 %1916
  %v1918 = vsel %vm739, %v1645, 0.0
  %v1919 = vadd.f32 %v1644, %v1918
  %1920 = vadd.xlane.f32.xlu0 %v1919
  %v1921 = vpop.xlane.xlu0 %1920
  %v1922 = vsel %vm739, %v1647, 0.0
  %v1923 = vadd.f32 %v1646, %v1922
  %1924 = vadd.xlane.f32.xlu0 %v1923
  %v1925 = vpop.xlane.xlu0 %1924
  %v1926 = vsel %vm739, %v1649, 0.0
  %v1927 = vadd.f32 %v1648, %v1926
  %1928 = vadd.xlane.f32.xlu0 %v1927
  %v1929 = vpop.xlane.xlu0 %1928
  %v1930 = vsel %vm739, %v1651, 0.0
  %v1931 = vadd.f32 %v1650, %v1930
  %1932 = vadd.xlane.f32.xlu0 %v1931
  %v1933 = vpop.xlane.xlu0 %1932
  %v1934 = vsel %vm739, %v1653, 0.0
  %v1935 = vadd.f32 %v1652, %v1934
  %1936 = vadd.xlane.f32.xlu0 %v1935
  %v1937 = vpop.xlane.xlu0 %1936
  %v1938 = vsel %vm739, %v1655, 0.0
  %v1939 = vadd.f32 %v1654, %v1938
  %1940 = vadd.xlane.f32.xlu0 %v1939
  %v1941 = vpop.xlane.xlu0 %1940
  %v1942 = vsel %vm739, %v1657, 0.0
  %v1943 = vadd.f32 %v1656, %v1942
  %1944 = vadd.xlane.f32.xlu0 %v1943
  %v1945 = vpop.xlane.xlu0 %1944
  %v1946 = vmul.f32 %v1661, 0.0051020407
  %v1947 = vmul.f32 %v1665, 0.0051020407
  %v1948 = vmul.f32 %v1669, 0.0051020407
  %v1949 = vmul.f32 %v1673, 0.0051020407
  %v1950 = vmul.f32 %v1677, 0.0051020407
  %v1951 = vmul.f32 %v1681, 0.0051020407
  %v1952 = vmul.f32 %v1685, 0.0051020407
  %v1953 = vmul.f32 %v1689, 0.0051020407
  %v1954 = vmul.f32 %v1693, 0.0051020407
  %v1955 = vmul.f32 %v1697, 0.0051020407
  %v1956 = vmul.f32 %v1701, 0.0051020407
  %v1957 = vmul.f32 %v1705, 0.0051020407
  %v1958 = vmul.f32 %v1709, 0.0051020407
  %v1959 = vmul.f32 %v1713, 0.0051020407
  %v1960 = vmul.f32 %v1717, 0.0051020407
  %v1961 = vmul.f32 %v1721, 0.0051020407
  %v1962 = vmul.f32 %v1725, 0.0051020407
  %v1963 = vmul.f32 %v1729, 0.0051020407
  %v1964 = vmul.f32 %v1733, 0.0051020407
  %v1965 = vmul.f32 %v1737, 0.0051020407
  %v1966 = vmul.f32 %v1741, 0.0051020407
  %v1967 = vmul.f32 %v1745, 0.0051020407
  %v1968 = vmul.f32 %v1749, 0.0051020407
  %v1969 = vmul.f32 %v1753, 0.0051020407
  %v1970 = vmul.f32 %v1757, 0.0051020407
  %v1971 = vmul.f32 %v1761, 0.0051020407
  %v1972 = vmul.f32 %v1765, 0.0051020407
  %v1973 = vmul.f32 %v1769, 0.0051020407
  %v1974 = vmul.f32 %v1773, 0.0051020407
  %v1975 = vmul.f32 %v1777, 0.0051020407
  %v1976 = vmul.f32 %v1781, 0.0051020407
  %v1977 = vmul.f32 %v1785, 0.0051020407
  %v1978 = vmul.f32 %v1789, 0.0051020407
  %v1979 = vmul.f32 %v1793, 0.0051020407
  %v1980 = vmul.f32 %v1797, 0.0051020407
  %v1981 = vmul.f32 %v1801, 0.0051020407
  %v1982 = vmul.f32 %v1805, 0.0051020407
  %v1983 = vmul.f32 %v1809, 0.0051020407
  %v1984 = vmul.f32 %v1813, 0.0051020407
  %v1985 = vmul.f32 %v1817, 0.0051020407
  %v1986 = vmul.f32 %v1821, 0.0051020407
  %v1987 = vmul.f32 %v1825, 0.0051020407
  %v1988 = vmul.f32 %v1829, 0.0051020407
  %v1989 = vmul.f32 %v1833, 0.0051020407
  %v1990 = vmul.f32 %v1837, 0.0051020407
  %v1991 = vmul.f32 %v1841, 0.0051020407
  %v1992 = vmul.f32 %v1845, 0.0051020407
  %v1993 = vmul.f32 %v1849, 0.0051020407
  %v1994 = vmul.f32 %v1853, 0.0051020407
  %v1995 = vmul.f32 %v1857, 0.0051020407
  %v1996 = vmul.f32 %v1861, 0.0051020407
  %v1997 = vmul.f32 %v1865, 0.0051020407
  %v1998 = vmul.f32 %v1869, 0.0051020407
  %v1999 = vmul.f32 %v1873, 0.0051020407
  %v2000 = vmul.f32 %v1877, 0.0051020407
  %v2001 = vmul.f32 %v1881, 0.0051020407
  %v2002 = vmul.f32 %v1885, 0.0051020407
  %v2003 = vmul.f32 %v1889, 0.0051020407
  %v2004 = vmul.f32 %v1893, 0.0051020407
  %v2005 = vmul.f32 %v1897, 0.0051020407
  %v2006 = vmul.f32 %v1901, 0.0051020407
  %v2007 = vmul.f32 %v1905, 0.0051020407
  %v2008 = vmul.f32 %v1909, 0.0051020407
  %v2009 = vmul.f32 %v1913, 0.0051020407
  %v2010 = vmul.f32 %v1917, 0.0051020407
  %v2011 = vmul.f32 %v1921, 0.0051020407
  %v2012 = vmul.f32 %v1925, 0.0051020407
  %v2013 = vmul.f32 %v1929, 0.0051020407
  %v2014 = vmul.f32 %v1933, 0.0051020407
  %v2015 = vmul.f32 %v1937, 0.0051020407
  %v2016 = vmul.f32 %v1941, 0.0051020407
  %v2017 = vmul.f32 %v1945, 0.0051020407
  %v2018 = vmul.f32 %v1156, %v1156
  %v2019 = vmul.f32 %v1161, %v1161
  %v2020 = vmul.f32 %v1166, %v1166
  %v2021 = vmul.f32 %v1171, %v1171
  %v2022 = vmul.f32 %v1176, %v1176
  %v2023 = vmul.f32 %v1181, %v1181
  %v2024 = vmul.f32 %v1186, %v1186
  %v2025 = vmul.f32 %v1191, %v1191
  %v2026 = vmul.f32 %v1196, %v1196
  %v2027 = vmul.f32 %v1201, %v1201
  %v2028 = vmul.f32 %v1206, %v1206
  %v2029 = vmul.f32 %v1211, %v1211
  %v2030 = vmul.f32 %v1216, %v1216
  %v2031 = vmul.f32 %v1221, %v1221
  %v2032 = vmul.f32 %v1226, %v1226
  %v2033 = vmul.f32 %v1231, %v1231
  %v2034 = vmul.f32 %v1236, %v1236
  %v2035 = vmul.f32 %v1241, %v1241
  %v2036 = vmul.f32 %v1246, %v1246
  %v2037 = vmul.f32 %v1251, %v1251
  %v2038 = vmul.f32 %v1256, %v1256
  %v2039 = vmul.f32 %v1261, %v1261
  %v2040 = vmul.f32 %v1266, %v1266
  %v2041 = vmul.f32 %v1271, %v1271
  %v2042 = vmul.f32 %v1276, %v1276
  %v2043 = vmul.f32 %v1281, %v1281
  %v2044 = vmul.f32 %v1286, %v1286
  %v2045 = vmul.f32 %v1291, %v1291
  %v2046 = vmul.f32 %v1296, %v1296
  %v2047 = vmul.f32 %v1301, %v1301
  %v2048 = vmul.f32 %v1306, %v1306
  %v2049 = vmul.f32 %v1311, %v1311
  %v2050 = vmul.f32 %v1316, %v1316
  %v2051 = vmul.f32 %v1321, %v1321
  %v2052 = vmul.f32 %v1326, %v1326
  %v2053 = vmul.f32 %v1331, %v1331
  %v2054 = vmul.f32 %v1336, %v1336
  %v2055 = vmul.f32 %v1341, %v1341
  %v2056 = vmul.f32 %v1346, %v1346
  %v2057 = vmul.f32 %v1351, %v1351
  %v2058 = vmul.f32 %v1356, %v1356
  %v2059 = vmul.f32 %v1361, %v1361
  %v2060 = vmul.f32 %v1366, %v1366
  %v2061 = vmul.f32 %v1371, %v1371
  %v2062 = vmul.f32 %v1376, %v1376
  %v2063 = vmul.f32 %v1381, %v1381
  %v2064 = vmul.f32 %v1386, %v1386
  %v2065 = vmul.f32 %v1391, %v1391
  %v2066 = vmul.f32 %v1396, %v1396
  %v2067 = vmul.f32 %v1401, %v1401
  %v2068 = vmul.f32 %v1406, %v1406
  %v2069 = vmul.f32 %v1411, %v1411
  %v2070 = vmul.f32 %v1416, %v1416
  %v2071 = vmul.f32 %v1421, %v1421
  %v2072 = vmul.f32 %v1426, %v1426
  %v2073 = vmul.f32 %v1431, %v1431
  %v2074 = vmul.f32 %v1436, %v1436
  %v2075 = vmul.f32 %v1441, %v1441
  %v2076 = vmul.f32 %v1446, %v1446
  %v2077 = vmul.f32 %v1451, %v1451
  %v2078 = vmul.f32 %v1456, %v1456
  %v2079 = vmul.f32 %v1461, %v1461
  %v2080 = vmul.f32 %v1466, %v1466
  %v2081 = vmul.f32 %v1471, %v1471
  %v2082 = vmul.f32 %v1476, %v1476
  %v2083 = vmul.f32 %v1481, %v1481
  %v2084 = vmul.f32 %v1486, %v1486
  %v2085 = vmul.f32 %v1491, %v1491
  %v2086 = vmul.f32 %v1496, %v1496
  %v2087 = vmul.f32 %v1501, %v1501
  %v2088 = vmul.f32 %v1506, %v1506
  %v2089 = vmul.f32 %v1511, %v1511
  %v2090 = vsub.f32 %v1946, %v2018
  %v2091 = vsub.f32 %v1947, %v2019
  %v2092 = vsub.f32 %v1948, %v2020
  %v2093 = vsub.f32 %v1949, %v2021
  %v2094 = vsub.f32 %v1950, %v2022
  %v2095 = vsub.f32 %v1951, %v2023
  %v2096 = vsub.f32 %v1952, %v2024
  %v2097 = vsub.f32 %v1953, %v2025
  %v2098 = vsub.f32 %v1954, %v2026
  %v2099 = vsub.f32 %v1955, %v2027
  %v2100 = vsub.f32 %v1956, %v2028
  %v2101 = vsub.f32 %v1957, %v2029
  %v2102 = vsub.f32 %v1958, %v2030
  %v2103 = vsub.f32 %v1959, %v2031
  %v2104 = vsub.f32 %v1960, %v2032
  %v2105 = vsub.f32 %v1961, %v2033
  %v2106 = vsub.f32 %v1962, %v2034
  %v2107 = vsub.f32 %v1963, %v2035
  %v2108 = vsub.f32 %v1964, %v2036
  %v2109 = vsub.f32 %v1965, %v2037
  %v2110 = vsub.f32 %v1966, %v2038
  %v2111 = vsub.f32 %v1967, %v2039
  %v2112 = vsub.f32 %v1968, %v2040
  %v2113 = vsub.f32 %v1969, %v2041
  %v2114 = vsub.f32 %v1970, %v2042
  %v2115 = vsub.f32 %v1971, %v2043
  %v2116 = vsub.f32 %v1972, %v2044
  %v2117 = vsub.f32 %v1973, %v2045
  %v2118 = vsub.f32 %v1974, %v2046
  %v2119 = vsub.f32 %v1975, %v2047
  %v2120 = vsub.f32 %v1976, %v2048
  %v2121 = vsub.f32 %v1977, %v2049
  %v2122 = vsub.f32 %v1978, %v2050
  %v2123 = vsub.f32 %v1979, %v2051
  %v2124 = vsub.f32 %v1980, %v2052
  %v2125 = vsub.f32 %v1981, %v2053
  %v2126 = vsub.f32 %v1982, %v2054
  %v2127 = vsub.f32 %v1983, %v2055
  %v2128 = vsub.f32 %v1984, %v2056
  %v2129 = vsub.f32 %v1985, %v2057
  %v2130 = vsub.f32 %v1986, %v2058
  %v2131 = vsub.f32 %v1987, %v2059
  %v2132 = vsub.f32 %v1988, %v2060
  %v2133 = vsub.f32 %v1989, %v2061
  %v2134 = vsub.f32 %v1990, %v2062
  %v2135 = vsub.f32 %v1991, %v2063
  %v2136 = vsub.f32 %v1992, %v2064
  %v2137 = vsub.f32 %v1993, %v2065
  %v2138 = vsub.f32 %v1994, %v2066
  %v2139 = vsub.f32 %v1995, %v2067
  %v2140 = vsub.f32 %v1996, %v2068
  %v2141 = vsub.f32 %v1997, %v2069
  %v2142 = vsub.f32 %v1998, %v2070
  %v2143 = vsub.f32 %v1999, %v2071
  %v2144 = vsub.f32 %v2000, %v2072
  %v2145 = vsub.f32 %v2001, %v2073
  %v2146 = vsub.f32 %v2002, %v2074
  %v2147 = vsub.f32 %v2003, %v2075
  %v2148 = vsub.f32 %v2004, %v2076
  %v2149 = vsub.f32 %v2005, %v2077
  %v2150 = vsub.f32 %v2006, %v2078
  %v2151 = vsub.f32 %v2007, %v2079
  %v2152 = vsub.f32 %v2008, %v2080
  %v2153 = vsub.f32 %v2009, %v2081
  %v2154 = vsub.f32 %v2010, %v2082
  %v2155 = vsub.f32 %v2011, %v2083
  %v2156 = vsub.f32 %v2012, %v2084
  %v2157 = vsub.f32 %v2013, %v2085
  %v2158 = vsub.f32 %v2014, %v2086
  %v2159 = vsub.f32 %v2015, %v2087
  %v2160 = vsub.f32 %v2016, %v2088
  %v2161 = vsub.f32 %v2017, %v2089
  %v2162 = vadd.f32 %v2090, 1e-05
  %v2163 = vadd.f32 %v2091, 1e-05
  %v2164 = vadd.f32 %v2092, 1e-05
  %v2165 = vadd.f32 %v2093, 1e-05
  %v2166 = vadd.f32 %v2094, 1e-05
  %v2167 = vadd.f32 %v2095, 1e-05
  %v2168 = vadd.f32 %v2096, 1e-05
  %v2169 = vadd.f32 %v2097, 1e-05
  %v2170 = vadd.f32 %v2098, 1e-05
  %v2171 = vadd.f32 %v2099, 1e-05
  %v2172 = vadd.f32 %v2100, 1e-05
  %v2173 = vadd.f32 %v2101, 1e-05
  %v2174 = vadd.f32 %v2102, 1e-05
  %v2175 = vadd.f32 %v2103, 1e-05
  %v2176 = vadd.f32 %v2104, 1e-05
  %v2177 = vadd.f32 %v2105, 1e-05
  %v2178 = vadd.f32 %v2106, 1e-05
  %v2179 = vadd.f32 %v2107, 1e-05
  %v2180 = vadd.f32 %v2108, 1e-05
  %v2181 = vadd.f32 %v2109, 1e-05
  %v2182 = vadd.f32 %v2110, 1e-05
  %v2183 = vadd.f32 %v2111, 1e-05
  %v2184 = vadd.f32 %v2112, 1e-05
  %v2185 = vadd.f32 %v2113, 1e-05
  %v2186 = vadd.f32 %v2114, 1e-05
  %v2187 = vadd.f32 %v2115, 1e-05
  %v2188 = vadd.f32 %v2116, 1e-05
  %v2189 = vadd.f32 %v2117, 1e-05
  %v2190 = vadd.f32 %v2118, 1e-05
  %v2191 = vadd.f32 %v2119, 1e-05
  %v2192 = vadd.f32 %v2120, 1e-05
  %v2193 = vadd.f32 %v2121, 1e-05
  %v2194 = vadd.f32 %v2122, 1e-05
  %v2195 = vadd.f32 %v2123, 1e-05
  %v2196 = vadd.f32 %v2124, 1e-05
  %v2197 = vadd.f32 %v2125, 1e-05
  %v2198 = vadd.f32 %v2126, 1e-05
  %v2199 = vadd.f32 %v2127, 1e-05
  %v2200 = vadd.f32 %v2128, 1e-05
  %v2201 = vadd.f32 %v2129, 1e-05
  %v2202 = vadd.f32 %v2130, 1e-05
  %v2203 = vadd.f32 %v2131, 1e-05
  %v2204 = vadd.f32 %v2132, 1e-05
  %v2205 = vadd.f32 %v2133, 1e-05
  %v2206 = vadd.f32 %v2134, 1e-05
  %v2207 = vadd.f32 %v2135, 1e-05
  %v2208 = vadd.f32 %v2136, 1e-05
  %v2209 = vadd.f32 %v2137, 1e-05
  %v2210 = vadd.f32 %v2138, 1e-05
  %v2211 = vadd.f32 %v2139, 1e-05
  %v2212 = vadd.f32 %v2140, 1e-05
  %v2213 = vadd.f32 %v2141, 1e-05
  %v2214 = vadd.f32 %v2142, 1e-05
  %v2215 = vadd.f32 %v2143, 1e-05
  %v2216 = vadd.f32 %v2144, 1e-05
  %v2217 = vadd.f32 %v2145, 1e-05
  %v2218 = vadd.f32 %v2146, 1e-05
  %v2219 = vadd.f32 %v2147, 1e-05
  %v2220 = vadd.f32 %v2148, 1e-05
  %v2221 = vadd.f32 %v2149, 1e-05
  %v2222 = vadd.f32 %v2150, 1e-05
  %v2223 = vadd.f32 %v2151, 1e-05
  %v2224 = vadd.f32 %v2152, 1e-05
  %v2225 = vadd.f32 %v2153, 1e-05
  %v2226 = vadd.f32 %v2154, 1e-05
  %v2227 = vadd.f32 %v2155, 1e-05
  %v2228 = vadd.f32 %v2156, 1e-05
  %v2229 = vadd.f32 %v2157, 1e-05
  %v2230 = vadd.f32 %v2158, 1e-05
  %v2231 = vadd.f32 %v2159, 1e-05
  %v2232 = vadd.f32 %v2160, 1e-05
  %v2233 = vadd.f32 %v2161, 1e-05
  %v2234 = vrsqrt.pop %v2162
  %v2235 = vrsqrt.pop %v2163
  %v2236 = vrsqrt.pop %v2164
  %v2237 = vrsqrt.pop %v2165
  %v2238 = vrsqrt.pop %v2166
  %v2239 = vrsqrt.pop %v2167
  %v2240 = vrsqrt.pop %v2168
  %v2241 = vrsqrt.pop %v2169
  %v2242 = vrsqrt.pop %v2170
  %v2243 = vrsqrt.pop %v2171
  %v2244 = vrsqrt.pop %v2172
  %v2245 = vrsqrt.pop %v2173
  %v2246 = vrsqrt.pop %v2174
  %v2247 = vrsqrt.pop %v2175
  %v2248 = vrsqrt.pop %v2176
  %v2249 = vrsqrt.pop %v2177
  %v2250 = vrsqrt.pop %v2178
  %v2251 = vrsqrt.pop %v2179
  %v2252 = vrsqrt.pop %v2180
  %v2253 = vrsqrt.pop %v2181
  %v2254 = vrsqrt.pop %v2182
  %v2255 = vrsqrt.pop %v2183
  %v2256 = vrsqrt.pop %v2184
  %v2257 = vrsqrt.pop %v2185
  %v2258 = vrsqrt.pop %v2186
  %v2259 = vrsqrt.pop %v2187
  %v2260 = vrsqrt.pop %v2188
  %v2261 = vrsqrt.pop %v2189
  %v2262 = vrsqrt.pop %v2190
  %v2263 = vrsqrt.pop %v2191
  %v2264 = vrsqrt.pop %v2192
  %v2265 = vrsqrt.pop %v2193
  %v2266 = vrsqrt.pop %v2194
  %v2267 = vrsqrt.pop %v2195
  %v2268 = vrsqrt.pop %v2196
  %v2269 = vrsqrt.pop %v2197
  %v2270 = vrsqrt.pop %v2198
  %v2271 = vrsqrt.pop %v2199
  %v2272 = vrsqrt.pop %v2200
  %v2273 = vrsqrt.pop %v2201
  %v2274 = vrsqrt.pop %v2202
  %v2275 = vrsqrt.pop %v2203
  %v2276 = vrsqrt.pop %v2204
  %v2277 = vrsqrt.pop %v2205
  %v2278 = vrsqrt.pop %v2206
  %v2279 = vrsqrt.pop %v2207
  %v2280 = vrsqrt.pop %v2208
  %v2281 = vrsqrt.pop %v2209
  %v2282 = vrsqrt.pop %v2210
  %v2283 = vrsqrt.pop %v2211
  %v2284 = vrsqrt.pop %v2212
  %v2285 = vrsqrt.pop %v2213
  %v2286 = vrsqrt.pop %v2214
  %v2287 = vrsqrt.pop %v2215
  %v2288 = vrsqrt.pop %v2216
  %v2289 = vrsqrt.pop %v2217
  %v2290 = vrsqrt.pop %v2218
  %v2291 = vrsqrt.pop %v2219
  %v2292 = vrsqrt.pop %v2220
  %v2293 = vrsqrt.pop %v2221
  %v2294 = vrsqrt.pop %v2222
  %v2295 = vrsqrt.pop %v2223
  %v2296 = vrsqrt.pop %v2224
  %v2297 = vrsqrt.pop %v2225
  %v2298 = vrsqrt.pop %v2226
  %v2299 = vrsqrt.pop %v2227
  %v2300 = vrsqrt.pop %v2228
  %v2301 = vrsqrt.pop %v2229
  %v2302 = vrsqrt.pop %v2230
  %v2303 = vrsqrt.pop %v2231
  %v2304 = vrsqrt.pop %v2232
  %v2305 = vrsqrt.pop %v2233
  %v2306 = vld [vmem:[%s3] sm:$0xff]
  %v2307 = vld [vmem:[%s3 + $0x8] sm:$0xff]
  %v2308 = vld [vmem:[%s3 + $0x10] sm:$0xff]
  %v2309 = vld [vmem:[%s3 + $0x18] sm:$0xff]
  %v2310 = vld [vmem:[%s3 + $0x20] sm:$0xff]
  %v2311 = vld [vmem:[%s3 + $0x28] sm:$0xff]
  %v2312 = vld [vmem:[%s3 + $0x30] sm:$0xff]
  %v2313 = vld [vmem:[%s3 + $0x38] sm:$0xff]
  %v2314 = vld [vmem:[%s3 + $0x40] sm:$0xff]
  %v2315 = vld [vmem:[%s3 + $0x48] sm:$0xff]
  %v2316 = vld [vmem:[%s3 + $0x50] sm:$0xff]
  %v2317 = vld [vmem:[%s3 + $0x58] sm:$0xff]
  %v2318 = vld [vmem:[%s3 + $0x60] sm:$0xff]
  %v2319 = vld [vmem:[%s3 + $0x68] sm:$0xff]
  %v2320 = vld [vmem:[%s3 + $0x70] sm:$0xff]
  %v2321 = vld [vmem:[%s3 + $0x78] sm:$0xff]
  %v2322 = vld [vmem:[%s3 + $0x80] sm:$0xff]
  %v2323 = vld [vmem:[%s3 + $0x88] sm:$0xff]
  %v2324 = vld [vmem:[%s3 + $0x90] sm:$0xff]
  %v2325 = vld [vmem:[%s3 + $0x98] sm:$0xff]
  %v2326 = vld [vmem:[%s3 + $0xa0] sm:$0xff]
  %v2327 = vld [vmem:[%s3 + $0xa8] sm:$0xff]
  %v2328 = vld [vmem:[%s3 + $0xb0] sm:$0xff]
  %v2329 = vld [vmem:[%s3 + $0xb8] sm:$0xff]
  %v2330 = vld [vmem:[%s3 + $0xc0] sm:$0xff]
  %v2331 = vld [vmem:[%s3 + $0xc8] sm:$0xff]
  %v2332 = vld [vmem:[%s3 + $0xd0] sm:$0xff]
  %v2333 = vld [vmem:[%s3 + $0xd8] sm:$0xff]
  %v2334 = vld [vmem:[%s3 + $0xe0] sm:$0xff]
  %v2335 = vld [vmem:[%s3 + $0xe8] sm:$0xff]
  %v2336 = vld [vmem:[%s3 + $0xf0] sm:$0xff]
  %v2337 = vld [vmem:[%s3 + $0xf8] sm:$0xff]
  %v2338 = vld [vmem:[%s3 + $0x100] sm:$0xff]
  %v2339 = vld [vmem:[%s3 + $0x108] sm:$0xff]
  %v2340 = vld [vmem:[%s3 + $0x110] sm:$0xff]
  %v2341 = vld [vmem:[%s3 + $0x118] sm:$0xff]
  %v2342 = vld [vmem:[%s3 + $0x120] sm:$0xff]
  %v2343 = vld [vmem:[%s3 + $0x128] sm:$0xff]
  %v2344 = vld [vmem:[%s3 + $0x130] sm:$0xff]
  %v2345 = vld [vmem:[%s3 + $0x138] sm:$0xff]
  %v2346 = vld [vmem:[%s3 + $0x140] sm:$0xff]
  %v2347 = vld [vmem:[%s3 + $0x148] sm:$0xff]
  %v2348 = vld [vmem:[%s3 + $0x150] sm:$0xff]
  %v2349 = vld [vmem:[%s3 + $0x158] sm:$0xff]
  %v2350 = vld [vmem:[%s3 + $0x160] sm:$0xff]
  %v2351 = vld [vmem:[%s3 + $0x168] sm:$0xff]
  %v2352 = vld [vmem:[%s3 + $0x170] sm:$0xff]
  %v2353 = vld [vmem:[%s3 + $0x178] sm:$0xff]
  %v2354 = vld [vmem:[%s3 + $0x180] sm:$0xff]
  %v2355 = vld [vmem:[%s3 + $0x188] sm:$0xff]
  %v2356 = vld [vmem:[%s3 + $0x190] sm:$0xff]
  %v2357 = vld [vmem:[%s3 + $0x198] sm:$0xff]
  %v2358 = vld [vmem:[%s3 + $0x1a0] sm:$0xff]
  %v2359 = vld [vmem:[%s3 + $0x1a8] sm:$0xff]
  %v2360 = vld [vmem:[%s3 + $0x1b0] sm:$0xff]
  %v2361 = vld [vmem:[%s3 + $0x1b8] sm:$0xff]
  %v2362 = vld [vmem:[%s3 + $0x1c0] sm:$0xff]
  %v2363 = vld [vmem:[%s3 + $0x1c8] sm:$0xff]
  %v2364 = vld [vmem:[%s3 + $0x1d0] sm:$0xff]
  %v2365 = vld [vmem:[%s3 + $0x1d8] sm:$0xff]
  %v2366 = vld [vmem:[%s3 + $0x1e0] sm:$0xff]
  %v2367 = vld [vmem:[%s3 + $0x1e8] sm:$0xff]
  %v2368 = vld [vmem:[%s3 + $0x1f0] sm:$0xff]
  %v2369 = vld [vmem:[%s3 + $0x1f8] sm:$0xff]
  %v2370 = vld [vmem:[%s3 + $0x200] sm:$0xff]
  %v2371 = vld [vmem:[%s3 + $0x208] sm:$0xff]
  %v2372 = vld [vmem:[%s3 + $0x210] sm:$0xff]
  %v2373 = vld [vmem:[%s3 + $0x218] sm:$0xff]
  %v2374 = vld [vmem:[%s3 + $0x220] sm:$0xff]
  %v2375 = vld [vmem:[%s3 + $0x228] sm:$0xff]
  %v2376 = vld [vmem:[%s3 + $0x230] sm:$0xff]
  %v2377 = vld [vmem:[%s3 + $0x238] sm:$0xff]
  %v2378 = vmul.f32 %v2306, %v2234
  %v2379 = vmul.f32 %v2307, %v2235
  %v2380 = vmul.f32 %v2308, %v2236
  %v2381 = vmul.f32 %v2309, %v2237
  %v2382 = vmul.f32 %v2310, %v2238
  %v2383 = vmul.f32 %v2311, %v2239
  %v2384 = vmul.f32 %v2312, %v2240
  %v2385 = vmul.f32 %v2313, %v2241
  %v2386 = vmul.f32 %v2314, %v2242
  %v2387 = vmul.f32 %v2315, %v2243
  %v2388 = vmul.f32 %v2316, %v2244
  %v2389 = vmul.f32 %v2317, %v2245
  %v2390 = vmul.f32 %v2318, %v2246
  %v2391 = vmul.f32 %v2319, %v2247
  %v2392 = vmul.f32 %v2320, %v2248
  %v2393 = vmul.f32 %v2321, %v2249
  %v2394 = vmul.f32 %v2322, %v2250
  %v2395 = vmul.f32 %v2323, %v2251
  %v2396 = vmul.f32 %v2324, %v2252
  %v2397 = vmul.f32 %v2325, %v2253
  %v2398 = vmul.f32 %v2326, %v2254
  %v2399 = vmul.f32 %v2327, %v2255
  %v2400 = vmul.f32 %v2328, %v2256
  %v2401 = vmul.f32 %v2329, %v2257
  %v2402 = vmul.f32 %v2330, %v2258
  %v2403 = vmul.f32 %v2331, %v2259
  %v2404 = vmul.f32 %v2332, %v2260
  %v2405 = vmul.f32 %v2333, %v2261
  %v2406 = vmul.f32 %v2334, %v2262
  %v2407 = vmul.f32 %v2335, %v2263
  %v2408 = vmul.f32 %v2336, %v2264
  %v2409 = vmul.f32 %v2337, %v2265
  %v2410 = vmul.f32 %v2338, %v2266
  %v2411 = vmul.f32 %v2339, %v2267
  %v2412 = vmul.f32 %v2340, %v2268
  %v2413 = vmul.f32 %v2341, %v2269
  %v2414 = vmul.f32 %v2342, %v2270
  %v2415 = vmul.f32 %v2343, %v2271
  %v2416 = vmul.f32 %v2344, %v2272
  %v2417 = vmul.f32 %v2345, %v2273
  %v2418 = vmul.f32 %v2346, %v2274
  %v2419 = vmul.f32 %v2347, %v2275
  %v2420 = vmul.f32 %v2348, %v2276
  %v2421 = vmul.f32 %v2349, %v2277
  %v2422 = vmul.f32 %v2350, %v2278
  %v2423 = vmul.f32 %v2351, %v2279
  %v2424 = vmul.f32 %v2352, %v2280
  %v2425 = vmul.f32 %v2353, %v2281
  %v2426 = vmul.f32 %v2354, %v2282
  %v2427 = vmul.f32 %v2355, %v2283
  %v2428 = vmul.f32 %v2356, %v2284
  %v2429 = vmul.f32 %v2357, %v2285
  %v2430 = vmul.f32 %v2358, %v2286
  %v2431 = vmul.f32 %v2359, %v2287
  %v2432 = vmul.f32 %v2360, %v2288
  %v2433 = vmul.f32 %v2361, %v2289
  %v2434 = vmul.f32 %v2362, %v2290
  %v2435 = vmul.f32 %v2363, %v2291
  %v2436 = vmul.f32 %v2364, %v2292
  %v2437 = vmul.f32 %v2365, %v2293
  %v2438 = vmul.f32 %v2366, %v2294
  %v2439 = vmul.f32 %v2367, %v2295
  %v2440 = vmul.f32 %v2368, %v2296
  %v2441 = vmul.f32 %v2369, %v2297
  %v2442 = vmul.f32 %v2370, %v2298
  %v2443 = vmul.f32 %v2371, %v2299
  %v2444 = vmul.f32 %v2372, %v2300
  %v2445 = vmul.f32 %v2373, %v2301
  %v2446 = vmul.f32 %v2374, %v2302
  %v2447 = vmul.f32 %v2375, %v2303
  %v2448 = vmul.f32 %v2376, %v2304
  %v2449 = vmul.f32 %v2377, %v2305
  %v2450 = vld [vmem:[%s4] sm:$0xff]
  %v2451 = vld [vmem:[%s4 + $0x8] sm:$0xff]
  %v2452 = vld [vmem:[%s4 + $0x10] sm:$0xff]
  %v2453 = vld [vmem:[%s4 + $0x18] sm:$0xff]
  %v2454 = vld [vmem:[%s4 + $0x20] sm:$0xff]
  %v2455 = vld [vmem:[%s4 + $0x28] sm:$0xff]
  %v2456 = vld [vmem:[%s4 + $0x30] sm:$0xff]
  %v2457 = vld [vmem:[%s4 + $0x38] sm:$0xff]
  %v2458 = vld [vmem:[%s4 + $0x40] sm:$0xff]
  %v2459 = vld [vmem:[%s4 + $0x48] sm:$0xff]
  %v2460 = vld [vmem:[%s4 + $0x50] sm:$0xff]
  %v2461 = vld [vmem:[%s4 + $0x58] sm:$0xff]
  %v2462 = vld [vmem:[%s4 + $0x60] sm:$0xff]
  %v2463 = vld [vmem:[%s4 + $0x68] sm:$0xff]
  %v2464 = vld [vmem:[%s4 + $0x70] sm:$0xff]
  %v2465 = vld [vmem:[%s4 + $0x78] sm:$0xff]
  %v2466 = vld [vmem:[%s4 + $0x80] sm:$0xff]
  %v2467 = vld [vmem:[%s4 + $0x88] sm:$0xff]
  %v2468 = vld [vmem:[%s4 + $0x90] sm:$0xff]
  %v2469 = vld [vmem:[%s4 + $0x98] sm:$0xff]
  %v2470 = vld [vmem:[%s4 + $0xa0] sm:$0xff]
  %v2471 = vld [vmem:[%s4 + $0xa8] sm:$0xff]
  %v2472 = vld [vmem:[%s4 + $0xb0] sm:$0xff]
  %v2473 = vld [vmem:[%s4 + $0xb8] sm:$0xff]
  %v2474 = vld [vmem:[%s4 + $0xc0] sm:$0xff]
  %v2475 = vld [vmem:[%s4 + $0xc8] sm:$0xff]
  %v2476 = vld [vmem:[%s4 + $0xd0] sm:$0xff]
  %v2477 = vld [vmem:[%s4 + $0xd8] sm:$0xff]
  %v2478 = vld [vmem:[%s4 + $0xe0] sm:$0xff]
  %v2479 = vld [vmem:[%s4 + $0xe8] sm:$0xff]
  %v2480 = vld [vmem:[%s4 + $0xf0] sm:$0xff]
  %v2481 = vld [vmem:[%s4 + $0xf8] sm:$0xff]
  %v2482 = vld [vmem:[%s4 + $0x100] sm:$0xff]
  %v2483 = vld [vmem:[%s4 + $0x108] sm:$0xff]
  %v2484 = vld [vmem:[%s4 + $0x110] sm:$0xff]
  %v2485 = vld [vmem:[%s4 + $0x118] sm:$0xff]
  %v2486 = vld [vmem:[%s4 + $0x120] sm:$0xff]
  %v2487 = vld [vmem:[%s4 + $0x128] sm:$0xff]
  %v2488 = vld [vmem:[%s4 + $0x130] sm:$0xff]
  %v2489 = vld [vmem:[%s4 + $0x138] sm:$0xff]
  %v2490 = vld [vmem:[%s4 + $0x140] sm:$0xff]
  %v2491 = vld [vmem:[%s4 + $0x148] sm:$0xff]
  %v2492 = vld [vmem:[%s4 + $0x150] sm:$0xff]
  %v2493 = vld [vmem:[%s4 + $0x158] sm:$0xff]
  %v2494 = vld [vmem:[%s4 + $0x160] sm:$0xff]
  %v2495 = vld [vmem:[%s4 + $0x168] sm:$0xff]
  %v2496 = vld [vmem:[%s4 + $0x170] sm:$0xff]
  %v2497 = vld [vmem:[%s4 + $0x178] sm:$0xff]
  %v2498 = vld [vmem:[%s4 + $0x180] sm:$0xff]
  %v2499 = vld [vmem:[%s4 + $0x188] sm:$0xff]
  %v2500 = vld [vmem:[%s4 + $0x190] sm:$0xff]
  %v2501 = vld [vmem:[%s4 + $0x198] sm:$0xff]
  %v2502 = vld [vmem:[%s4 + $0x1a0] sm:$0xff]
  %v2503 = vld [vmem:[%s4 + $0x1a8] sm:$0xff]
  %v2504 = vld [vmem:[%s4 + $0x1b0] sm:$0xff]
  %v2505 = vld [vmem:[%s4 + $0x1b8] sm:$0xff]
  %v2506 = vld [vmem:[%s4 + $0x1c0] sm:$0xff]
  %v2507 = vld [vmem:[%s4 + $0x1c8] sm:$0xff]
  %v2508 = vld [vmem:[%s4 + $0x1d0] sm:$0xff]
  %v2509 = vld [vmem:[%s4 + $0x1d8] sm:$0xff]
  %v2510 = vld [vmem:[%s4 + $0x1e0] sm:$0xff]
  %v2511 = vld [vmem:[%s4 + $0x1e8] sm:$0xff]
  %v2512 = vld [vmem:[%s4 + $0x1f0] sm:$0xff]
  %v2513 = vld [vmem:[%s4 + $0x1f8] sm:$0xff]
  %v2514 = vld [vmem:[%s4 + $0x200] sm:$0xff]
  %v2515 = vld [vmem:[%s4 + $0x208] sm:$0xff]
  %v2516 = vld [vmem:[%s4 + $0x210] sm:$0xff]
  %v2517 = vld [vmem:[%s4 + $0x218] sm:$0xff]
  %v2518 = vld [vmem:[%s4 + $0x220] sm:$0xff]
  %v2519 = vld [vmem:[%s4 + $0x228] sm:$0xff]
  %v2520 = vld [vmem:[%s4 + $0x230] sm:$0xff]
  %v2521 = vld [vmem:[%s4 + $0x238] sm:$0xff]
  %v2522 = vmul.f32 %v1156, %v2378
  %v2523 = vmul.f32 %v1161, %v2379
  %v2524 = vmul.f32 %v1166, %v2380
  %v2525 = vmul.f32 %v1171, %v2381
  %v2526 = vmul.f32 %v1176, %v2382
  %v2527 = vmul.f32 %v1181, %v2383
  %v2528 = vmul.f32 %v1186, %v2384
  %v2529 = vmul.f32 %v1191, %v2385
  %v2530 = vmul.f32 %v1196, %v2386
  %v2531 = vmul.f32 %v1201, %v2387
  %v2532 = vmul.f32 %v1206, %v2388
  %v2533 = vmul.f32 %v1211, %v2389
  %v2534 = vmul.f32 %v1216, %v2390
  %v2535 = vmul.f32 %v1221, %v2391
  %v2536 = vmul.f32 %v1226, %v2392
  %v2537 = vmul.f32 %v1231, %v2393
  %v2538 = vmul.f32 %v1236, %v2394
  %v2539 = vmul.f32 %v1241, %v2395
  %v2540 = vmul.f32 %v1246, %v2396
  %v2541 = vmul.f32 %v1251, %v2397
  %v2542 = vmul.f32 %v1256, %v2398
  %v2543 = vmul.f32 %v1261, %v2399
  %v2544 = vmul.f32 %v1266, %v2400
  %v2545 = vmul.f32 %v1271, %v2401
  %v2546 = vmul.f32 %v1276, %v2402
  %v2547 = vmul.f32 %v1281, %v2403
  %v2548 = vmul.f32 %v1286, %v2404
  %v2549 = vmul.f32 %v1291, %v2405
  %v2550 = vmul.f32 %v1296, %v2406
  %v2551 = vmul.f32 %v1301, %v2407
  %v2552 = vmul.f32 %v1306, %v2408
  %v2553 = vmul.f32 %v1311, %v2409
  %v2554 = vmul.f32 %v1316, %v2410
  %v2555 = vmul.f32 %v1321, %v2411
  %v2556 = vmul.f32 %v1326, %v2412
  %v2557 = vmul.f32 %v1331, %v2413
  %v2558 = vmul.f32 %v1336, %v2414
  %v2559 = vmul.f32 %v1341, %v2415
  %v2560 = vmul.f32 %v1346, %v2416
  %v2561 = vmul.f32 %v1351, %v2417
  %v2562 = vmul.f32 %v1356, %v2418
  %v2563 = vmul.f32 %v1361, %v2419
  %v2564 = vmul.f32 %v1366, %v2420
  %v2565 = vmul.f32 %v1371, %v2421
  %v2566 = vmul.f32 %v1376, %v2422
  %v2567 = vmul.f32 %v1381, %v2423
  %v2568 = vmul.f32 %v1386, %v2424
  %v2569 = vmul.f32 %v1391, %v2425
  %v2570 = vmul.f32 %v1396, %v2426
  %v2571 = vmul.f32 %v1401, %v2427
  %v2572 = vmul.f32 %v1406, %v2428
  %v2573 = vmul.f32 %v1411, %v2429
  %v2574 = vmul.f32 %v1416, %v2430
  %v2575 = vmul.f32 %v1421, %v2431
  %v2576 = vmul.f32 %v1426, %v2432
  %v2577 = vmul.f32 %v1431, %v2433
  %v2578 = vmul.f32 %v1436, %v2434
  %v2579 = vmul.f32 %v1441, %v2435
  %v2580 = vmul.f32 %v1446, %v2436
  %v2581 = vmul.f32 %v1451, %v2437
  %v2582 = vmul.f32 %v1456, %v2438
  %v2583 = vmul.f32 %v1461, %v2439
  %v2584 = vmul.f32 %v1466, %v2440
  %v2585 = vmul.f32 %v1471, %v2441
  %v2586 = vmul.f32 %v1476, %v2442
  %v2587 = vmul.f32 %v1481, %v2443
  %v2588 = vmul.f32 %v1486, %v2444
  %v2589 = vmul.f32 %v1491, %v2445
  %v2590 = vmul.f32 %v1496, %v2446
  %v2591 = vmul.f32 %v1501, %v2447
  %v2592 = vmul.f32 %v1506, %v2448
  %v2593 = vmul.f32 %v1511, %v2449
  %v2594 = vsub.f32 %v2450, %v2522
  %v2595 = vsub.f32 %v2451, %v2523
  %v2596 = vsub.f32 %v2452, %v2524
  %v2597 = vsub.f32 %v2453, %v2525
  %v2598 = vsub.f32 %v2454, %v2526
  %v2599 = vsub.f32 %v2455, %v2527
  %v2600 = vsub.f32 %v2456, %v2528
  %v2601 = vsub.f32 %v2457, %v2529
  %v2602 = vsub.f32 %v2458, %v2530
  %v2603 = vsub.f32 %v2459, %v2531
  %v2604 = vsub.f32 %v2460, %v2532
  %v2605 = vsub.f32 %v2461, %v2533
  %v2606 = vsub.f32 %v2462, %v2534
  %v2607 = vsub.f32 %v2463, %v2535
  %v2608 = vsub.f32 %v2464, %v2536
  %v2609 = vsub.f32 %v2465, %v2537
  %v2610 = vsub.f32 %v2466, %v2538
  %v2611 = vsub.f32 %v2467, %v2539
  %v2612 = vsub.f32 %v2468, %v2540
  %v2613 = vsub.f32 %v2469, %v2541
  %v2614 = vsub.f32 %v2470, %v2542
  %v2615 = vsub.f32 %v2471, %v2543
  %v2616 = vsub.f32 %v2472, %v2544
  %v2617 = vsub.f32 %v2473, %v2545
  %v2618 = vsub.f32 %v2474, %v2546
  %v2619 = vsub.f32 %v2475, %v2547
  %v2620 = vsub.f32 %v2476, %v2548
  %v2621 = vsub.f32 %v2477, %v2549
  %v2622 = vsub.f32 %v2478, %v2550
  %v2623 = vsub.f32 %v2479, %v2551
  %v2624 = vsub.f32 %v2480, %v2552
  %v2625 = vsub.f32 %v2481, %v2553
  %v2626 = vsub.f32 %v2482, %v2554
  %v2627 = vsub.f32 %v2483, %v2555
  %v2628 = vsub.f32 %v2484, %v2556
  %v2629 = vsub.f32 %v2485, %v2557
  %v2630 = vsub.f32 %v2486, %v2558
  %v2631 = vsub.f32 %v2487, %v2559
  %v2632 = vsub.f32 %v2488, %v2560
  %v2633 = vsub.f32 %v2489, %v2561
  %v2634 = vsub.f32 %v2490, %v2562
  %v2635 = vsub.f32 %v2491, %v2563
  %v2636 = vsub.f32 %v2492, %v2564
  %v2637 = vsub.f32 %v2493, %v2565
  %v2638 = vsub.f32 %v2494, %v2566
  %v2639 = vsub.f32 %v2495, %v2567
  %v2640 = vsub.f32 %v2496, %v2568
  %v2641 = vsub.f32 %v2497, %v2569
  %v2642 = vsub.f32 %v2498, %v2570
  %v2643 = vsub.f32 %v2499, %v2571
  %v2644 = vsub.f32 %v2500, %v2572
  %v2645 = vsub.f32 %v2501, %v2573
  %v2646 = vsub.f32 %v2502, %v2574
  %v2647 = vsub.f32 %v2503, %v2575
  %v2648 = vsub.f32 %v2504, %v2576
  %v2649 = vsub.f32 %v2505, %v2577
  %v2650 = vsub.f32 %v2506, %v2578
  %v2651 = vsub.f32 %v2507, %v2579
  %v2652 = vsub.f32 %v2508, %v2580
  %v2653 = vsub.f32 %v2509, %v2581
  %v2654 = vsub.f32 %v2510, %v2582
  %v2655 = vsub.f32 %v2511, %v2583
  %v2656 = vsub.f32 %v2512, %v2584
  %v2657 = vsub.f32 %v2513, %v2585
  %v2658 = vsub.f32 %v2514, %v2586
  %v2659 = vsub.f32 %v2515, %v2587
  %v2660 = vsub.f32 %v2516, %v2588
  %v2661 = vsub.f32 %v2517, %v2589
  %v2662 = vsub.f32 %v2518, %v2590
  %v2663 = vsub.f32 %v2519, %v2591
  %v2664 = vsub.f32 %v2520, %v2592
  %v2665 = vsub.f32 %v2521, %v2593
  %2667 = vset.pattern.permute.xlu0 0
  %2668 = vperm.xlu0 %2667, %v2378
  %v2669 = vpop.permute.xlu0 %2668
  %2672 = vset.pattern.permute.xlu0 0
  %2673 = vperm.xlu0 %2672, %v2379
  %v2674 = vpop.permute.xlu0 %2673
  %2677 = vset.pattern.permute.xlu0 0
  %2678 = vperm.xlu0 %2677, %v2380
  %v2679 = vpop.permute.xlu0 %2678
  %2682 = vset.pattern.permute.xlu0 0
  %2683 = vperm.xlu0 %2682, %v2381
  %v2684 = vpop.permute.xlu0 %2683
  %2687 = vset.pattern.permute.xlu0 0
  %2688 = vperm.xlu0 %2687, %v2382
  %v2689 = vpop.permute.xlu0 %2688
  %2692 = vset.pattern.permute.xlu0 0
  %2693 = vperm.xlu0 %2692, %v2383
  %v2694 = vpop.permute.xlu0 %2693
  %2697 = vset.pattern.permute.xlu0 0
  %2698 = vperm.xlu0 %2697, %v2384
  %v2699 = vpop.permute.xlu0 %2698
  %2702 = vset.pattern.permute.xlu0 0
  %2703 = vperm.xlu0 %2702, %v2385
  %v2704 = vpop.permute.xlu0 %2703
  %2707 = vset.pattern.permute.xlu0 0
  %2708 = vperm.xlu0 %2707, %v2386
  %v2709 = vpop.permute.xlu0 %2708
  %2712 = vset.pattern.permute.xlu0 0
  %2713 = vperm.xlu0 %2712, %v2387
  %v2714 = vpop.permute.xlu0 %2713
  %2717 = vset.pattern.permute.xlu0 0
  %2718 = vperm.xlu0 %2717, %v2388
  %v2719 = vpop.permute.xlu0 %2718
  %2722 = vset.pattern.permute.xlu0 0
  %2723 = vperm.xlu0 %2722, %v2389
  %v2724 = vpop.permute.xlu0 %2723
  %2727 = vset.pattern.permute.xlu0 0
  %2728 = vperm.xlu0 %2727, %v2390
  %v2729 = vpop.permute.xlu0 %2728
  %2732 = vset.pattern.permute.xlu0 0
  %2733 = vperm.xlu0 %2732, %v2391
  %v2734 = vpop.permute.xlu0 %2733
  %2737 = vset.pattern.permute.xlu0 0
  %2738 = vperm.xlu0 %2737, %v2392
  %v2739 = vpop.permute.xlu0 %2738
  %2742 = vset.pattern.permute.xlu0 0
  %2743 = vperm.xlu0 %2742, %v2393
  %v2744 = vpop.permute.xlu0 %2743
  %2747 = vset.pattern.permute.xlu0 0
  %2748 = vperm.xlu0 %2747, %v2394
  %v2749 = vpop.permute.xlu0 %2748
  %2752 = vset.pattern.permute.xlu0 0
  %2753 = vperm.xlu0 %2752, %v2395
  %v2754 = vpop.permute.xlu0 %2753
  %2757 = vset.pattern.permute.xlu0 0
  %2758 = vperm.xlu0 %2757, %v2396
  %v2759 = vpop.permute.xlu0 %2758
  %2762 = vset.pattern.permute.xlu0 0
  %2763 = vperm.xlu0 %2762, %v2397
  %v2764 = vpop.permute.xlu0 %2763
  %2767 = vset.pattern.permute.xlu0 0
  %2768 = vperm.xlu0 %2767, %v2398
  %v2769 = vpop.permute.xlu0 %2768
  %2772 = vset.pattern.permute.xlu0 0
  %2773 = vperm.xlu0 %2772, %v2399
  %v2774 = vpop.permute.xlu0 %2773
  %2777 = vset.pattern.permute.xlu0 0
  %2778 = vperm.xlu0 %2777, %v2400
  %v2779 = vpop.permute.xlu0 %2778
  %2782 = vset.pattern.permute.xlu0 0
  %2783 = vperm.xlu0 %2782, %v2401
  %v2784 = vpop.permute.xlu0 %2783
  %2787 = vset.pattern.permute.xlu0 0
  %2788 = vperm.xlu0 %2787, %v2402
  %v2789 = vpop.permute.xlu0 %2788
  %2792 = vset.pattern.permute.xlu0 0
  %2793 = vperm.xlu0 %2792, %v2403
  %v2794 = vpop.permute.xlu0 %2793
  %2797 = vset.pattern.permute.xlu0 0
  %2798 = vperm.xlu0 %2797, %v2404
  %v2799 = vpop.permute.xlu0 %2798
  %2802 = vset.pattern.permute.xlu0 0
  %2803 = vperm.xlu0 %2802, %v2405
  %v2804 = vpop.permute.xlu0 %2803
  %2807 = vset.pattern.permute.xlu0 0
  %2808 = vperm.xlu0 %2807, %v2406
  %v2809 = vpop.permute.xlu0 %2808
  %2812 = vset.pattern.permute.xlu0 0
  %2813 = vperm.xlu0 %2812, %v2407
  %v2814 = vpop.permute.xlu0 %2813
  %2817 = vset.pattern.permute.xlu0 0
  %2818 = vperm.xlu0 %2817, %v2408
  %v2819 = vpop.permute.xlu0 %2818
  %2822 = vset.pattern.permute.xlu0 0
  %2823 = vperm.xlu0 %2822, %v2409
  %v2824 = vpop.permute.xlu0 %2823
  %2827 = vset.pattern.permute.xlu0 0
  %2828 = vperm.xlu0 %2827, %v2410
  %v2829 = vpop.permute.xlu0 %2828
  %2832 = vset.pattern.permute.xlu0 0
  %2833 = vperm.xlu0 %2832, %v2411
  %v2834 = vpop.permute.xlu0 %2833
  %2837 = vset.pattern.permute.xlu0 0
  %2838 = vperm.xlu0 %2837, %v2412
  %v2839 = vpop.permute.xlu0 %2838
  %2842 = vset.pattern.permute.xlu0 0
  %2843 = vperm.xlu0 %2842, %v2413
  %v2844 = vpop.permute.xlu0 %2843
  %2847 = vset.pattern.permute.xlu0 0
  %2848 = vperm.xlu0 %2847, %v2414
  %v2849 = vpop.permute.xlu0 %2848
  %2852 = vset.pattern.permute.xlu0 0
  %2853 = vperm.xlu0 %2852, %v2415
  %v2854 = vpop.permute.xlu0 %2853
  %2857 = vset.pattern.permute.xlu0 0
  %2858 = vperm.xlu0 %2857, %v2416
  %v2859 = vpop.permute.xlu0 %2858
  %2862 = vset.pattern.permute.xlu0 0
  %2863 = vperm.xlu0 %2862, %v2417
  %v2864 = vpop.permute.xlu0 %2863
  %2867 = vset.pattern.permute.xlu0 0
  %2868 = vperm.xlu0 %2867, %v2418
  %v2869 = vpop.permute.xlu0 %2868
  %2872 = vset.pattern.permute.xlu0 0
  %2873 = vperm.xlu0 %2872, %v2419
  %v2874 = vpop.permute.xlu0 %2873
  %2877 = vset.pattern.permute.xlu0 0
  %2878 = vperm.xlu0 %2877, %v2420
  %v2879 = vpop.permute.xlu0 %2878
  %2882 = vset.pattern.permute.xlu0 0
  %2883 = vperm.xlu0 %2882, %v2421
  %v2884 = vpop.permute.xlu0 %2883
  %2887 = vset.pattern.permute.xlu0 0
  %2888 = vperm.xlu0 %2887, %v2422
  %v2889 = vpop.permute.xlu0 %2888
  %2892 = vset.pattern.permute.xlu0 0
  %2893 = vperm.xlu0 %2892, %v2423
  %v2894 = vpop.permute.xlu0 %2893
  %2897 = vset.pattern.permute.xlu0 0
  %2898 = vperm.xlu0 %2897, %v2424
  %v2899 = vpop.permute.xlu0 %2898
  %2902 = vset.pattern.permute.xlu0 0
  %2903 = vperm.xlu0 %2902, %v2425
  %v2904 = vpop.permute.xlu0 %2903
  %2907 = vset.pattern.permute.xlu0 0
  %2908 = vperm.xlu0 %2907, %v2426
  %v2909 = vpop.permute.xlu0 %2908
  %2912 = vset.pattern.permute.xlu0 0
  %2913 = vperm.xlu0 %2912, %v2427
  %v2914 = vpop.permute.xlu0 %2913
  %2917 = vset.pattern.permute.xlu0 0
  %2918 = vperm.xlu0 %2917, %v2428
  %v2919 = vpop.permute.xlu0 %2918
  %2922 = vset.pattern.permute.xlu0 0
  %2923 = vperm.xlu0 %2922, %v2429
  %v2924 = vpop.permute.xlu0 %2923
  %2927 = vset.pattern.permute.xlu0 0
  %2928 = vperm.xlu0 %2927, %v2430
  %v2929 = vpop.permute.xlu0 %2928
  %2932 = vset.pattern.permute.xlu0 0
  %2933 = vperm.xlu0 %2932, %v2431
  %v2934 = vpop.permute.xlu0 %2933
  %2937 = vset.pattern.permute.xlu0 0
  %2938 = vperm.xlu0 %2937, %v2432
  %v2939 = vpop.permute.xlu0 %2938
  %2942 = vset.pattern.permute.xlu0 0
  %2943 = vperm.xlu0 %2942, %v2433
  %v2944 = vpop.permute.xlu0 %2943
  %2947 = vset.pattern.permute.xlu0 0
  %2948 = vperm.xlu0 %2947, %v2434
  %v2949 = vpop.permute.xlu0 %2948
  %2952 = vset.pattern.permute.xlu0 0
  %2953 = vperm.xlu0 %2952, %v2435
  %v2954 = vpop.permute.xlu0 %2953
  %2957 = vset.pattern.permute.xlu0 0
  %2958 = vperm.xlu0 %2957, %v2436
  %v2959 = vpop.permute.xlu0 %2958
  %2962 = vset.pattern.permute.xlu0 0
  %2963 = vperm.xlu0 %2962, %v2437
  %v2964 = vpop.permute.xlu0 %2963
  %2967 = vset.pattern.permute.xlu0 0
  %2968 = vperm.xlu0 %2967, %v2438
  %v2969 = vpop.permute.xlu0 %2968
  %2972 = vset.pattern.permute.xlu0 0
  %2973 = vperm.xlu0 %2972, %v2439
  %v2974 = vpop.permute.xlu0 %2973
  %2977 = vset.pattern.permute.xlu0 0
  %2978 = vperm.xlu0 %2977, %v2440
  %v2979 = vpop.permute.xlu0 %2978
  %2982 = vset.pattern.permute.xlu0 0
  %2983 = vperm.xlu0 %2982, %v2441
  %v2984 = vpop.permute.xlu0 %2983
  %2987 = vset.pattern.permute.xlu0 0
  %2988 = vperm.xlu0 %2987, %v2442
  %v2989 = vpop.permute.xlu0 %2988
  %2992 = vset.pattern.permute.xlu0 0
  %2993 = vperm.xlu0 %2992, %v2443
  %v2994 = vpop.permute.xlu0 %2993
  %2997 = vset.pattern.permute.xlu0 0
  %2998 = vperm.xlu0 %2997, %v2444
  %v2999 = vpop.permute.xlu0 %2998
  %3002 = vset.pattern.permute.xlu0 0
  %3003 = vperm.xlu0 %3002, %v2445
  %v3004 = vpop.permute.xlu0 %3003
  %3007 = vset.pattern.permute.xlu0 0
  %3008 = vperm.xlu0 %3007, %v2446
  %v3009 = vpop.permute.xlu0 %3008
  %3012 = vset.pattern.permute.xlu0 0
  %3013 = vperm.xlu0 %3012, %v2447
  %v3014 = vpop.permute.xlu0 %3013
  %3017 = vset.pattern.permute.xlu0 0
  %3018 = vperm.xlu0 %3017, %v2448
  %v3019 = vpop.permute.xlu0 %3018
  %3022 = vset.pattern.permute.xlu0 0
  %3023 = vperm.xlu0 %3022, %v2449
  %v3024 = vpop.permute.xlu0 %3023
  %v3026 = vmul.f32 %v357, %v2669
  %v3027 = vmul.f32 %v359, %v2669
  %v3028 = vmul.f32 %v361, %v2674
  %v3029 = vmul.f32 %v363, %v2674
  %v3030 = vmul.f32 %v367, %v2679
  %v3031 = vmul.f32 %v369, %v2679
  %v3032 = vmul.f32 %v371, %v2684
  %v3033 = vmul.f32 %v373, %v2684
  %v3034 = vmul.f32 %v377, %v2689
  %v3035 = vmul.f32 %v379, %v2689
  %v3036 = vmul.f32 %v381, %v2694
  %v3037 = vmul.f32 %v383, %v2694
  %v3038 = vmul.f32 %v387, %v2699
  %v3039 = vmul.f32 %v389, %v2699
  %v3040 = vmul.f32 %v391, %v2704
  %v3041 = vmul.f32 %v393, %v2704
  %v3042 = vmul.f32 %v397, %v2709
  %v3043 = vmul.f32 %v399, %v2709
  %v3044 = vmul.f32 %v401, %v2714
  %v3045 = vmul.f32 %v403, %v2714
  %v3046 = vmul.f32 %v407, %v2719
  %v3047 = vmul.f32 %v409, %v2719
  %v3048 = vmul.f32 %v411, %v2724
  %v3049 = vmul.f32 %v413, %v2724
  %v3050 = vmul.f32 %v417, %v2729
  %v3051 = vmul.f32 %v419, %v2729
  %v3052 = vmul.f32 %v421, %v2734
  %v3053 = vmul.f32 %v423, %v2734
  %v3054 = vmul.f32 %v427, %v2739
  %v3055 = vmul.f32 %v429, %v2739
  %v3056 = vmul.f32 %v431, %v2744
  %v3057 = vmul.f32 %v433, %v2744
  %v3058 = vmul.f32 %v437, %v2749
  %v3059 = vmul.f32 %v439, %v2749
  %v3060 = vmul.f32 %v441, %v2754
  %v3061 = vmul.f32 %v443, %v2754
  %v3062 = vmul.f32 %v447, %v2759
  %v3063 = vmul.f32 %v449, %v2759
  %v3064 = vmul.f32 %v451, %v2764
  %v3065 = vmul.f32 %v453, %v2764
  %v3066 = vmul.f32 %v457, %v2769
  %v3067 = vmul.f32 %v459, %v2769
  %v3068 = vmul.f32 %v461, %v2774
  %v3069 = vmul.f32 %v463, %v2774
  %v3070 = vmul.f32 %v467, %v2779
  %v3071 = vmul.f32 %v469, %v2779
  %v3072 = vmul.f32 %v471, %v2784
  %v3073 = vmul.f32 %v473, %v2784
  %v3074 = vmul.f32 %v477, %v2789
  %v3075 = vmul.f32 %v479, %v2789
  %v3076 = vmul.f32 %v481, %v2794
  %v3077 = vmul.f32 %v483, %v2794
  %v3078 = vmul.f32 %v487, %v2799
  %v3079 = vmul.f32 %v489, %v2799
  %v3080 = vmul.f32 %v491, %v2804
  %v3081 = vmul.f32 %v493, %v2804
  %v3082 = vmul.f32 %v497, %v2809
  %v3083 = vmul.f32 %v499, %v2809
  %v3084 = vmul.f32 %v501, %v2814
  %v3085 = vmul.f32 %v503, %v2814
  %v3086 = vmul.f32 %v507, %v2819
  %v3087 = vmul.f32 %v509, %v2819
  %v3088 = vmul.f32 %v511, %v2824
  %v3089 = vmul.f32 %v513, %v2824
  %v3090 = vmul.f32 %v517, %v2829
  %v3091 = vmul.f32 %v519, %v2829
  %v3092 = vmul.f32 %v521, %v2834
  %v3093 = vmul.f32 %v523, %v2834
  %v3094 = vmul.f32 %v527, %v2839
  %v3095 = vmul.f32 %v529, %v2839
  %v3096 = vmul.f32 %v531, %v2844
  %v3097 = vmul.f32 %v533, %v2844
  %v3098 = vmul.f32 %v537, %v2849
  %v3099 = vmul.f32 %v539, %v2849
  %v3100 = vmul.f32 %v541, %v2854
  %v3101 = vmul.f32 %v543, %v2854
  %v3102 = vmul.f32 %v547, %v2859
  %v3103 = vmul.f32 %v549, %v2859
  %v3104 = vmul.f32 %v551, %v2864
  %v3105 = vmul.f32 %v553, %v2864
  %v3106 = vmul.f32 %v557, %v2869
  %v3107 = vmul.f32 %v559, %v2869
  %v3108 = vmul.f32 %v561, %v2874
  %v3109 = vmul.f32 %v563, %v2874
  %v3110 = vmul.f32 %v567, %v2879
  %v3111 = vmul.f32 %v569, %v2879
  %v3112 = vmul.f32 %v571, %v2884
  %v3113 = vmul.f32 %v573, %v2884
  %v3114 = vmul.f32 %v577, %v2889
  %v3115 = vmul.f32 %v579, %v2889
  %v3116 = vmul.f32 %v581, %v2894
  %v3117 = vmul.f32 %v583, %v2894
  %v3118 = vmul.f32 %v587, %v2899
  %v3119 = vmul.f32 %v589, %v2899
  %v3120 = vmul.f32 %v591, %v2904
  %v3121 = vmul.f32 %v593, %v2904
  %v3122 = vmul.f32 %v597, %v2909
  %v3123 = vmul.f32 %v599, %v2909
  %v3124 = vmul.f32 %v601, %v2914
  %v3125 = vmul.f32 %v603, %v2914
  %v3126 = vmul.f32 %v607, %v2919
  %v3127 = vmul.f32 %v609, %v2919
  %v3128 = vmul.f32 %v611, %v2924
  %v3129 = vmul.f32 %v613, %v2924
  %v3130 = vmul.f32 %v617, %v2929
  %v3131 = vmul.f32 %v619, %v2929
  %v3132 = vmul.f32 %v621, %v2934
  %v3133 = vmul.f32 %v623, %v2934
  %v3134 = vmul.f32 %v627, %v2939
  %v3135 = vmul.f32 %v629, %v2939
  %v3136 = vmul.f32 %v631, %v2944
  %v3137 = vmul.f32 %v633, %v2944
  %v3138 = vmul.f32 %v637, %v2949
  %v3139 = vmul.f32 %v639, %v2949
  %v3140 = vmul.f32 %v641, %v2954
  %v3141 = vmul.f32 %v643, %v2954
  %v3142 = vmul.f32 %v647, %v2959
  %v3143 = vmul.f32 %v649, %v2959
  %v3144 = vmul.f32 %v651, %v2964
  %v3145 = vmul.f32 %v653, %v2964
  %v3146 = vmul.f32 %v657, %v2969
  %v3147 = vmul.f32 %v659, %v2969
  %v3148 = vmul.f32 %v661, %v2974
  %v3149 = vmul.f32 %v663, %v2974
  %v3150 = vmul.f32 %v667, %v2979
  %v3151 = vmul.f32 %v669, %v2979
  %v3152 = vmul.f32 %v671, %v2984
  %v3153 = vmul.f32 %v673, %v2984
  %v3154 = vmul.f32 %v677, %v2989
  %v3155 = vmul.f32 %v679, %v2989
  %v3156 = vmul.f32 %v681, %v2994
  %v3157 = vmul.f32 %v683, %v2994
  %v3158 = vmul.f32 %v687, %v2999
  %v3159 = vmul.f32 %v689, %v2999
  %v3160 = vmul.f32 %v691, %v3004
  %v3161 = vmul.f32 %v693, %v3004
  %v3162 = vmul.f32 %v697, %v3009
  %v3163 = vmul.f32 %v699, %v3009
  %v3164 = vmul.f32 %v701, %v3014
  %v3165 = vmul.f32 %v703, %v3014
  %v3166 = vmul.f32 %v707, %v3019
  %v3167 = vmul.f32 %v709, %v3019
  %v3168 = vmul.f32 %v711, %v3024
  %v3169 = vmul.f32 %v713, %v3024
  %3171 = vset.pattern.permute.xlu0 0
  %3172 = vperm.xlu0 %3171, %v2594
  %v3173 = vpop.permute.xlu0 %3172
  %3176 = vset.pattern.permute.xlu0 0
  %3177 = vperm.xlu0 %3176, %v2595
  %v3178 = vpop.permute.xlu0 %3177
  %3181 = vset.pattern.permute.xlu0 0
  %3182 = vperm.xlu0 %3181, %v2596
  %v3183 = vpop.permute.xlu0 %3182
  %3186 = vset.pattern.permute.xlu0 0
  %3187 = vperm.xlu0 %3186, %v2597
  %v3188 = vpop.permute.xlu0 %3187
  %3191 = vset.pattern.permute.xlu0 0
  %3192 = vperm.xlu0 %3191, %v2598
  %v3193 = vpop.permute.xlu0 %3192
  %3196 = vset.pattern.permute.xlu0 0
  %3197 = vperm.xlu0 %3196, %v2599
  %v3198 = vpop.permute.xlu0 %3197
  %3201 = vset.pattern.permute.xlu0 0
  %3202 = vperm.xlu0 %3201, %v2600
  %v3203 = vpop.permute.xlu0 %3202
  %3206 = vset.pattern.permute.xlu0 0
  %3207 = vperm.xlu0 %3206, %v2601
  %v3208 = vpop.permute.xlu0 %3207
  %3211 = vset.pattern.permute.xlu0 0
  %3212 = vperm.xlu0 %3211, %v2602
  %v3213 = vpop.permute.xlu0 %3212
  %3216 = vset.pattern.permute.xlu0 0
  %3217 = vperm.xlu0 %3216, %v2603
  %v3218 = vpop.permute.xlu0 %3217
  %3221 = vset.pattern.permute.xlu0 0
  %3222 = vperm.xlu0 %3221, %v2604
  %v3223 = vpop.permute.xlu0 %3222
  %3226 = vset.pattern.permute.xlu0 0
  %3227 = vperm.xlu0 %3226, %v2605
  %v3228 = vpop.permute.xlu0 %3227
  %3231 = vset.pattern.permute.xlu0 0
  %3232 = vperm.xlu0 %3231, %v2606
  %v3233 = vpop.permute.xlu0 %3232
  %3236 = vset.pattern.permute.xlu0 0
  %3237 = vperm.xlu0 %3236, %v2607
  %v3238 = vpop.permute.xlu0 %3237
  %3241 = vset.pattern.permute.xlu0 0
  %3242 = vperm.xlu0 %3241, %v2608
  %v3243 = vpop.permute.xlu0 %3242
  %3246 = vset.pattern.permute.xlu0 0
  %3247 = vperm.xlu0 %3246, %v2609
  %v3248 = vpop.permute.xlu0 %3247
  %3251 = vset.pattern.permute.xlu0 0
  %3252 = vperm.xlu0 %3251, %v2610
  %v3253 = vpop.permute.xlu0 %3252
  %3256 = vset.pattern.permute.xlu0 0
  %3257 = vperm.xlu0 %3256, %v2611
  %v3258 = vpop.permute.xlu0 %3257
  %3261 = vset.pattern.permute.xlu0 0
  %3262 = vperm.xlu0 %3261, %v2612
  %v3263 = vpop.permute.xlu0 %3262
  %3266 = vset.pattern.permute.xlu0 0
  %3267 = vperm.xlu0 %3266, %v2613
  %v3268 = vpop.permute.xlu0 %3267
  %3271 = vset.pattern.permute.xlu0 0
  %3272 = vperm.xlu0 %3271, %v2614
  %v3273 = vpop.permute.xlu0 %3272
  %3276 = vset.pattern.permute.xlu0 0
  %3277 = vperm.xlu0 %3276, %v2615
  %v3278 = vpop.permute.xlu0 %3277
  %3281 = vset.pattern.permute.xlu0 0
  %3282 = vperm.xlu0 %3281, %v2616
  %v3283 = vpop.permute.xlu0 %3282
  %3286 = vset.pattern.permute.xlu0 0
  %3287 = vperm.xlu0 %3286, %v2617
  %v3288 = vpop.permute.xlu0 %3287
  %3291 = vset.pattern.permute.xlu0 0
  %3292 = vperm.xlu0 %3291, %v2618
  %v3293 = vpop.permute.xlu0 %3292
  %3296 = vset.pattern.permute.xlu0 0
  %3297 = vperm.xlu0 %3296, %v2619
  %v3298 = vpop.permute.xlu0 %3297
  %3301 = vset.pattern.permute.xlu0 0
  %3302 = vperm.xlu0 %3301, %v2620
  %v3303 = vpop.permute.xlu0 %3302
  %3306 = vset.pattern.permute.xlu0 0
  %3307 = vperm.xlu0 %3306, %v2621
  %v3308 = vpop.permute.xlu0 %3307
  %3311 = vset.pattern.permute.xlu0 0
  %3312 = vperm.xlu0 %3311, %v2622
  %v3313 = vpop.permute.xlu0 %3312
  %3316 = vset.pattern.permute.xlu0 0
  %3317 = vperm.xlu0 %3316, %v2623
  %v3318 = vpop.permute.xlu0 %3317
  %3321 = vset.pattern.permute.xlu0 0
  %3322 = vperm.xlu0 %3321, %v2624
  %v3323 = vpop.permute.xlu0 %3322
  %3326 = vset.pattern.permute.xlu0 0
  %3327 = vperm.xlu0 %3326, %v2625
  %v3328 = vpop.permute.xlu0 %3327
  %3331 = vset.pattern.permute.xlu0 0
  %3332 = vperm.xlu0 %3331, %v2626
  %v3333 = vpop.permute.xlu0 %3332
  %3336 = vset.pattern.permute.xlu0 0
  %3337 = vperm.xlu0 %3336, %v2627
  %v3338 = vpop.permute.xlu0 %3337
  %3341 = vset.pattern.permute.xlu0 0
  %3342 = vperm.xlu0 %3341, %v2628
  %v3343 = vpop.permute.xlu0 %3342
  %3346 = vset.pattern.permute.xlu0 0
  %3347 = vperm.xlu0 %3346, %v2629
  %v3348 = vpop.permute.xlu0 %3347
  %3351 = vset.pattern.permute.xlu0 0
  %3352 = vperm.xlu0 %3351, %v2630
  %v3353 = vpop.permute.xlu0 %3352
  %3356 = vset.pattern.permute.xlu0 0
  %3357 = vperm.xlu0 %3356, %v2631
  %v3358 = vpop.permute.xlu0 %3357
  %3361 = vset.pattern.permute.xlu0 0
  %3362 = vperm.xlu0 %3361, %v2632
  %v3363 = vpop.permute.xlu0 %3362
  %3366 = vset.pattern.permute.xlu0 0
  %3367 = vperm.xlu0 %3366, %v2633
  %v3368 = vpop.permute.xlu0 %3367
  %3371 = vset.pattern.permute.xlu0 0
  %3372 = vperm.xlu0 %3371, %v2634
  %v3373 = vpop.permute.xlu0 %3372
  %3376 = vset.pattern.permute.xlu0 0
  %3377 = vperm.xlu0 %3376, %v2635
  %v3378 = vpop.permute.xlu0 %3377
  %3381 = vset.pattern.permute.xlu0 0
  %3382 = vperm.xlu0 %3381, %v2636
  %v3383 = vpop.permute.xlu0 %3382
  %3386 = vset.pattern.permute.xlu0 0
  %3387 = vperm.xlu0 %3386, %v2637
  %v3388 = vpop.permute.xlu0 %3387
  %3391 = vset.pattern.permute.xlu0 0
  %3392 = vperm.xlu0 %3391, %v2638
  %v3393 = vpop.permute.xlu0 %3392
  %3396 = vset.pattern.permute.xlu0 0
  %3397 = vperm.xlu0 %3396, %v2639
  %v3398 = vpop.permute.xlu0 %3397
  %3401 = vset.pattern.permute.xlu0 0
  %3402 = vperm.xlu0 %3401, %v2640
  %v3403 = vpop.permute.xlu0 %3402
  %3406 = vset.pattern.permute.xlu0 0
  %3407 = vperm.xlu0 %3406, %v2641
  %v3408 = vpop.permute.xlu0 %3407
  %3411 = vset.pattern.permute.xlu0 0
  %3412 = vperm.xlu0 %3411, %v2642
  %v3413 = vpop.permute.xlu0 %3412
  %3416 = vset.pattern.permute.xlu0 0
  %3417 = vperm.xlu0 %3416, %v2643
  %v3418 = vpop.permute.xlu0 %3417
  %3421 = vset.pattern.permute.xlu0 0
  %3422 = vperm.xlu0 %3421, %v2644
  %v3423 = vpop.permute.xlu0 %3422
  %3426 = vset.pattern.permute.xlu0 0
  %3427 = vperm.xlu0 %3426, %v2645
  %v3428 = vpop.permute.xlu0 %3427
  %3431 = vset.pattern.permute.xlu0 0
  %3432 = vperm.xlu0 %3431, %v2646
  %v3433 = vpop.permute.xlu0 %3432
  %3436 = vset.pattern.permute.xlu0 0
  %3437 = vperm.xlu0 %3436, %v2647
  %v3438 = vpop.permute.xlu0 %3437
  %3441 = vset.pattern.permute.xlu0 0
  %3442 = vperm.xlu0 %3441, %v2648
  %v3443 = vpop.permute.xlu0 %3442
  %3446 = vset.pattern.permute.xlu0 0
  %3447 = vperm.xlu0 %3446, %v2649
  %v3448 = vpop.permute.xlu0 %3447
  %3451 = vset.pattern.permute.xlu0 0
  %3452 = vperm.xlu0 %3451, %v2650
  %v3453 = vpop.permute.xlu0 %3452
  %3456 = vset.pattern.permute.xlu0 0
  %3457 = vperm.xlu0 %3456, %v2651
  %v3458 = vpop.permute.xlu0 %3457
  %3461 = vset.pattern.permute.xlu0 0
  %3462 = vperm.xlu0 %3461, %v2652
  %v3463 = vpop.permute.xlu0 %3462
  %3466 = vset.pattern.permute.xlu0 0
  %3467 = vperm.xlu0 %3466, %v2653
  %v3468 = vpop.permute.xlu0 %3467
  %3471 = vset.pattern.permute.xlu0 0
  %3472 = vperm.xlu0 %3471, %v2654
  %v3473 = vpop.permute.xlu0 %3472
  %3476 = vset.pattern.permute.xlu0 0
  %3477 = vperm.xlu0 %3476, %v2655
  %v3478 = vpop.permute.xlu0 %3477
  %3481 = vset.pattern.permute.xlu0 0
  %3482 = vperm.xlu0 %3481, %v2656
  %v3483 = vpop.permute.xlu0 %3482
  %3486 = vset.pattern.permute.xlu0 0
  %3487 = vperm.xlu0 %3486, %v2657
  %v3488 = vpop.permute.xlu0 %3487
  %3491 = vset.pattern.permute.xlu0 0
  %3492 = vperm.xlu0 %3491, %v2658
  %v3493 = vpop.permute.xlu0 %3492
  %3496 = vset.pattern.permute.xlu0 0
  %3497 = vperm.xlu0 %3496, %v2659
  %v3498 = vpop.permute.xlu0 %3497
  %3501 = vset.pattern.permute.xlu0 0
  %3502 = vperm.xlu0 %3501, %v2660
  %v3503 = vpop.permute.xlu0 %3502
  %3506 = vset.pattern.permute.xlu0 0
  %3507 = vperm.xlu0 %3506, %v2661
  %v3508 = vpop.permute.xlu0 %3507
  %3511 = vset.pattern.permute.xlu0 0
  %3512 = vperm.xlu0 %3511, %v2662
  %v3513 = vpop.permute.xlu0 %3512
  %3516 = vset.pattern.permute.xlu0 0
  %3517 = vperm.xlu0 %3516, %v2663
  %v3518 = vpop.permute.xlu0 %3517
  %3521 = vset.pattern.permute.xlu0 0
  %3522 = vperm.xlu0 %3521, %v2664
  %v3523 = vpop.permute.xlu0 %3522
  %3526 = vset.pattern.permute.xlu0 0
  %3527 = vperm.xlu0 %3526, %v2665
  %v3528 = vpop.permute.xlu0 %3527
  %v3530 = vadd.f32 %v3026, %v3173
  %v3531 = vadd.f32 %v3027, %v3173
  %v3532 = vadd.f32 %v3028, %v3178
  %v3533 = vadd.f32 %v3029, %v3178
  %v3534 = vadd.f32 %v3030, %v3183
  %v3535 = vadd.f32 %v3031, %v3183
  %v3536 = vadd.f32 %v3032, %v3188
  %v3537 = vadd.f32 %v3033, %v3188
  %v3538 = vadd.f32 %v3034, %v3193
  %v3539 = vadd.f32 %v3035, %v3193
  %v3540 = vadd.f32 %v3036, %v3198
  %v3541 = vadd.f32 %v3037, %v3198
  %v3542 = vadd.f32 %v3038, %v3203
  %v3543 = vadd.f32 %v3039, %v3203
  %v3544 = vadd.f32 %v3040, %v3208
  %v3545 = vadd.f32 %v3041, %v3208
  %v3546 = vadd.f32 %v3042, %v3213
  %v3547 = vadd.f32 %v3043, %v3213
  %v3548 = vadd.f32 %v3044, %v3218
  %v3549 = vadd.f32 %v3045, %v3218
  %v3550 = vadd.f32 %v3046, %v3223
  %v3551 = vadd.f32 %v3047, %v3223
  %v3552 = vadd.f32 %v3048, %v3228
  %v3553 = vadd.f32 %v3049, %v3228
  %v3554 = vadd.f32 %v3050, %v3233
  %v3555 = vadd.f32 %v3051, %v3233
  %v3556 = vadd.f32 %v3052, %v3238
  %v3557 = vadd.f32 %v3053, %v3238
  %v3558 = vadd.f32 %v3054, %v3243
  %v3559 = vadd.f32 %v3055, %v3243
  %v3560 = vadd.f32 %v3056, %v3248
  %v3561 = vadd.f32 %v3057, %v3248
  %v3562 = vadd.f32 %v3058, %v3253
  %v3563 = vadd.f32 %v3059, %v3253
  %v3564 = vadd.f32 %v3060, %v3258
  %v3565 = vadd.f32 %v3061, %v3258
  %v3566 = vadd.f32 %v3062, %v3263
  %v3567 = vadd.f32 %v3063, %v3263
  %v3568 = vadd.f32 %v3064, %v3268
  %v3569 = vadd.f32 %v3065, %v3268
  %v3570 = vadd.f32 %v3066, %v3273
  %v3571 = vadd.f32 %v3067, %v3273
  %v3572 = vadd.f32 %v3068, %v3278
  %v3573 = vadd.f32 %v3069, %v3278
  %v3574 = vadd.f32 %v3070, %v3283
  %v3575 = vadd.f32 %v3071, %v3283
  %v3576 = vadd.f32 %v3072, %v3288
  %v3577 = vadd.f32 %v3073, %v3288
  %v3578 = vadd.f32 %v3074, %v3293
  %v3579 = vadd.f32 %v3075, %v3293
  %v3580 = vadd.f32 %v3076, %v3298
  %v3581 = vadd.f32 %v3077, %v3298
  %v3582 = vadd.f32 %v3078, %v3303
  %v3583 = vadd.f32 %v3079, %v3303
  %v3584 = vadd.f32 %v3080, %v3308
  %v3585 = vadd.f32 %v3081, %v3308
  %v3586 = vadd.f32 %v3082, %v3313
  %v3587 = vadd.f32 %v3083, %v3313
  %v3588 = vadd.f32 %v3084, %v3318
  %v3589 = vadd.f32 %v3085, %v3318
  %v3590 = vadd.f32 %v3086, %v3323
  %v3591 = vadd.f32 %v3087, %v3323
  %v3592 = vadd.f32 %v3088, %v3328
  %v3593 = vadd.f32 %v3089, %v3328
  %v3594 = vadd.f32 %v3090, %v3333
  %v3595 = vadd.f32 %v3091, %v3333
  %v3596 = vadd.f32 %v3092, %v3338
  %v3597 = vadd.f32 %v3093, %v3338
  %v3598 = vadd.f32 %v3094, %v3343
  %v3599 = vadd.f32 %v3095, %v3343
  %v3600 = vadd.f32 %v3096, %v3348
  %v3601 = vadd.f32 %v3097, %v3348
  %v3602 = vadd.f32 %v3098, %v3353
  %v3603 = vadd.f32 %v3099, %v3353
  %v3604 = vadd.f32 %v3100, %v3358
  %v3605 = vadd.f32 %v3101, %v3358
  %v3606 = vadd.f32 %v3102, %v3363
  %v3607 = vadd.f32 %v3103, %v3363
  %v3608 = vadd.f32 %v3104, %v3368
  %v3609 = vadd.f32 %v3105, %v3368
  %v3610 = vadd.f32 %v3106, %v3373
  %v3611 = vadd.f32 %v3107, %v3373
  %v3612 = vadd.f32 %v3108, %v3378
  %v3613 = vadd.f32 %v3109, %v3378
  %v3614 = vadd.f32 %v3110, %v3383
  %v3615 = vadd.f32 %v3111, %v3383
  %v3616 = vadd.f32 %v3112, %v3388
  %v3617 = vadd.f32 %v3113, %v3388
  %v3618 = vadd.f32 %v3114, %v3393
  %v3619 = vadd.f32 %v3115, %v3393
  %v3620 = vadd.f32 %v3116, %v3398
  %v3621 = vadd.f32 %v3117, %v3398
  %v3622 = vadd.f32 %v3118, %v3403
  %v3623 = vadd.f32 %v3119, %v3403
  %v3624 = vadd.f32 %v3120, %v3408
  %v3625 = vadd.f32 %v3121, %v3408
  %v3626 = vadd.f32 %v3122, %v3413
  %v3627 = vadd.f32 %v3123, %v3413
  %v3628 = vadd.f32 %v3124, %v3418
  %v3629 = vadd.f32 %v3125, %v3418
  %v3630 = vadd.f32 %v3126, %v3423
  %v3631 = vadd.f32 %v3127, %v3423
  %v3632 = vadd.f32 %v3128, %v3428
  %v3633 = vadd.f32 %v3129, %v3428
  %v3634 = vadd.f32 %v3130, %v3433
  %v3635 = vadd.f32 %v3131, %v3433
  %v3636 = vadd.f32 %v3132, %v3438
  %v3637 = vadd.f32 %v3133, %v3438
  %v3638 = vadd.f32 %v3134, %v3443
  %v3639 = vadd.f32 %v3135, %v3443
  %v3640 = vadd.f32 %v3136, %v3448
  %v3641 = vadd.f32 %v3137, %v3448
  %v3642 = vadd.f32 %v3138, %v3453
  %v3643 = vadd.f32 %v3139, %v3453
  %v3644 = vadd.f32 %v3140, %v3458
  %v3645 = vadd.f32 %v3141, %v3458
  %v3646 = vadd.f32 %v3142, %v3463
  %v3647 = vadd.f32 %v3143, %v3463
  %v3648 = vadd.f32 %v3144, %v3468
  %v3649 = vadd.f32 %v3145, %v3468
  %v3650 = vadd.f32 %v3146, %v3473
  %v3651 = vadd.f32 %v3147, %v3473
  %v3652 = vadd.f32 %v3148, %v3478
  %v3653 = vadd.f32 %v3149, %v3478
  %v3654 = vadd.f32 %v3150, %v3483
  %v3655 = vadd.f32 %v3151, %v3483
  %v3656 = vadd.f32 %v3152, %v3488
  %v3657 = vadd.f32 %v3153, %v3488
  %v3658 = vadd.f32 %v3154, %v3493
  %v3659 = vadd.f32 %v3155, %v3493
  %v3660 = vadd.f32 %v3156, %v3498
  %v3661 = vadd.f32 %v3157, %v3498
  %v3662 = vadd.f32 %v3158, %v3503
  %v3663 = vadd.f32 %v3159, %v3503
  %v3664 = vadd.f32 %v3160, %v3508
  %v3665 = vadd.f32 %v3161, %v3508
  %v3666 = vadd.f32 %v3162, %v3513
  %v3667 = vadd.f32 %v3163, %v3513
  %v3668 = vadd.f32 %v3164, %v3518
  %v3669 = vadd.f32 %v3165, %v3518
  %v3670 = vadd.f32 %v3166, %v3523
  %v3671 = vadd.f32 %v3167, %v3523
  %v3672 = vadd.f32 %v3168, %v3528
  %v3673 = vadd.f32 %v3169, %v3528
  %3674 = vst [vmem:[%s5] sm:$0xff] %v3530
  %3675 = vst.msk [vmem:[%s5 + $0x8] sm:$0xff] %vm739, %v3531
  %3676 = vst [vmem:[%s5 + $0x10] sm:$0xff] %v3532
  %3677 = vst.msk [vmem:[%s5 + $0x18] sm:$0xff] %vm739, %v3533
  %3678 = vst [vmem:[%s5 + $0x20] sm:$0xff] %v3534
  %3679 = vst.msk [vmem:[%s5 + $0x28] sm:$0xff] %vm739, %v3535
  %3680 = vst [vmem:[%s5 + $0x30] sm:$0xff] %v3536
  %3681 = vst.msk [vmem:[%s5 + $0x38] sm:$0xff] %vm739, %v3537
  %3682 = vst [vmem:[%s5 + $0x40] sm:$0xff] %v3538
  %3683 = vst.msk [vmem:[%s5 + $0x48] sm:$0xff] %vm739, %v3539
  %3684 = vst [vmem:[%s5 + $0x50] sm:$0xff] %v3540
  %3685 = vst.msk [vmem:[%s5 + $0x58] sm:$0xff] %vm739, %v3541
  %3686 = vst [vmem:[%s5 + $0x60] sm:$0xff] %v3542
  %3687 = vst.msk [vmem:[%s5 + $0x68] sm:$0xff] %vm739, %v3543
  %3688 = vst [vmem:[%s5 + $0x70] sm:$0xff] %v3544
  %3689 = vst.msk [vmem:[%s5 + $0x78] sm:$0xff] %vm739, %v3545
  %3690 = vst [vmem:[%s5 + $0x80] sm:$0xff] %v3546
  %3691 = vst.msk [vmem:[%s5 + $0x88] sm:$0xff] %vm739, %v3547
  %3692 = vst [vmem:[%s5 + $0x90] sm:$0xff] %v3548
  %3693 = vst.msk [vmem:[%s5 + $0x98] sm:$0xff] %vm739, %v3549
  %3694 = vst [vmem:[%s5 + $0xa0] sm:$0xff] %v3550
  %3695 = vst.msk [vmem:[%s5 + $0xa8] sm:$0xff] %vm739, %v3551
  %3696 = vst [vmem:[%s5 + $0xb0] sm:$0xff] %v3552
  %3697 = vst.msk [vmem:[%s5 + $0xb8] sm:$0xff] %vm739, %v3553
  %3698 = vst [vmem:[%s5 + $0xc0] sm:$0xff] %v3554
  %3699 = vst.msk [vmem:[%s5 + $0xc8] sm:$0xff] %vm739, %v3555
  %3700 = vst [vmem:[%s5 + $0xd0] sm:$0xff] %v3556
  %3701 = vst.msk [vmem:[%s5 + $0xd8] sm:$0xff] %vm739, %v3557
  %3702 = vst [vmem:[%s5 + $0xe0] sm:$0xff] %v3558
  %3703 = vst.msk [vmem:[%s5 + $0xe8] sm:$0xff] %vm739, %v3559
  %3704 = vst [vmem:[%s5 + $0xf0] sm:$0xff] %v3560
  %3705 = vst.msk [vmem:[%s5 + $0xf8] sm:$0xff] %vm739, %v3561
  %3706 = vst [vmem:[%s5 + $0x100] sm:$0xff] %v3562
  %3707 = vst.msk [vmem:[%s5 + $0x108] sm:$0xff] %vm739, %v3563
  %3708 = vst [vmem:[%s5 + $0x110] sm:$0xff] %v3564
  %3709 = vst.msk [vmem:[%s5 + $0x118] sm:$0xff] %vm739, %v3565
  %3710 = vst [vmem:[%s5 + $0x120] sm:$0xff] %v3566
  %3711 = vst.msk [vmem:[%s5 + $0x128] sm:$0xff] %vm739, %v3567
  %3712 = vst [vmem:[%s5 + $0x130] sm:$0xff] %v3568
  %3713 = vst.msk [vmem:[%s5 + $0x138] sm:$0xff] %vm739, %v3569
  %3714 = vst [vmem:[%s5 + $0x140] sm:$0xff] %v3570
  %3715 = vst.msk [vmem:[%s5 + $0x148] sm:$0xff] %vm739, %v3571
  %3716 = vst [vmem:[%s5 + $0x150] sm:$0xff] %v3572
  %3717 = vst.msk [vmem:[%s5 + $0x158] sm:$0xff] %vm739, %v3573
  %3718 = vst [vmem:[%s5 + $0x160] sm:$0xff] %v3574
  %3719 = vst.msk [vmem:[%s5 + $0x168] sm:$0xff] %vm739, %v3575
  %3720 = vst [vmem:[%s5 + $0x170] sm:$0xff] %v3576
  %3721 = vst.msk [vmem:[%s5 + $0x178] sm:$0xff] %vm739, %v3577
  %3722 = vst [vmem:[%s5 + $0x180] sm:$0xff] %v3578
  %3723 = vst.msk [vmem:[%s5 + $0x188] sm:$0xff] %vm739, %v3579
  %3724 = vst [vmem:[%s5 + $0x190] sm:$0xff] %v3580
  %3725 = vst.msk [vmem:[%s5 + $0x198] sm:$0xff] %vm739, %v3581
  %3726 = vst [vmem:[%s5 + $0x1a0] sm:$0xff] %v3582
  %3727 = vst.msk [vmem:[%s5 + $0x1a8] sm:$0xff] %vm739, %v3583
  %3728 = vst [vmem:[%s5 + $0x1b0] sm:$0xff] %v3584
  %3729 = vst.msk [vmem:[%s5 + $0x1b8] sm:$0xff] %vm739, %v3585
  %3730 = vst [vmem:[%s5 + $0x1c0] sm:$0xff] %v3586
  %3731 = vst.msk [vmem:[%s5 + $0x1c8] sm:$0xff] %vm739, %v3587
  %3732 = vst [vmem:[%s5 + $0x1d0] sm:$0xff] %v3588
  %3733 = vst.msk [vmem:[%s5 + $0x1d8] sm:$0xff] %vm739, %v3589
  %3734 = vst [vmem:[%s5 + $0x1e0] sm:$0xff] %v3590
  %3735 = vst.msk [vmem:[%s5 + $0x1e8] sm:$0xff] %vm739, %v3591
  %3736 = vst [vmem:[%s5 + $0x1f0] sm:$0xff] %v3592
  %3737 = vst.msk [vmem:[%s5 + $0x1f8] sm:$0xff] %vm739, %v3593
  %3738 = vst [vmem:[%s5 + $0x200] sm:$0xff] %v3594
  %3739 = vst.msk [vmem:[%s5 + $0x208] sm:$0xff] %vm739, %v3595
  %3740 = vst [vmem:[%s5 + $0x210] sm:$0xff] %v3596
  %3741 = vst.msk [vmem:[%s5 + $0x218] sm:$0xff] %vm739, %v3597
  %3742 = vst [vmem:[%s5 + $0x220] sm:$0xff] %v3598
  %3743 = vst.msk [vmem:[%s5 + $0x228] sm:$0xff] %vm739, %v3599
  %3744 = vst [vmem:[%s5 + $0x230] sm:$0xff] %v3600
  %3745 = vst.msk [vmem:[%s5 + $0x238] sm:$0xff] %vm739, %v3601
  %3746 = vst [vmem:[%s5 + $0x240] sm:$0xff] %v3602
  %3747 = vst.msk [vmem:[%s5 + $0x248] sm:$0xff] %vm739, %v3603
  %3748 = vst [vmem:[%s5 + $0x250] sm:$0xff] %v3604
  %3749 = vst.msk [vmem:[%s5 + $0x258] sm:$0xff] %vm739, %v3605
  %3750 = vst [vmem:[%s5 + $0x260] sm:$0xff] %v3606
  %3751 = vst.msk [vmem:[%s5 + $0x268] sm:$0xff] %vm739, %v3607
  %3752 = vst [vmem:[%s5 + $0x270] sm:$0xff] %v3608
  %3753 = vst.msk [vmem:[%s5 + $0x278] sm:$0xff] %vm739, %v3609
  %3754 = vst [vmem:[%s5 + $0x280] sm:$0xff] %v3610
  %3755 = vst.msk [vmem:[%s5 + $0x288] sm:$0xff] %vm739, %v3611
  %3756 = vst [vmem:[%s5 + $0x290] sm:$0xff] %v3612
  %3757 = vst.msk [vmem:[%s5 + $0x298] sm:$0xff] %vm739, %v3613
  %3758 = vst [vmem:[%s5 + $0x2a0] sm:$0xff] %v3614
  %3759 = vst.msk [vmem:[%s5 + $0x2a8] sm:$0xff] %vm739, %v3615
  %3760 = vst [vmem:[%s5 + $0x2b0] sm:$0xff] %v3616
  %3761 = vst.msk [vmem:[%s5 + $0x2b8] sm:$0xff] %vm739, %v3617
  %3762 = vst [vmem:[%s5 + $0x2c0] sm:$0xff] %v3618
  %3763 = vst.msk [vmem:[%s5 + $0x2c8] sm:$0xff] %vm739, %v3619
  %3764 = vst [vmem:[%s5 + $0x2d0] sm:$0xff] %v3620
  %3765 = vst.msk [vmem:[%s5 + $0x2d8] sm:$0xff] %vm739, %v3621
  %3766 = vst [vmem:[%s5 + $0x2e0] sm:$0xff] %v3622
  %3767 = vst.msk [vmem:[%s5 + $0x2e8] sm:$0xff] %vm739, %v3623
  %3768 = vst [vmem:[%s5 + $0x2f0] sm:$0xff] %v3624
  %3769 = vst.msk [vmem:[%s5 + $0x2f8] sm:$0xff] %vm739, %v3625
  %3770 = vst [vmem:[%s5 + $0x300] sm:$0xff] %v3626
  %3771 = vst.msk [vmem:[%s5 + $0x308] sm:$0xff] %vm739, %v3627
  %3772 = vst [vmem:[%s5 + $0x310] sm:$0xff] %v3628
  %3773 = vst.msk [vmem:[%s5 + $0x318] sm:$0xff] %vm739, %v3629
  %3774 = vst [vmem:[%s5 + $0x320] sm:$0xff] %v3630
  %3775 = vst.msk [vmem:[%s5 + $0x328] sm:$0xff] %vm739, %v3631
  %3776 = vst [vmem:[%s5 + $0x330] sm:$0xff] %v3632
  %3777 = vst.msk [vmem:[%s5 + $0x338] sm:$0xff] %vm739, %v3633
  %3778 = vst [vmem:[%s5 + $0x340] sm:$0xff] %v3634
  %3779 = vst.msk [vmem:[%s5 + $0x348] sm:$0xff] %vm739, %v3635
  %3780 = vst [vmem:[%s5 + $0x350] sm:$0xff] %v3636
  %3781 = vst.msk [vmem:[%s5 + $0x358] sm:$0xff] %vm739, %v3637
  %3782 = vst [vmem:[%s5 + $0x360] sm:$0xff] %v3638
  %3783 = vst.msk [vmem:[%s5 + $0x368] sm:$0xff] %vm739, %v3639
  %3784 = vst [vmem:[%s5 + $0x370] sm:$0xff] %v3640
  %3785 = vst.msk [vmem:[%s5 + $0x378] sm:$0xff] %vm739, %v3641
  %3786 = vst [vmem:[%s5 + $0x380] sm:$0xff] %v3642
  %3787 = vst.msk [vmem:[%s5 + $0x388] sm:$0xff] %vm739, %v3643
  %3788 = vst [vmem:[%s5 + $0x390] sm:$0xff] %v3644
  %3789 = vst.msk [vmem:[%s5 + $0x398] sm:$0xff] %vm739, %v3645
  %3790 = vst [vmem:[%s5 + $0x3a0] sm:$0xff] %v3646
  %3791 = vst.msk [vmem:[%s5 + $0x3a8] sm:$0xff] %vm739, %v3647
  %3792 = vst [vmem:[%s5 + $0x3b0] sm:$0xff] %v3648
  %3793 = vst.msk [vmem:[%s5 + $0x3b8] sm:$0xff] %vm739, %v3649
  %3794 = vst [vmem:[%s5 + $0x3c0] sm:$0xff] %v3650
  %3795 = vst.msk [vmem:[%s5 + $0x3c8] sm:$0xff] %vm739, %v3651
  %3796 = vst [vmem:[%s5 + $0x3d0] sm:$0xff] %v3652
  %3797 = vst.msk [vmem:[%s5 + $0x3d8] sm:$0xff] %vm739, %v3653
  %3798 = vst [vmem:[%s5 + $0x3e0] sm:$0xff] %v3654
  %3799 = vst.msk [vmem:[%s5 + $0x3e8] sm:$0xff] %vm739, %v3655
  %3800 = vst [vmem:[%s5 + $0x3f0] sm:$0xff] %v3656
  %3801 = vst.msk [vmem:[%s5 + $0x3f8] sm:$0xff] %vm739, %v3657
  %3802 = vst [vmem:[%s5 + $0x400] sm:$0xff] %v3658
  %3803 = vst.msk [vmem:[%s5 + $0x408] sm:$0xff] %vm739, %v3659
  %3804 = vst [vmem:[%s5 + $0x410] sm:$0xff] %v3660
  %3805 = vst.msk [vmem:[%s5 + $0x418] sm:$0xff] %vm739, %v3661
  %3806 = vst [vmem:[%s5 + $0x420] sm:$0xff] %v3662
  %3807 = vst.msk [vmem:[%s5 + $0x428] sm:$0xff] %vm739, %v3663
  %3808 = vst [vmem:[%s5 + $0x430] sm:$0xff] %v3664
  %3809 = vst.msk [vmem:[%s5 + $0x438] sm:$0xff] %vm739, %v3665
  %3810 = vst [vmem:[%s5 + $0x440] sm:$0xff] %v3666
  %3811 = vst.msk [vmem:[%s5 + $0x448] sm:$0xff] %vm739, %v3667
  %3812 = vst [vmem:[%s5 + $0x450] sm:$0xff] %v3668
  %3813 = vst.msk [vmem:[%s5 + $0x458] sm:$0xff] %vm739, %v3669
  %3814 = vst [vmem:[%s5 + $0x460] sm:$0xff] %v3670
  %3815 = vst.msk [vmem:[%s5 + $0x468] sm:$0xff] %vm739, %v3671
  %3816 = vst [vmem:[%s5 + $0x470] sm:$0xff] %v3672
  %3817 = vst.msk [vmem:[%s5 + $0x478] sm:$0xff] %vm739, %v3673
  // Predicated region
  $region22: #{tpu_custom_call.1} parent=0 // pred_check
    _
  $region23: #{tpu_custom_call.1} parent=0 // pred_check_branch
    %3819 = sbr.rel (0) target = $region25
  $region24: #{tpu_custom_call.1} parent=0 // pred_region
    _
  $region25: #{tpu_custom_call.1} parent=0 // pred_fallthru
    _
  // Predicated region
  $region26: #{tpu_custom_call.1} parent=0 // pred_check
    _
  $region27: #{tpu_custom_call.1} parent=0 // pred_check_branch
    %3821 = sbr.rel (0) target = $region29
  $region28: #{tpu_custom_call.1} parent=0 // pred_region
    _
  $region29: #{tpu_custom_call.1} parent=0 // pred_fallthru
    _

</llo_original>
